<compile_context>
chip_gen: v6e
topology: v6e:2x2x1
jax: 0.10.0
libtpu: 0.0.40
codegen_flags: <defaults>
</compile_context>

<pallas_src>
import jax
import jax.numpy as jnp
from jax.experimental import pallas as pl
from jax.experimental.pallas import tpu as pltpu


# ----------------------------------------------------------------------------
# Pallas kernel: fused backbone matmul + 2-layer MLP projection head
#   h      = feats @ W_bb                       (stand-in backbone)
#   out    = relu(h @ W1 + b1) @ W2 + b2        (SimCLR projection head)
# All dots take bf16 operands and accumulate in f32 on the MXU; the
# bias-add / ReLU elementwise work stays in f32 (VPU-friendly on v5e too).
# ----------------------------------------------------------------------------
def _fused_kernel(f_ref, wbb_ref, w1_ref, b1_ref, w2_ref, b2_ref, o_ref):
    f = f_ref[...]                                            # [TM, Kp] bf16
    h = jnp.dot(f, wbb_ref[...],
                preferred_element_type=jnp.float32)           # [TM, 512] f32
    hidden = jnp.dot(h.astype(jnp.bfloat16), w1_ref[...],
                     preferred_element_type=jnp.float32) + b1_ref[...]
    hidden = jnp.maximum(hidden, 0.0)                         # ReLU (f32 VPU)
    out = jnp.dot(hidden.astype(jnp.bfloat16), w2_ref[...],
                  preferred_element_type=jnp.float32) + b2_ref[...]
    o_ref[...] = out.astype(o_ref.dtype)


def _round_up(x, m):
    return ((x + m - 1) // m) * m


def fused_backbone_projection(feats, kparams):
    """Fused backbone + projection head for BOTH views in a single Pallas call.

    feats  : [M, K] float32 (M = 2 * batch, both views stacked)
    kparams: kernel-ready params from prepare_kernel_params():
             w_bb [Kp, 512] bf16 (K already zero-padded to Kp),
             w1 [512, 512] bf16, b1 [1, 512] f32,
             w2 [512, P]   bf16, b2 [1, P]   f32
    returns [M, P] float32
    """
    wbb, w1, b1, w2, b2 = (kparams["w_bb"], kparams["w1"], kparams["b1"],
                           kparams["w2"], kparams["b2"])
    M, K = feats.shape
    Kp, H = wbb.shape
    P = w2.shape[1]
    assert Kp >= K and Kp % 128 == 0

    # M tile: whole batch (16-aligned for bf16 (16,128) packing) when small;
    # 512 (multiple of 256 for v6e/v7x MXU, 128-aligned for v5e) when large.
    if M <= 512:
        TM = max(16, _round_up(M, 16))
    else:
        TM = 512
    Mp = _round_up(M, TM)

    # Single fused pad (rows to Mp, lanes to Kp) + bf16 cast of the activations.
    feats_p = jnp.pad(feats, ((0, Mp - M), (0, Kp - K))).astype(jnp.bfloat16)

    flops = 2 * Mp * (Kp * H + H * H + H * P)
    bytes_accessed = (Mp * Kp * 2 + Kp * H * 2 + H * H * 2 + H * P * 2
                      + H * 4 + P * 4 + Mp * P * 4)

    def run(single_buffer_weights):
        # Weights/biases use a constant index_map -> they are DMA'd once and
        # stay VMEM-resident; single-buffering reclaims the 2nd buffer.
        wkw = ({"pipeline_mode": pl.Buffered(1)}
               if single_buffer_weights else {})
        call = pl.pallas_call(
            _fused_kernel,
            out_shape=jax.ShapeDtypeStruct((Mp, P), jnp.float32),
            grid_spec=pl.GridSpec(
                grid=(Mp // TM,),
                in_specs=[
                    pl.BlockSpec((TM, Kp), lambda i: (i, 0)),     # activations
                    pl.BlockSpec((Kp, H), lambda i: (0, 0), **wkw),
                    pl.BlockSpec((H, H), lambda i: (0, 0), **wkw),
                    pl.BlockSpec((1, H), lambda i: (0, 0), **wkw),
                    pl.BlockSpec((H, P), lambda i: (0, 0), **wkw),
                    pl.BlockSpec((1, P), lambda i: (0, 0), **wkw),
                ],
                out_specs=pl.BlockSpec((TM, P), lambda i: (i, 0)),
            ),
            compiler_params=pltpu.CompilerParams(
                dimension_semantics=("parallel",)),
            cost_estimate=pl.CostEstimate(
                flops=flops, transcendentals=0,
                bytes_accessed=bytes_accessed),
        )
        return call(feats_p, wbb, w1, b1, w2, b2)

    try:
        out = jax.block_until_ready(run(True))
    except Exception:
        # Fallback for JAX builds that reject pipeline_mode on BlockSpec.
        out = run(False)
    return out[:M]


# ----------------------------------------------------------------------------
# Parameter handling: master params in f32; kernel-ready (padded, bf16) params
# are prepared ONCE and reused every forward pass (keeps the hot path free of
# pad/cast ops per the perf review).
# ----------------------------------------------------------------------------
def init_params(key, in_dim, hidden=512, proj_dim=128):
    k_bb, k1, k2 = jax.random.split(key, 3)
    scale_bb = 1.0 / jnp.sqrt(in_dim)
    scale1 = 1.0 / jnp.sqrt(hidden)
    return {
        "w_bb": scale_bb * jax.random.normal(k_bb, (in_dim, hidden), jnp.float32),
        "w1": scale1 * jax.random.normal(k1, (hidden, hidden), jnp.float32),
        "b1": jnp.zeros((1, hidden), jnp.float32),
        "w2": scale1 * jax.random.normal(k2, (hidden, proj_dim), jnp.float32),
        "b2": jnp.zeros((1, proj_dim), jnp.float32),
    }


def prepare_kernel_params(params):
    """One-time pad (K -> multiple of 128) + bf16 cast of the weight matrices."""
    K = params["w_bb"].shape[0]
    Kp = _round_up(max(K, 128), 128)
    return {
        "w_bb": jnp.pad(params["w_bb"], ((0, Kp - K), (0, 0))).astype(jnp.bfloat16),
        "w1": params["w1"].astype(jnp.bfloat16),
        "b1": params["b1"].astype(jnp.float32),
        "w2": params["w2"].astype(jnp.bfloat16),
        "b2": params["b2"].astype(jnp.float32),
    }


# ----------------------------------------------------------------------------
# Deterministic stand-ins for the undefined parts of the reference module.
# ----------------------------------------------------------------------------
def generate_pairs(x, y, z, key):
    # TODO(synk): reference uses randomly-parameterised DataAugmentation.*
    # (Rotate / Translate / Flip / GaussianNoise) chosen via Python `random`;
    # here view-1 is the identity and view-2 adds fixed-seed Gaussian noise.
    k1, k2, k3 = jax.random.split(key, 3)
    std = 0.3
    x1, y1, z1 = x, y, z
    x2 = x + std * jax.random.normal(k1, x.shape, x.dtype)
    y2 = y + std * jax.random.normal(k2, y.shape, y.dtype)
    z2 = z + std * jax.random.normal(k3, z.shape, z.dtype)
    return x1, y1, z1, x2, y2, z2


def backbone_features(x, y, z):
    # TODO(synk): `base_encoder` is an external module with no definition;
    # stand-in = concat(flatten(x, y, z)); the [K, 512] projection W_bb is
    # fused into the Pallas kernel.
    B = x.shape[0]
    return jnp.concatenate(
        [x.reshape(B, -1), y.reshape(B, -1), z.reshape(B, -1)],
        axis=-1).astype(jnp.float32)


# ----------------------------------------------------------------------------
# SimCLR forward: both views batched through ONE fused Pallas call.
# ----------------------------------------------------------------------------
def simclr_forward(left, right, pose, kernel_params, key):
    x1, y1, z1, x2, y2, z2 = generate_pairs(
        left.astype(jnp.float32), right.astype(jnp.float32),
        pose.astype(jnp.float32), key)

    f1 = backbone_features(x1, y1, z1)          # [B, K]
    f2 = backbone_features(x2, y2, z2)          # [B, K]
    feats = jnp.concatenate([f1, f2], axis=0)   # [2B, K] -> single kernel call

    out = fused_backbone_projection(feats, kernel_params)   # [2B, P]

    B = left.shape[0]
    return out[:B], out[B:2 * B]


if __name__ == "__main__":
    key = jax.random.PRNGKey(0)
    k_in, k_par, k_aug = jax.random.split(key, 3)

    # Small shapes implied by permute_first_last_frames: [B, seq, points, dim]
    B, SEQ, PTS, DIM = 2, 6, 4, 3
    kx, ky, kz = jax.random.split(k_in, 3)
    left = jax.random.normal(kx, (B, SEQ, PTS, DIM), jnp.float32)
    right = jax.random.normal(ky, (B, SEQ, PTS, DIM), jnp.float32)
    pose = jax.random.normal(kz, (B, SEQ, PTS, DIM), jnp.float32)

    in_dim = 3 * SEQ * PTS * DIM                # 216, padded to 256 once
    params = init_params(k_par, in_dim, hidden=512, proj_dim=128)
    kernel_params = prepare_kernel_params(params)   # one-time pad + bf16 cast

    z1, z2 = simclr_forward(left, right, pose, kernel_params, k_aug)
    jax.block_until_ready((z1, z2))

    assert z1.shape == (B, 128) and z2.shape == (B, 128)
    assert z1.dtype == jnp.float32 and z2.dtype == jnp.float32
    assert bool(jnp.all(jnp.isfinite(z1))) and bool(jnp.all(jnp.isfinite(z2)))
    print("KERNEL_OK")
</pallas_src>

<mosaic_0001>
module attributes {stable_mosaic.version = 11 : i64} {
  func.func @_fused_kernel(%arg0: i32, %arg1: memref<16x256xbf16, #tpu.memory_space<vmem>>, %arg2: memref<256x512xbf16, #tpu.memory_space<vmem>>, %arg3: memref<512x512xbf16, #tpu.memory_space<vmem>>, %arg4: memref<1x512xf32, #tpu.memory_space<vmem>>, %arg5: memref<512x128xbf16, #tpu.memory_space<vmem>>, %arg6: memref<1x128xf32, #tpu.memory_space<vmem>>, %arg7: memref<16x128xf32, #tpu.memory_space<vmem>>) attributes {dimension_semantics = [#tpu.dimension_semantics<parallel>], iteration_bounds = array<i64: 1>, scalar_prefetch = 0 : i64, scratch_operands = 0 : i64, tpu.core_type = #tpu.core_type<tc>, window_params = [{transform_indices = @transform_0, window_bounds = array<i64: 16, 256>}, {pipeline_mode = #tpu.pipeline_mode<synchronous>, transform_indices = @transform_1, window_bounds = array<i64: 256, 512>}, {pipeline_mode = #tpu.pipeline_mode<synchronous>, transform_indices = @transform_2, window_bounds = array<i64: 512, 512>}, {pipeline_mode = #tpu.pipeline_mode<synchronous>, transform_indices = @transform_3, window_bounds = array<i64: 1, 512>}, {pipeline_mode = #tpu.pipeline_mode<synchronous>, transform_indices = @transform_4, window_bounds = array<i64: 512, 128>}, {pipeline_mode = #tpu.pipeline_mode<synchronous>, transform_indices = @transform_5, window_bounds = array<i64: 1, 128>}, {transform_indices = @transform_6, window_bounds = array<i64: 16, 128>}]} {
    %c0 = arith.constant 0 : index
    %c0_0 = arith.constant 0 : index
    %0 = vector.load %arg1[%c0, %c0_0] : memref<16x256xbf16, #tpu.memory_space<vmem>>, vector<16x256xbf16>
    %c0_1 = arith.constant 0 : index
    %c0_2 = arith.constant 0 : index
    %1 = vector.load %arg2[%c0_1, %c0_2] : memref<256x512xbf16, #tpu.memory_space<vmem>>, vector<256x512xbf16>
    %cst = arith.constant dense<0.000000e+00> : vector<16x512xf32>
    %2 = tpu.matmul %0, %1, %cst {dimension_numbers = #tpu.dot_dimension_numbers<[1], [0], [0], [1], [0, 0, 1, 1], [], []>} : vector<16x256xbf16>, vector<256x512xbf16>, vector<16x512xf32> -> vector<16x512xf32>
    %3 = arith.truncf %2 : vector<16x512xf32> to vector<16x512xbf16>
    %c0_3 = arith.constant 0 : index
    %c0_4 = arith.constant 0 : index
    %4 = vector.load %arg3[%c0_3, %c0_4] : memref<512x512xbf16, #tpu.memory_space<vmem>>, vector<512x512xbf16>
    %cst_5 = arith.constant dense<0.000000e+00> : vector<16x512xf32>
    %5 = tpu.matmul %3, %4, %cst_5 {dimension_numbers = #tpu.dot_dimension_numbers<[1], [0], [0], [1], [0, 0, 1, 1], [], []>} : vector<16x512xbf16>, vector<512x512xbf16>, vector<16x512xf32> -> vector<16x512xf32>
    %c0_6 = arith.constant 0 : index
    %c0_7 = arith.constant 0 : index
    %6 = vector.load %arg4[%c0_6, %c0_7] : memref<1x512xf32, #tpu.memory_space<vmem>>, vector<1x512xf32>
    %7 = vector.broadcast %6 : vector<1x512xf32> to vector<16x512xf32>
    %8 = arith.addf %5, %7 : vector<16x512xf32>
    %cst_8 = arith.constant 0.000000e+00 : f32
    %9 = vector.broadcast %cst_8 : f32 to vector<16x512xf32>
    %10 = arith.maximumf %8, %9 : vector<16x512xf32>
    %11 = arith.truncf %10 : vector<16x512xf32> to vector<16x512xbf16>
    %c0_9 = arith.constant 0 : index
    %c0_10 = arith.constant 0 : index
    %12 = vector.load %arg5[%c0_9, %c0_10] : memref<512x128xbf16, #tpu.memory_space<vmem>>, vector<512x128xbf16>
    %cst_11 = arith.constant dense<0.000000e+00> : vector<16x128xf32>
    %13 = tpu.matmul %11, %12, %cst_11 {dimension_numbers = #tpu.dot_dimension_numbers<[1], [0], [0], [1], [0, 0, 1, 1], [], []>} : vector<16x512xbf16>, vector<512x128xbf16>, vector<16x128xf32> -> vector<16x128xf32>
    %c0_12 = arith.constant 0 : index
    %c0_13 = arith.constant 0 : index
    %14 = vector.load %arg6[%c0_12, %c0_13] : memref<1x128xf32, #tpu.memory_space<vmem>>, vector<1x128xf32>
    %15 = vector.broadcast %14 : vector<1x128xf32> to vector<16x128xf32>
    %16 = arith.addf %13, %15 : vector<16x128xf32>
    %c0_14 = arith.constant 0 : index
    %c0_15 = arith.constant 0 : index
    %17 = vector.load %arg7[%c0_14, %c0_15] : memref<16x128xf32, #tpu.memory_space<vmem>>, vector<16x128xf32>
    tpu.vector_store %arg7[%c0_14, %c0_15], %16 {strides = array<i32>} : memref<16x128xf32, #tpu.memory_space<vmem>>, vector<16x128xf32>,
    return
  }
  func.func @transform_0(%arg0: i32) -> (i32, i32) {
    %c0_i32 = arith.constant 0 : i32
    %c0_i32_0 = arith.constant 0 : i32
    return %arg0, %c0_i32 : i32, i32
  }
  func.func @transform_1(%arg0: i32) -> (i32, i32) {
    %c0_i32 = arith.constant 0 : i32
    %c0_i32_0 = arith.constant 0 : i32
    %c0_i32_1 = arith.constant 0 : i32
    return %c0_i32, %c0_i32_0 : i32, i32
  }
  func.func @transform_2(%arg0: i32) -> (i32, i32) {
    %c0_i32 = arith.constant 0 : i32
    %c0_i32_0 = arith.constant 0 : i32
    %c0_i32_1 = arith.constant 0 : i32
    return %c0_i32, %c0_i32_0 : i32, i32
  }
  func.func @transform_3(%arg0: i32) -> (i32, i32) {
    %c0_i32 = arith.constant 0 : i32
    %c0_i32_0 = arith.constant 0 : i32
    %c0_i32_1 = arith.constant 0 : i32
    return %c0_i32, %c0_i32_0 : i32, i32
  }
  func.func @transform_4(%arg0: i32) -> (i32, i32) {
    %c0_i32 = arith.constant 0 : i32
    %c0_i32_0 = arith.constant 0 : i32
    %c0_i32_1 = arith.constant 0 : i32
    return %c0_i32, %c0_i32_0 : i32, i32
  }
  func.func @transform_5(%arg0: i32) -> (i32, i32) {
    %c0_i32 = arith.constant 0 : i32
    %c0_i32_0 = arith.constant 0 : i32
    %c0_i32_1 = arith.constant 0 : i32
    return %c0_i32, %c0_i32_0 : i32, i32
  }
  func.func @transform_6(%arg0: i32) -> (i32, i32) {
    %c0_i32 = arith.constant 0 : i32
    %c0_i32_0 = arith.constant 0 : i32
    return %arg0, %c0_i32 : i32, i32
  }
}

module attributes {stable_mosaic.version = 11 : i64} {
  func.func @_fused_kernel(%arg0: i32, %arg1: memref<16x256xbf16, #tpu.memory_space<vmem>>, %arg2: memref<256x512xbf16, #tpu.memory_space<vmem>>, %arg3: memref<512x512xbf16, #tpu.memory_space<vmem>>, %arg4: memref<1x512xf32, #tpu.memory_space<vmem>>, %arg5: memref<512x128xbf16, #tpu.memory_space<vmem>>, %arg6: memref<1x128xf32, #tpu.memory_space<vmem>>, %arg7: memref<16x128xf32, #tpu.memory_space<vmem>>) attributes {dimension_semantics = [#tpu.dimension_semantics<parallel>], iteration_bounds = array<i64: 1>, scalar_prefetch = 0 : i64, scratch_operands = 0 : i64, tpu.core_type = #tpu.core_type<tc>, window_params = [{transform_indices = @transform_0, window_bounds = array<i64: 16, 256>}, {pipeline_mode = #tpu.pipeline_mode<synchronous>, transform_indices = @transform_1, window_bounds = array<i64: 256, 512>}, {pipeline_mode = #tpu.pipeline_mode<synchronous>, transform_indices = @transform_2, window_bounds = array<i64: 512, 512>}, {pipeline_mode = #tpu.pipeline_mode<synchronous>, transform_indices = @transform_3, window_bounds = array<i64: 1, 512>}, {pipeline_mode = #tpu.pipeline_mode<synchronous>, transform_indices = @transform_4, window_bounds = array<i64: 512, 128>}, {pipeline_mode = #tpu.pipeline_mode<synchronous>, transform_indices = @transform_5, window_bounds = array<i64: 1, 128>}, {transform_indices = @transform_6, window_bounds = array<i64: 16, 128>}]} {
    %c0 = arith.constant 0 : index
    %c0_0 = arith.constant 0 : index
    %0 = vector.load %arg1[%c0, %c0_0] : memref<16x256xbf16, #tpu.memory_space<vmem>>, vector<16x256xbf16>
    %c0_1 = arith.constant 0 : index
    %c0_2 = arith.constant 0 : index
    %1 = vector.load %arg2[%c0_1, %c0_2] : memref<256x512xbf16, #tpu.memory_space<vmem>>, vector<256x512xbf16>
    %cst = arith.constant dense<0.000000e+00> : vector<16x512xf32>
    %2 = tpu.matmul %0, %1, %cst {dimension_numbers = #tpu.dot_dimension_numbers<[1], [0], [0], [1], [0, 0, 1, 1], [], []>} : vector<16x256xbf16>, vector<256x512xbf16>, vector<16x512xf32> -> vector<16x512xf32>
    %3 = arith.truncf %2 : vector<16x512xf32> to vector<16x512xbf16>
    %c0_3 = arith.constant 0 : index
    %c0_4 = arith.constant 0 : index
    %4 = vector.load %arg3[%c0_3, %c0_4] : memref<512x512xbf16, #tpu.memory_space<vmem>>, vector<512x512xbf16>
    %cst_5 = arith.constant dense<0.000000e+00> : vector<16x512xf32>
    %5 = tpu.matmul %3, %4, %cst_5 {dimension_numbers = #tpu.dot_dimension_numbers<[1], [0], [0], [1], [0, 0, 1, 1], [], []>} : vector<16x512xbf16>, vector<512x512xbf16>, vector<16x512xf32> -> vector<16x512xf32>
    %c0_6 = arith.constant 0 : index
    %c0_7 = arith.constant 0 : index
    %6 = vector.load %arg4[%c0_6, %c0_7] : memref<1x512xf32, #tpu.memory_space<vmem>>, vector<1x512xf32>
    %7 = vector.broadcast %6 : vector<1x512xf32> to vector<16x512xf32>
    %8 = arith.addf %5, %7 : vector<16x512xf32>
    %cst_8 = arith.constant 0.000000e+00 : f32
    %9 = vector.broadcast %cst_8 : f32 to vector<16x512xf32>
    %10 = arith.maximumf %8, %9 : vector<16x512xf32>
    %11 = arith.truncf %10 : vector<16x512xf32> to vector<16x512xbf16>
    %c0_9 = arith.constant 0 : index
    %c0_10 = arith.constant 0 : index
    %12 = vector.load %arg5[%c0_9, %c0_10] : memref<512x128xbf16, #tpu.memory_space<vmem>>, vector<512x128xbf16>
    %cst_11 = arith.constant dense<0.000000e+00> : vector<16x128xf32>
    %13 = tpu.matmul %11, %12, %cst_11 {dimension_numbers = #tpu.dot_dimension_numbers<[1], [0], [0], [1], [0, 0, 1, 1], [], []>} : vector<16x512xbf16>, vector<512x128xbf16>, vector<16x128xf32> -> vector<16x128xf32>
    %c0_12 = arith.constant 0 : index
    %c0_13 = arith.constant 0 : index
    %14 = vector.load %arg6[%c0_12, %c0_13] : memref<1x128xf32, #tpu.memory_space<vmem>>, vector<1x128xf32>
    %15 = vector.broadcast %14 : vector<1x128xf32> to vector<16x128xf32>
    %16 = arith.addf %13, %15 : vector<16x128xf32>
    %c0_14 = arith.constant 0 : index
    %c0_15 = arith.constant 0 : index
    %17 = vector.load %arg7[%c0_14, %c0_15] : memref<16x128xf32, #tpu.memory_space<vmem>>, vector<16x128xf32>
    tpu.vector_store %arg7[%c0_14, %c0_15], %16 {strides = array<i32>} : memref<16x128xf32, #tpu.memory_space<vmem>>, vector<16x128xf32>,
    return
  }
  func.func @transform_0(%arg0: i32) -> (i32, i32) {
    %c0_i32 = arith.constant 0 : i32
    %c0_i32_0 = arith.constant 0 : i32
    return %arg0, %c0_i32 : i32, i32
  }
  func.func @transform_1(%arg0: i32) -> (i32, i32) {
    %c0_i32 = arith.constant 0 : i32
    %c0_i32_0 = arith.constant 0 : i32
    %c0_i32_1 = arith.constant 0 : i32
    return %c0_i32, %c0_i32_0 : i32, i32
  }
  func.func @transform_2(%arg0: i32) -> (i32, i32) {
    %c0_i32 = arith.constant 0 : i32
    %c0_i32_0 = arith.constant 0 : i32
    %c0_i32_1 = arith.constant 0 : i32
    return %c0_i32, %c0_i32_0 : i32, i32
  }
  func.func @transform_3(%arg0: i32) -> (i32, i32) {
    %c0_i32 = arith.constant 0 : i32
    %c0_i32_0 = arith.constant 0 : i32
    %c0_i32_1 = arith.constant 0 : i32
    return %c0_i32, %c0_i32_0 : i32, i32
  }
  func.func @transform_4(%arg0: i32) -> (i32, i32) {
    %c0_i32 = arith.constant 0 : i32
    %c0_i32_0 = arith.constant 0 : i32
    %c0_i32_1 = arith.constant 0 : i32
    return %c0_i32, %c0_i32_0 : i32, i32
  }
  func.func @transform_5(%arg0: i32) -> (i32, i32) {
    %c0_i32 = arith.constant 0 : i32
    %c0_i32_0 = arith.constant 0 : i32
    %c0_i32_1 = arith.constant 0 : i32
    return %c0_i32, %c0_i32_0 : i32, i32
  }
  func.func @transform_6(%arg0: i32) -> (i32, i32) {
    %c0_i32 = arith.constant 0 : i32
    %c0_i32_0 = arith.constant 0 : i32
    return %arg0, %c0_i32 : i32, i32
  }
}

</mosaic_0001>

<llo_original>
// kernel: tpu_custom_call.1
$region0: #{tpu_custom_call.1}
  #allocation0 [shape = 'u32[]', space=smem, size = 0x4, offset = 0x4, fixed_abs, tag = 'smem constant byte address 0x4 - core index']
  #allocation1 [shape = 'u32[144,128]{1,0:T(1,128)}', space=vmem, size = 0x12000, scoped, tag = 'internal scratch']
  %s0 = inlined_call_operand.hbm [shape: bf16[16,256], index: 0, kind: input, shape index: {}]
  %s1 = inlined_call_operand.hbm [shape: bf16[256,512], index: 1, kind: input, shape index: {}]
  %s2 = inlined_call_operand.hbm [shape: bf16[512,512], index: 2, kind: input, shape index: {}]
  %s3 = inlined_call_operand.vmem [shape: f32[1,512], index: 3, kind: input, shape index: {}]
  %s4 = inlined_call_operand.hbm [shape: bf16[512,128], index: 4, kind: input, shape index: {}]
  %s5 = inlined_call_operand.vmem [shape: f32[1,128], index: 5, kind: input, shape index: {}]
  %s6 = inlined_call_operand.hbm [shape: f32[16,128], index: 6, kind: output, shape index: {}]
  %s7 = sld [smem:[#allocation0]]
  $region50: #{tpu_custom_call.1} parent=0
    _
  %s9 = ssub.s32 1, %s7
  %s10 = scalar_select 0, %s9, %s7
  $region1: #{tpu_custom_call.1} parent=0
    #allocation2 [shape = 'u8[8192]{0}', space=vmem, size = 0x2000, scoped, tag = 'input window, operand 0, single buffered']
    #allocation3 [shape = 's32[1]{0}', space=sflag, size = 0x4, scoped, tag = 'scoped memory for tpu_custom_call.1']
    #allocation4 [shape = 's32[1]{0}', space=sflag, size = 0x4, scoped, tag = 'scoped memory for tpu_custom_call.1']
    #allocation5 [shape = 'u8[262144]{0}', space=vmem, size = 0x40000, scoped, tag = 'input window, operand 1, single buffered']
    #allocation6 [shape = 's32[1]{0}', space=sflag, size = 0x4, scoped, tag = 'scoped memory for tpu_custom_call.1']
    #allocation7 [shape = 'u8[524288]{0}', space=vmem, size = 0x80000, scoped, tag = 'input window, operand 2, single buffered']
    #allocation8 [shape = 'u8[131072]{0}', space=vmem, size = 0x20000, scoped, tag = 'input window, operand 4, single buffered']
    #allocation9 [shape = 's32[1]{0}', space=sflag, size = 0x4, scoped, tag = 'scoped memory for tpu_custom_call.1']
    #allocation10 [shape = 'u8[8192]{0}', space=vmem, size = 0x2000, scoped, tag = 'output window, operand 0, single buffered']
    %11 = vsyncpa [#allocation3], 0
    %12 = vsyncpa [#allocation6], 0
    %13 = vsyncpa [#allocation9], 0
    %14 = vsyncpa [#allocation4], 0
    // Predicated region
    $region2: #{tpu_custom_call.1} parent=1 // pred_check
      _
    $region3: #{tpu_custom_call.1} parent=1 // pred_check_branch
      %16 = sbr.rel (0) target = $region5
    $region4: #{tpu_custom_call.1} parent=1 // pred_region
      %s18 = ssub.s32 256, 256
      %19 = vsyncadd [#allocation3], %s18
      %s20 = sshll.u32 [#allocation2], 4
      %s21 = int_to_ptr.vmem [resolvable:$true] %s20
      %26 = dma.hbm_to_vmem [thread:$0]  %s0, 256, %s21, [#allocation3], 128, 128, 8
    $region5: #{tpu_custom_call.1} parent=1 // pred_fallthru
      _
    // Predicated region
    $region6: #{tpu_custom_call.1} parent=1 // pred_check
      _
    $region7: #{tpu_custom_call.1} parent=1 // pred_check_branch
      %28 = sbr.rel (0) target = $region9
    $region8: #{tpu_custom_call.1} parent=1 // pred_region
      %s30 = ssub.s32 8192, 8192
      %31 = vsyncadd [#allocation6], %s30
      %s32 = sshll.u32 [#allocation5], 4
      %s33 = int_to_ptr.vmem [resolvable:$true] %s32
      %38 = dma.hbm_to_vmem [thread:$0]  %s1, 8192, %s33, [#allocation6], 256, 256, 16
    $region9: #{tpu_custom_call.1} parent=1 // pred_fallthru
      _
    // Predicated region
    $region10: #{tpu_custom_call.1} parent=1 // pred_check
      _
    $region11: #{tpu_custom_call.1} parent=1 // pred_check_branch
      %40 = sbr.rel (0) target = $region13
    $region12: #{tpu_custom_call.1} parent=1 // pred_region
      %s42 = ssub.s32 16384, 16384
      %43 = vsyncadd [#allocation6], %s42
      %s44 = sshll.u32 [#allocation7], 4
      %s45 = int_to_ptr.vmem [resolvable:$true] %s44
      %50 = dma.hbm_to_vmem [thread:$0]  %s2, 16384, %s45, [#allocation6], 256, 256, 16
    $region13: #{tpu_custom_call.1} parent=1 // pred_fallthru
      _
    // Predicated region
    $region14: #{tpu_custom_call.1} parent=1 // pred_check
      _
    $region15: #{tpu_custom_call.1} parent=1 // pred_check_branch
      %52 = sbr.rel (0) target = $region17
    $region16: #{tpu_custom_call.1} parent=1 // pred_region
      _
    $region17: #{tpu_custom_call.1} parent=1 // pred_fallthru
      _
    // Predicated region
    $region18: #{tpu_custom_call.1} parent=1 // pred_check
      _
    $region19: #{tpu_custom_call.1} parent=1 // pred_check_branch
      %54 = sbr.rel (0) target = $region21
    $region20: #{tpu_custom_call.1} parent=1 // pred_region
      %s56 = ssub.s32 4096, 4096
      %57 = vsyncadd [#allocation9], %s56
      %s58 = sshll.u32 [#allocation8], 4
      %s59 = int_to_ptr.vmem [resolvable:$true] %s58
      %64 = dma.hbm_to_vmem [thread:$0]  %s4, 4096, %s59, [#allocation9], 64, 64, 4
    $region21: #{tpu_custom_call.1} parent=1 // pred_fallthru
      _
    // Predicated region
    $region22: #{tpu_custom_call.1} parent=1 // pred_check
      _
    $region23: #{tpu_custom_call.1} parent=1 // pred_check_branch
      %66 = sbr.rel (0) target = $region25
    $region24: #{tpu_custom_call.1} parent=1 // pred_region
      _
    $region25: #{tpu_custom_call.1} parent=1 // pred_fallthru
      _
    // Predicated region
    $region26: #{tpu_custom_call.1} parent=1 // pred_check
      _
    $region27: #{tpu_custom_call.1} parent=1 // pred_check_branch
      %68 = sbr.rel (0) target = $region29
    $region28: #{tpu_custom_call.1} parent=1 // pred_region
      %69 = dma.done [#allocation3], 256
    $region29: #{tpu_custom_call.1} parent=1 // pred_fallthru
      _
    // Predicated region
    $region30: #{tpu_custom_call.1} parent=1 // pred_check
      _
    $region31: #{tpu_custom_call.1} parent=1 // pred_check_branch
      %71 = sbr.rel (0) target = $region33
    $region32: #{tpu_custom_call.1} parent=1 // pred_region
      %72 = dma.done [#allocation6], 8192
    $region33: #{tpu_custom_call.1} parent=1 // pred_fallthru
      _
    // Predicated region
    $region34: #{tpu_custom_call.1} parent=1 // pred_check
      _
    $region35: #{tpu_custom_call.1} parent=1 // pred_check_branch
      %74 = sbr.rel (0) target = $region37
    $region36: #{tpu_custom_call.1} parent=1 // pred_region
      %75 = dma.done [#allocation6], 16384
    $region37: #{tpu_custom_call.1} parent=1 // pred_fallthru
      _
    // Predicated region
    $region38: #{tpu_custom_call.1} parent=1 // pred_check
      _
    $region39: #{tpu_custom_call.1} parent=1 // pred_check_branch
      %77 = sbr.rel (0) target = $region41
    $region40: #{tpu_custom_call.1} parent=1 // pred_region
      %78 = dma.done [#allocation9], 4096
    $region41: #{tpu_custom_call.1} parent=1 // pred_fallthru
      _
    %v80 = vld [vmem:[#allocation2] sm:$0xff]
    %v81 = vld [vmem:[#allocation2 + $0x8] sm:$0xff]
    %v82 = vld [vmem:[#allocation5] sm:$0xff]
    %v83 = vld [vmem:[#allocation5 + $0x8] sm:$0xff]
    %v84 = vld [vmem:[#allocation5 + $0x10] sm:$0xff]
    %v85 = vld [vmem:[#allocation5 + $0x18] sm:$0xff]
    %v86 = vld [vmem:[#allocation5 + $0x20] sm:$0xff]
    %v87 = vld [vmem:[#allocation5 + $0x28] sm:$0xff]
    %v88 = vld [vmem:[#allocation5 + $0x30] sm:$0xff]
    %v89 = vld [vmem:[#allocation5 + $0x38] sm:$0xff]
    %v90 = vld [vmem:[#allocation5 + $0x40] sm:$0xff]
    %v91 = vld [vmem:[#allocation5 + $0x48] sm:$0xff]
    %v92 = vld [vmem:[#allocation5 + $0x50] sm:$0xff]
    %v93 = vld [vmem:[#allocation5 + $0x58] sm:$0xff]
    %v94 = vld [vmem:[#allocation5 + $0x60] sm:$0xff]
    %v95 = vld [vmem:[#allocation5 + $0x68] sm:$0xff]
    %v96 = vld [vmem:[#allocation5 + $0x70] sm:$0xff]
    %v97 = vld [vmem:[#allocation5 + $0x78] sm:$0xff]
    %v98 = vld [vmem:[#allocation5 + $0x80] sm:$0xff]
    %v99 = vld [vmem:[#allocation5 + $0x88] sm:$0xff]
    %v100 = vld [vmem:[#allocation5 + $0x90] sm:$0xff]
    %v101 = vld [vmem:[#allocation5 + $0x98] sm:$0xff]
    %v102 = vld [vmem:[#allocation5 + $0xa0] sm:$0xff]
    %v103 = vld [vmem:[#allocation5 + $0xa8] sm:$0xff]
    %v104 = vld [vmem:[#allocation5 + $0xb0] sm:$0xff]
    %v105 = vld [vmem:[#allocation5 + $0xb8] sm:$0xff]
    %v106 = vld [vmem:[#allocation5 + $0xc0] sm:$0xff]
    %v107 = vld [vmem:[#allocation5 + $0xc8] sm:$0xff]
    %v108 = vld [vmem:[#allocation5 + $0xd0] sm:$0xff]
    %v109 = vld [vmem:[#allocation5 + $0xd8] sm:$0xff]
    %v110 = vld [vmem:[#allocation5 + $0xe0] sm:$0xff]
    %v111 = vld [vmem:[#allocation5 + $0xe8] sm:$0xff]
    %v112 = vld [vmem:[#allocation5 + $0xf0] sm:$0xff]
    %v113 = vld [vmem:[#allocation5 + $0xf8] sm:$0xff]
    %v114 = vld [vmem:[#allocation5 + $0x100] sm:$0xff]
    %v115 = vld [vmem:[#allocation5 + $0x108] sm:$0xff]
    %v116 = vld [vmem:[#allocation5 + $0x110] sm:$0xff]
    %v117 = vld [vmem:[#allocation5 + $0x118] sm:$0xff]
    %v118 = vld [vmem:[#allocation5 + $0x120] sm:$0xff]
    %v119 = vld [vmem:[#allocation5 + $0x128] sm:$0xff]
    %v120 = vld [vmem:[#allocation5 + $0x130] sm:$0xff]
    %v121 = vld [vmem:[#allocation5 + $0x138] sm:$0xff]
    %v122 = vld [vmem:[#allocation5 + $0x140] sm:$0xff]
    %v123 = vld [vmem:[#allocation5 + $0x148] sm:$0xff]
    %v124 = vld [vmem:[#allocation5 + $0x150] sm:$0xff]
    %v125 = vld [vmem:[#allocation5 + $0x158] sm:$0xff]
    %v126 = vld [vmem:[#allocation5 + $0x160] sm:$0xff]
    %v127 = vld [vmem:[#allocation5 + $0x168] sm:$0xff]
    %v128 = vld [vmem:[#allocation5 + $0x170] sm:$0xff]
    %v129 = vld [vmem:[#allocation5 + $0x178] sm:$0xff]
    %v130 = vld [vmem:[#allocation5 + $0x180] sm:$0xff]
    %v131 = vld [vmem:[#allocation5 + $0x188] sm:$0xff]
    %v132 = vld [vmem:[#allocation5 + $0x190] sm:$0xff]
    %v133 = vld [vmem:[#allocation5 + $0x198] sm:$0xff]
    %v134 = vld [vmem:[#allocation5 + $0x1a0] sm:$0xff]
    %v135 = vld [vmem:[#allocation5 + $0x1a8] sm:$0xff]
    %v136 = vld [vmem:[#allocation5 + $0x1b0] sm:$0xff]
    %v137 = vld [vmem:[#allocation5 + $0x1b8] sm:$0xff]
    %v138 = vld [vmem:[#allocation5 + $0x1c0] sm:$0xff]
    %v139 = vld [vmem:[#allocation5 + $0x1c8] sm:$0xff]
    %v140 = vld [vmem:[#allocation5 + $0x1d0] sm:$0xff]
    %v141 = vld [vmem:[#allocation5 + $0x1d8] sm:$0xff]
    %v142 = vld [vmem:[#allocation5 + $0x1e0] sm:$0xff]
    %v143 = vld [vmem:[#allocation5 + $0x1e8] sm:$0xff]
    %v144 = vld [vmem:[#allocation5 + $0x1f0] sm:$0xff]
    %v145 = vld [vmem:[#allocation5 + $0x1f8] sm:$0xff]
    %v148 = vunpack.c.l.b16 %v80
    %v149 = vunpack.c.h.b16 %v80
    %v150 = vunpack.c.l.b16 %v81
    %v151 = vunpack.c.h.b16 %v81
    %v152 = vpack.c.b16 %v150, %v148
    %v153 = vpack.c.b16 %v151, %v149
    %v220 = vunpack.c.l.b16 %v82
    %v221 = vunpack.c.h.b16 %v82
    %v222 = vunpack.c.l.b16 %v83
    %v223 = vunpack.c.h.b16 %v83
    %v224 = vunpack.c.l.b16 %v84
    %v225 = vunpack.c.h.b16 %v84
    %v226 = vunpack.c.l.b16 %v85
    %v227 = vunpack.c.h.b16 %v85
    %v228 = vunpack.c.l.b16 %v86
    %v229 = vunpack.c.h.b16 %v86
    %v230 = vunpack.c.l.b16 %v87
    %v231 = vunpack.c.h.b16 %v87
    %v232 = vunpack.c.l.b16 %v88
    %v233 = vunpack.c.h.b16 %v88
    %v234 = vunpack.c.l.b16 %v89
    %v235 = vunpack.c.h.b16 %v89
    %v236 = vunpack.c.l.b16 %v90
    %v237 = vunpack.c.h.b16 %v90
    %v238 = vunpack.c.l.b16 %v91
    %v239 = vunpack.c.h.b16 %v91
    %v240 = vunpack.c.l.b16 %v92
    %v241 = vunpack.c.h.b16 %v92
    %v242 = vunpack.c.l.b16 %v93
    %v243 = vunpack.c.h.b16 %v93
    %v244 = vunpack.c.l.b16 %v94
    %v245 = vunpack.c.h.b16 %v94
    %v246 = vunpack.c.l.b16 %v95
    %v247 = vunpack.c.h.b16 %v95
    %v248 = vunpack.c.l.b16 %v96
    %v249 = vunpack.c.h.b16 %v96
    %v250 = vunpack.c.l.b16 %v97
    %v251 = vunpack.c.h.b16 %v97
    %v252 = vunpack.c.l.b16 %v98
    %v253 = vunpack.c.h.b16 %v98
    %v254 = vunpack.c.l.b16 %v99
    %v255 = vunpack.c.h.b16 %v99
    %v256 = vunpack.c.l.b16 %v100
    %v257 = vunpack.c.h.b16 %v100
    %v258 = vunpack.c.l.b16 %v101
    %v259 = vunpack.c.h.b16 %v101
    %v260 = vunpack.c.l.b16 %v102
    %v261 = vunpack.c.h.b16 %v102
    %v262 = vunpack.c.l.b16 %v103
    %v263 = vunpack.c.h.b16 %v103
    %v264 = vunpack.c.l.b16 %v104
    %v265 = vunpack.c.h.b16 %v104
    %v266 = vunpack.c.l.b16 %v105
    %v267 = vunpack.c.h.b16 %v105
    %v268 = vunpack.c.l.b16 %v106
    %v269 = vunpack.c.h.b16 %v106
    %v270 = vunpack.c.l.b16 %v107
    %v271 = vunpack.c.h.b16 %v107
    %v272 = vunpack.c.l.b16 %v108
    %v273 = vunpack.c.h.b16 %v108
    %v274 = vunpack.c.l.b16 %v109
    %v275 = vunpack.c.h.b16 %v109
    %v276 = vunpack.c.l.b16 %v110
    %v277 = vunpack.c.h.b16 %v110
    %v278 = vunpack.c.l.b16 %v111
    %v279 = vunpack.c.h.b16 %v111
    %v280 = vunpack.c.l.b16 %v112
    %v281 = vunpack.c.h.b16 %v112
    %v282 = vunpack.c.l.b16 %v113
    %v283 = vunpack.c.h.b16 %v113
    %v284 = vunpack.c.l.b16 %v114
    %v285 = vunpack.c.h.b16 %v114
    %v286 = vunpack.c.l.b16 %v115
    %v287 = vunpack.c.h.b16 %v115
    %v288 = vunpack.c.l.b16 %v116
    %v289 = vunpack.c.h.b16 %v116
    %v290 = vunpack.c.l.b16 %v117
    %v291 = vunpack.c.h.b16 %v117
    %v292 = vunpack.c.l.b16 %v118
    %v293 = vunpack.c.h.b16 %v118
    %v294 = vunpack.c.l.b16 %v119
    %v295 = vunpack.c.h.b16 %v119
    %v296 = vunpack.c.l.b16 %v120
    %v297 = vunpack.c.h.b16 %v120
    %v298 = vunpack.c.l.b16 %v121
    %v299 = vunpack.c.h.b16 %v121
    %v300 = vunpack.c.l.b16 %v122
    %v301 = vunpack.c.h.b16 %v122
    %v302 = vunpack.c.l.b16 %v123
    %v303 = vunpack.c.h.b16 %v123
    %v304 = vunpack.c.l.b16 %v124
    %v305 = vunpack.c.h.b16 %v124
    %v306 = vunpack.c.l.b16 %v125
    %v307 = vunpack.c.h.b16 %v125
    %v308 = vunpack.c.l.b16 %v126
    %v309 = vunpack.c.h.b16 %v126
    %v310 = vunpack.c.l.b16 %v127
    %v311 = vunpack.c.h.b16 %v127
    %v312 = vunpack.c.l.b16 %v128
    %v313 = vunpack.c.h.b16 %v128
    %v314 = vunpack.c.l.b16 %v129
    %v315 = vunpack.c.h.b16 %v129
    %v316 = vunpack.c.l.b16 %v130
    %v317 = vunpack.c.h.b16 %v130
    %v318 = vunpack.c.l.b16 %v131
    %v319 = vunpack.c.h.b16 %v131
    %v320 = vunpack.c.l.b16 %v132
    %v321 = vunpack.c.h.b16 %v132
    %v322 = vunpack.c.l.b16 %v133
    %v323 = vunpack.c.h.b16 %v133
    %v324 = vunpack.c.l.b16 %v134
    %v325 = vunpack.c.h.b16 %v134
    %v326 = vunpack.c.l.b16 %v135
    %v327 = vunpack.c.h.b16 %v135
    %v328 = vunpack.c.l.b16 %v136
    %v329 = vunpack.c.h.b16 %v136
    %v330 = vunpack.c.l.b16 %v137
    %v331 = vunpack.c.h.b16 %v137
    %v332 = vunpack.c.l.b16 %v138
    %v333 = vunpack.c.h.b16 %v138
    %v334 = vunpack.c.l.b16 %v139
    %v335 = vunpack.c.h.b16 %v139
    %v336 = vunpack.c.l.b16 %v140
    %v337 = vunpack.c.h.b16 %v140
    %v338 = vunpack.c.l.b16 %v141
    %v339 = vunpack.c.h.b16 %v141
    %v340 = vunpack.c.l.b16 %v142
    %v341 = vunpack.c.h.b16 %v142
    %v342 = vunpack.c.l.b16 %v143
    %v343 = vunpack.c.h.b16 %v143
    %v344 = vunpack.c.l.b16 %v144
    %v345 = vunpack.c.h.b16 %v144
    %v346 = vunpack.c.l.b16 %v145
    %v347 = vunpack.c.h.b16 %v145
    %v348 = vpack.c.b16 %v224, %v220
    %v349 = vpack.c.b16 %v225, %v221
    %v350 = vpack.c.b16 %v226, %v222
    %v351 = vpack.c.b16 %v227, %v223
    %v352 = vpack.c.b16 %v232, %v228
    %v353 = vpack.c.b16 %v233, %v229
    %v354 = vpack.c.b16 %v234, %v230
    %v355 = vpack.c.b16 %v235, %v231
    %v356 = vpack.c.b16 %v240, %v236
    %v357 = vpack.c.b16 %v241, %v237
    %v358 = vpack.c.b16 %v242, %v238
    %v359 = vpack.c.b16 %v243, %v239
    %v360 = vpack.c.b16 %v248, %v244
    %v361 = vpack.c.b16 %v249, %v245
    %v362 = vpack.c.b16 %v250, %v246
    %v363 = vpack.c.b16 %v251, %v247
    %v364 = vpack.c.b16 %v256, %v252
    %v365 = vpack.c.b16 %v257, %v253
    %v366 = vpack.c.b16 %v258, %v254
    %v367 = vpack.c.b16 %v259, %v255
    %v368 = vpack.c.b16 %v264, %v260
    %v369 = vpack.c.b16 %v265, %v261
    %v370 = vpack.c.b16 %v266, %v262
    %v371 = vpack.c.b16 %v267, %v263
    %v372 = vpack.c.b16 %v272, %v268
    %v373 = vpack.c.b16 %v273, %v269
    %v374 = vpack.c.b16 %v274, %v270
    %v375 = vpack.c.b16 %v275, %v271
    %v376 = vpack.c.b16 %v280, %v276
    %v377 = vpack.c.b16 %v281, %v277
    %v378 = vpack.c.b16 %v282, %v278
    %v379 = vpack.c.b16 %v283, %v279
    %v380 = vpack.c.b16 %v288, %v284
    %v381 = vpack.c.b16 %v289, %v285
    %v382 = vpack.c.b16 %v290, %v286
    %v383 = vpack.c.b16 %v291, %v287
    %v384 = vpack.c.b16 %v296, %v292
    %v385 = vpack.c.b16 %v297, %v293
    %v386 = vpack.c.b16 %v298, %v294
    %v387 = vpack.c.b16 %v299, %v295
    %v388 = vpack.c.b16 %v304, %v300
    %v389 = vpack.c.b16 %v305, %v301
    %v390 = vpack.c.b16 %v306, %v302
    %v391 = vpack.c.b16 %v307, %v303
    %v392 = vpack.c.b16 %v312, %v308
    %v393 = vpack.c.b16 %v313, %v309
    %v394 = vpack.c.b16 %v314, %v310
    %v395 = vpack.c.b16 %v315, %v311
    %v396 = vpack.c.b16 %v320, %v316
    %v397 = vpack.c.b16 %v321, %v317
    %v398 = vpack.c.b16 %v322, %v318
    %v399 = vpack.c.b16 %v323, %v319
    %v400 = vpack.c.b16 %v328, %v324
    %v401 = vpack.c.b16 %v329, %v325
    %v402 = vpack.c.b16 %v330, %v326
    %v403 = vpack.c.b16 %v331, %v327
    %v404 = vpack.c.b16 %v336, %v332
    %v405 = vpack.c.b16 %v337, %v333
    %v406 = vpack.c.b16 %v338, %v334
    %v407 = vpack.c.b16 %v339, %v335
    %v408 = vpack.c.b16 %v344, %v340
    %v409 = vpack.c.b16 %v345, %v341
    %v410 = vpack.c.b16 %v346, %v342
    %v411 = vpack.c.b16 %v347, %v343
    %476 = vmatprep.subr.bf16.mxu0 %v377
    %477 = vmatpush1.bf16.msra.mxu0 %v376
    %478 = vmatprep.subr.bf16.mxu0 %v373
    %479 = vmatpush1.bf16.msra.mxu0 %v372
    %480 = vmatprep.subr.bf16.mxu0 %v369
    %481 = vmatpush1.bf16.msra.mxu0 %v368
    %482 = vmatprep.subr.bf16.mxu0 %v365
    %483 = vmatpush1.bf16.msra.mxu0 %v364
    %484 = vmatprep.subr.bf16.mxu0 %v361
    %485 = vmatpush1.bf16.msra.mxu0 %v360
    %486 = vmatprep.subr.bf16.mxu0 %v357
    %487 = vmatpush1.bf16.msra.mxu0 %v356
    %488 = vmatprep.subr.bf16.mxu0 %v353
    %489 = vmatpush1.bf16.msra.mxu0 %v352
    %490 = vmatprep.subr.bf16.mxu0 %v349
    %491 = vmatpush1.bf16.msra.mxu0 %v348
    %492 = vmatprep.subr.bf16.mxu0 %v409
    %493 = vmatpush2.bf16.msra.mxu0 %v408
    %494 = vmatprep.subr.bf16.mxu0 %v405
    %495 = vmatpush2.bf16.msra.mxu0 %v404
    %496 = vmatprep.subr.bf16.mxu0 %v401
    %497 = vmatpush2.bf16.msra.mxu0 %v400
    %498 = vmatprep.subr.bf16.mxu0 %v397
    %499 = vmatpush2.bf16.msra.mxu0 %v396
    %500 = vmatprep.subr.bf16.mxu0 %v393
    %501 = vmatpush2.bf16.msra.mxu0 %v392
    %502 = vmatprep.subr.bf16.mxu0 %v389
    %503 = vmatpush2.bf16.msra.mxu0 %v388
    %504 = vmatprep.subr.bf16.mxu0 %v385
    %505 = vmatpush2.bf16.msra.mxu0 %v384
    %506 = vmatprep.subr.bf16.mxu0 %v381
    %507 = vmatpush2.bf16.msra.mxu0 %v380
    %508 = vmatprep.mubr.bf16.mxu0 %v153
    %509 = vmatmul.mubr.bf16.gmra.mxu0 %v152
    %v510 = vpop.f32.mrf.mxu0
    %v511 = vadd.f32 0.0, %v510
    %v512 = vpop.f32.mrf.mxu0
    %v513 = vadd.f32 0.0, %v512
    %v514 = vpop.f32.mrf.mxu0
    %v515 = vadd.f32 0.0, %v514
    %v516 = vpop.f32.mrf.mxu0
    %v517 = vadd.f32 0.0, %v516
    %518 = vdwg.mxu0
    %519 = vmatprep.subr.bf16.mxu0 %v379
    %520 = vmatpush1.bf16.msra.mxu0 %v378
    %521 = vmatprep.subr.bf16.mxu0 %v375
    %522 = vmatpush1.bf16.msra.mxu0 %v374
    %523 = vmatprep.subr.bf16.mxu0 %v371
    %524 = vmatpush1.bf16.msra.mxu0 %v370
    %525 = vmatprep.subr.bf16.mxu0 %v367
    %526 = vmatpush1.bf16.msra.mxu0 %v366
    %527 = vmatprep.subr.bf16.mxu0 %v363
    %528 = vmatpush1.bf16.msra.mxu0 %v362
    %529 = vmatprep.subr.bf16.mxu0 %v359
    %530 = vmatpush1.bf16.msra.mxu0 %v358
    %531 = vmatprep.subr.bf16.mxu0 %v355
    %532 = vmatpush1.bf16.msra.mxu0 %v354
    %533 = vmatprep.subr.bf16.mxu0 %v351
    %534 = vmatpush1.bf16.msra.mxu0 %v350
    %535 = vmatprep.subr.bf16.mxu0 %v411
    %536 = vmatpush2.bf16.msra.mxu0 %v410
    %537 = vmatprep.subr.bf16.mxu0 %v407
    %538 = vmatpush2.bf16.msra.mxu0 %v406
    %539 = vmatprep.subr.bf16.mxu0 %v403
    %540 = vmatpush2.bf16.msra.mxu0 %v402
    %541 = vmatprep.subr.bf16.mxu0 %v399
    %542 = vmatpush2.bf16.msra.mxu0 %v398
    %543 = vmatprep.subr.bf16.mxu0 %v395
    %544 = vmatpush2.bf16.msra.mxu0 %v394
    %545 = vmatprep.subr.bf16.mxu0 %v391
    %546 = vmatpush2.bf16.msra.mxu0 %v390
    %547 = vmatprep.subr.bf16.mxu0 %v387
    %548 = vmatpush2.bf16.msra.mxu0 %v386
    %549 = vmatprep.subr.bf16.mxu0 %v383
    %550 = vmatpush2.bf16.msra.mxu0 %v382
    %551 = vmatprep.mubr.bf16.mxu0 %v153
    %552 = vmatmul.mubr.bf16.gmra.mxu0 %v152
    %v553 = vpop.f32.mrf.mxu0
    %v554 = vadd.f32 0.0, %v553
    %v555 = vpop.f32.mrf.mxu0
    %v556 = vadd.f32 0.0, %v555
    %v557 = vpop.f32.mrf.mxu0
    %v558 = vadd.f32 0.0, %v557
    %v559 = vpop.f32.mrf.mxu0
    %v560 = vadd.f32 0.0, %v559
    %561 = vdwg.mxu0
    %v562 = vpack.c.bf16 %v515, %v511
    %v563 = vpack.c.bf16 %v517, %v513
    %v564 = vpack.c.bf16 %v558, %v554
    %v565 = vpack.c.bf16 %v560, %v556
    %v566 = vld [vmem:[#allocation7] sm:$0xff]
    %v567 = vld [vmem:[#allocation7 + $0x8] sm:$0xff]
    %v568 = vld [vmem:[#allocation7 + $0x10] sm:$0xff]
    %v569 = vld [vmem:[#allocation7 + $0x18] sm:$0xff]
    %v570 = vld [vmem:[#allocation7 + $0x20] sm:$0xff]
    %v571 = vld [vmem:[#allocation7 + $0x28] sm:$0xff]
    %v572 = vld [vmem:[#allocation7 + $0x30] sm:$0xff]
    %v573 = vld [vmem:[#allocation7 + $0x38] sm:$0xff]
    %v574 = vld [vmem:[#allocation7 + $0x40] sm:$0xff]
    %v575 = vld [vmem:[#allocation7 + $0x48] sm:$0xff]
    %v576 = vld [vmem:[#allocation7 + $0x50] sm:$0xff]
    %v577 = vld [vmem:[#allocation7 + $0x58] sm:$0xff]
    %v578 = vld [vmem:[#allocation7 + $0x60] sm:$0xff]
    %v579 = vld [vmem:[#allocation7 + $0x68] sm:$0xff]
    %v580 = vld [vmem:[#allocation7 + $0x70] sm:$0xff]
    %v581 = vld [vmem:[#allocation7 + $0x78] sm:$0xff]
    %v582 = vld [vmem:[#allocation7 + $0x80] sm:$0xff]
    %v583 = vld [vmem:[#allocation7 + $0x88] sm:$0xff]
    %v584 = vld [vmem:[#allocation7 + $0x90] sm:$0xff]
    %v585 = vld [vmem:[#allocation7 + $0x98] sm:$0xff]
    %v586 = vld [vmem:[#allocation7 + $0xa0] sm:$0xff]
    %v587 = vld [vmem:[#allocation7 + $0xa8] sm:$0xff]
    %v588 = vld [vmem:[#allocation7 + $0xb0] sm:$0xff]
    %v589 = vld [vmem:[#allocation7 + $0xb8] sm:$0xff]
    %v590 = vld [vmem:[#allocation7 + $0xc0] sm:$0xff]
    %v591 = vld [vmem:[#allocation7 + $0xc8] sm:$0xff]
    %v592 = vld [vmem:[#allocation7 + $0xd0] sm:$0xff]
    %v593 = vld [vmem:[#allocation7 + $0xd8] sm:$0xff]
    %v594 = vld [vmem:[#allocation7 + $0xe0] sm:$0xff]
    %v595 = vld [vmem:[#allocation7 + $0xe8] sm:$0xff]
    %v596 = vld [vmem:[#allocation7 + $0xf0] sm:$0xff]
    %v597 = vld [vmem:[#allocation7 + $0xf8] sm:$0xff]
    %v598 = vld [vmem:[#allocation7 + $0x100] sm:$0xff]
    %v599 = vld [vmem:[#allocation7 + $0x108] sm:$0xff]
    %v600 = vld [vmem:[#allocation7 + $0x110] sm:$0xff]
    %v601 = vld [vmem:[#allocation7 + $0x118] sm:$0xff]
    %v602 = vld [vmem:[#allocation7 + $0x120] sm:$0xff]
    %v603 = vld [vmem:[#allocation7 + $0x128] sm:$0xff]
    %v604 = vld [vmem:[#allocation7 + $0x130] sm:$0xff]
    %v605 = vld [vmem:[#allocation7 + $0x138] sm:$0xff]
    %v606 = vld [vmem:[#allocation7 + $0x140] sm:$0xff]
    %v607 = vld [vmem:[#allocation7 + $0x148] sm:$0xff]
    %v608 = vld [vmem:[#allocation7 + $0x150] sm:$0xff]
    %v609 = vld [vmem:[#allocation7 + $0x158] sm:$0xff]
    %v610 = vld [vmem:[#allocation7 + $0x160] sm:$0xff]
    %v611 = vld [vmem:[#allocation7 + $0x168] sm:$0xff]
    %v612 = vld [vmem:[#allocation7 + $0x170] sm:$0xff]
    %v613 = vld [vmem:[#allocation7 + $0x178] sm:$0xff]
    %v614 = vld [vmem:[#allocation7 + $0x180] sm:$0xff]
    %v615 = vld [vmem:[#allocation7 + $0x188] sm:$0xff]
    %v616 = vld [vmem:[#allocation7 + $0x190] sm:$0xff]
    %v617 = vld [vmem:[#allocation7 + $0x198] sm:$0xff]
    %v618 = vld [vmem:[#allocation7 + $0x1a0] sm:$0xff]
    %v619 = vld [vmem:[#allocation7 + $0x1a8] sm:$0xff]
    %v620 = vld [vmem:[#allocation7 + $0x1b0] sm:$0xff]
    %v621 = vld [vmem:[#allocation7 + $0x1b8] sm:$0xff]
    %v622 = vld [vmem:[#allocation7 + $0x1c0] sm:$0xff]
    %v623 = vld [vmem:[#allocation7 + $0x1c8] sm:$0xff]
    %v624 = vld [vmem:[#allocation7 + $0x1d0] sm:$0xff]
    %v625 = vld [vmem:[#allocation7 + $0x1d8] sm:$0xff]
    %v626 = vld [vmem:[#allocation7 + $0x1e0] sm:$0xff]
    %v627 = vld [vmem:[#allocation7 + $0x1e8] sm:$0xff]
    %v628 = vld [vmem:[#allocation7 + $0x1f0] sm:$0xff]
    %v629 = vld [vmem:[#allocation7 + $0x1f8] sm:$0xff]
    %v630 = vld [vmem:[#allocation7 + $0x200] sm:$0xff]
    %v631 = vld [vmem:[#allocation7 + $0x208] sm:$0xff]
    %v632 = vld [vmem:[#allocation7 + $0x210] sm:$0xff]
    %v633 = vld [vmem:[#allocation7 + $0x218] sm:$0xff]
    %v634 = vld [vmem:[#allocation7 + $0x220] sm:$0xff]
    %v635 = vld [vmem:[#allocation7 + $0x228] sm:$0xff]
    %v636 = vld [vmem:[#allocation7 + $0x230] sm:$0xff]
    %v637 = vld [vmem:[#allocation7 + $0x238] sm:$0xff]
    %v638 = vld [vmem:[#allocation7 + $0x240] sm:$0xff]
    %v639 = vld [vmem:[#allocation7 + $0x248] sm:$0xff]
    %v640 = vld [vmem:[#allocation7 + $0x250] sm:$0xff]
    %v641 = vld [vmem:[#allocation7 + $0x258] sm:$0xff]
    %v642 = vld [vmem:[#allocation7 + $0x260] sm:$0xff]
    %v643 = vld [vmem:[#allocation7 + $0x268] sm:$0xff]
    %v644 = vld [vmem:[#allocation7 + $0x270] sm:$0xff]
    %v645 = vld [vmem:[#allocation7 + $0x278] sm:$0xff]
    %v646 = vld [vmem:[#allocation7 + $0x280] sm:$0xff]
    %v647 = vld [vmem:[#allocation7 + $0x288] sm:$0xff]
    %v648 = vld [vmem:[#allocation7 + $0x290] sm:$0xff]
    %v649 = vld [vmem:[#allocation7 + $0x298] sm:$0xff]
    %v650 = vld [vmem:[#allocation7 + $0x2a0] sm:$0xff]
    %v651 = vld [vmem:[#allocation7 + $0x2a8] sm:$0xff]
    %v652 = vld [vmem:[#allocation7 + $0x2b0] sm:$0xff]
    %v653 = vld [vmem:[#allocation7 + $0x2b8] sm:$0xff]
    %v654 = vld [vmem:[#allocation7 + $0x2c0] sm:$0xff]
    %v655 = vld [vmem:[#allocation7 + $0x2c8] sm:$0xff]
    %v656 = vld [vmem:[#allocation7 + $0x2d0] sm:$0xff]
    %v657 = vld [vmem:[#allocation7 + $0x2d8] sm:$0xff]
    %v658 = vld [vmem:[#allocation7 + $0x2e0] sm:$0xff]
    %v659 = vld [vmem:[#allocation7 + $0x2e8] sm:$0xff]
    %v660 = vld [vmem:[#allocation7 + $0x2f0] sm:$0xff]
    %v661 = vld [vmem:[#allocation7 + $0x2f8] sm:$0xff]
    %v662 = vld [vmem:[#allocation7 + $0x300] sm:$0xff]
    %v663 = vld [vmem:[#allocation7 + $0x308] sm:$0xff]
    %v664 = vld [vmem:[#allocation7 + $0x310] sm:$0xff]
    %v665 = vld [vmem:[#allocation7 + $0x318] sm:$0xff]
    %v666 = vld [vmem:[#allocation7 + $0x320] sm:$0xff]
    %v667 = vld [vmem:[#allocation7 + $0x328] sm:$0xff]
    %v668 = vld [vmem:[#allocation7 + $0x330] sm:$0xff]
    %v669 = vld [vmem:[#allocation7 + $0x338] sm:$0xff]
    %v670 = vld [vmem:[#allocation7 + $0x340] sm:$0xff]
    %v671 = vld [vmem:[#allocation7 + $0x348] sm:$0xff]
    %v672 = vld [vmem:[#allocation7 + $0x350] sm:$0xff]
    %v673 = vld [vmem:[#allocation7 + $0x358] sm:$0xff]
    %v674 = vld [vmem:[#allocation7 + $0x360] sm:$0xff]
    %v675 = vld [vmem:[#allocation7 + $0x368] sm:$0xff]
    %v676 = vld [vmem:[#allocation7 + $0x370] sm:$0xff]
    %v677 = vld [vmem:[#allocation7 + $0x378] sm:$0xff]
    %v678 = vld [vmem:[#allocation7 + $0x380] sm:$0xff]
    %v679 = vld [vmem:[#allocation7 + $0x388] sm:$0xff]
    %v680 = vld [vmem:[#allocation7 + $0x390] sm:$0xff]
    %v681 = vld [vmem:[#allocation7 + $0x398] sm:$0xff]
    %v682 = vld [vmem:[#allocation7 + $0x3a0] sm:$0xff]
    %v683 = vld [vmem:[#allocation7 + $0x3a8] sm:$0xff]
    %v684 = vld [vmem:[#allocation7 + $0x3b0] sm:$0xff]
    %v685 = vld [vmem:[#allocation7 + $0x3b8] sm:$0xff]
    %v686 = vld [vmem:[#allocation7 + $0x3c0] sm:$0xff]
    %v687 = vld [vmem:[#allocation7 + $0x3c8] sm:$0xff]
    %v688 = vld [vmem:[#allocation7 + $0x3d0] sm:$0xff]
    %v689 = vld [vmem:[#allocation7 + $0x3d8] sm:$0xff]
    %v690 = vld [vmem:[#allocation7 + $0x3e0] sm:$0xff]
    %v691 = vld [vmem:[#allocation7 + $0x3e8] sm:$0xff]
    %v692 = vld [vmem:[#allocation7 + $0x3f0] sm:$0xff]
    %v693 = vld [vmem:[#allocation7 + $0x3f8] sm:$0xff]
    %v694 = vld [vmem:[%s3] sm:$0xf]
    %v696 = vlaneseq
    %v697 = vshrl.u32 %v696, 7
    %v698 = vsub.s32 0, %v697
    %v699 = vrot.slane %v694, %v698
    %v700 = vlaneseq
    %v701 = vshrl.u32 %v700, 7
    %v702 = vsub.s32 1, %v701
    %v703 = vrot.slane %v694, %v702
    %v704 = vlaneseq
    %v705 = vshrl.u32 %v704, 7
    %v706 = vsub.s32 2, %v705
    %v707 = vrot.slane %v694, %v706
    %v708 = vlaneseq
    %v709 = vshrl.u32 %v708, 7
    %v710 = vsub.s32 3, %v709
    %v711 = vrot.slane %v694, %v710
    %v844 = vunpack.c.l.b16 %v566
    %v845 = vunpack.c.h.b16 %v566
    %v846 = vunpack.c.l.b16 %v567
    %v847 = vunpack.c.h.b16 %v567
    %v848 = vunpack.c.l.b16 %v568
    %v849 = vunpack.c.h.b16 %v568
    %v850 = vunpack.c.l.b16 %v569
    %v851 = vunpack.c.h.b16 %v569
    %v852 = vunpack.c.l.b16 %v570
    %v853 = vunpack.c.h.b16 %v570
    %v854 = vunpack.c.l.b16 %v571
    %v855 = vunpack.c.h.b16 %v571
    %v856 = vunpack.c.l.b16 %v572
    %v857 = vunpack.c.h.b16 %v572
    %v858 = vunpack.c.l.b16 %v573
    %v859 = vunpack.c.h.b16 %v573
    %v860 = vunpack.c.l.b16 %v574
    %v861 = vunpack.c.h.b16 %v574
    %v862 = vunpack.c.l.b16 %v575
    %v863 = vunpack.c.h.b16 %v575
    %v864 = vunpack.c.l.b16 %v576
    %v865 = vunpack.c.h.b16 %v576
    %v866 = vunpack.c.l.b16 %v577
    %v867 = vunpack.c.h.b16 %v577
    %v868 = vunpack.c.l.b16 %v578
    %v869 = vunpack.c.h.b16 %v578
    %v870 = vunpack.c.l.b16 %v579
    %v871 = vunpack.c.h.b16 %v579
    %v872 = vunpack.c.l.b16 %v580
    %v873 = vunpack.c.h.b16 %v580
    %v874 = vunpack.c.l.b16 %v581
    %v875 = vunpack.c.h.b16 %v581
    %v876 = vunpack.c.l.b16 %v582
    %v877 = vunpack.c.h.b16 %v582
    %v878 = vunpack.c.l.b16 %v583
    %v879 = vunpack.c.h.b16 %v583
    %v880 = vunpack.c.l.b16 %v584
    %v881 = vunpack.c.h.b16 %v584
    %v882 = vunpack.c.l.b16 %v585
    %v883 = vunpack.c.h.b16 %v585
    %v884 = vunpack.c.l.b16 %v586
    %v885 = vunpack.c.h.b16 %v586
    %v886 = vunpack.c.l.b16 %v587
    %v887 = vunpack.c.h.b16 %v587
    %v888 = vunpack.c.l.b16 %v588
    %v889 = vunpack.c.h.b16 %v588
    %v890 = vunpack.c.l.b16 %v589
    %v891 = vunpack.c.h.b16 %v589
    %v892 = vunpack.c.l.b16 %v590
    %v893 = vunpack.c.h.b16 %v590
    %v894 = vunpack.c.l.b16 %v591
    %v895 = vunpack.c.h.b16 %v591
    %v896 = vunpack.c.l.b16 %v592
    %v897 = vunpack.c.h.b16 %v592
    %v898 = vunpack.c.l.b16 %v593
    %v899 = vunpack.c.h.b16 %v593
    %v900 = vunpack.c.l.b16 %v594
    %v901 = vunpack.c.h.b16 %v594
    %v902 = vunpack.c.l.b16 %v595
    %v903 = vunpack.c.h.b16 %v595
    %v904 = vunpack.c.l.b16 %v596
    %v905 = vunpack.c.h.b16 %v596
    %v906 = vunpack.c.l.b16 %v597
    %v907 = vunpack.c.h.b16 %v597
    %v908 = vunpack.c.l.b16 %v598
    %v909 = vunpack.c.h.b16 %v598
    %v910 = vunpack.c.l.b16 %v599
    %v911 = vunpack.c.h.b16 %v599
    %v912 = vunpack.c.l.b16 %v600
    %v913 = vunpack.c.h.b16 %v600
    %v914 = vunpack.c.l.b16 %v601
    %v915 = vunpack.c.h.b16 %v601
    %v916 = vunpack.c.l.b16 %v602
    %v917 = vunpack.c.h.b16 %v602
    %v918 = vunpack.c.l.b16 %v603
    %v919 = vunpack.c.h.b16 %v603
    %v920 = vunpack.c.l.b16 %v604
    %v921 = vunpack.c.h.b16 %v604
    %v922 = vunpack.c.l.b16 %v605
    %v923 = vunpack.c.h.b16 %v605
    %v924 = vunpack.c.l.b16 %v606
    %v925 = vunpack.c.h.b16 %v606
    %v926 = vunpack.c.l.b16 %v607
    %v927 = vunpack.c.h.b16 %v607
    %v928 = vunpack.c.l.b16 %v608
    %v929 = vunpack.c.h.b16 %v608
    %v930 = vunpack.c.l.b16 %v609
    %v931 = vunpack.c.h.b16 %v609
    %v932 = vunpack.c.l.b16 %v610
    %v933 = vunpack.c.h.b16 %v610
    %v934 = vunpack.c.l.b16 %v611
    %v935 = vunpack.c.h.b16 %v611
    %v936 = vunpack.c.l.b16 %v612
    %v937 = vunpack.c.h.b16 %v612
    %v938 = vunpack.c.l.b16 %v613
    %v939 = vunpack.c.h.b16 %v613
    %v940 = vunpack.c.l.b16 %v614
    %v941 = vunpack.c.h.b16 %v614
    %v942 = vunpack.c.l.b16 %v615
    %v943 = vunpack.c.h.b16 %v615
    %v944 = vunpack.c.l.b16 %v616
    %v945 = vunpack.c.h.b16 %v616
    %v946 = vunpack.c.l.b16 %v617
    %v947 = vunpack.c.h.b16 %v617
    %v948 = vunpack.c.l.b16 %v618
    %v949 = vunpack.c.h.b16 %v618
    %v950 = vunpack.c.l.b16 %v619
    %v951 = vunpack.c.h.b16 %v619
    %v952 = vunpack.c.l.b16 %v620
    %v953 = vunpack.c.h.b16 %v620
    %v954 = vunpack.c.l.b16 %v621
    %v955 = vunpack.c.h.b16 %v621
    %v956 = vunpack.c.l.b16 %v622
    %v957 = vunpack.c.h.b16 %v622
    %v958 = vunpack.c.l.b16 %v623
    %v959 = vunpack.c.h.b16 %v623
    %v960 = vunpack.c.l.b16 %v624
    %v961 = vunpack.c.h.b16 %v624
    %v962 = vunpack.c.l.b16 %v625
    %v963 = vunpack.c.h.b16 %v625
    %v964 = vunpack.c.l.b16 %v626
    %v965 = vunpack.c.h.b16 %v626
    %v966 = vunpack.c.l.b16 %v627
    %v967 = vunpack.c.h.b16 %v627
    %v968 = vunpack.c.l.b16 %v628
    %v969 = vunpack.c.h.b16 %v628
    %v970 = vunpack.c.l.b16 %v629
    %v971 = vunpack.c.h.b16 %v629
    %v972 = vunpack.c.l.b16 %v630
    %v973 = vunpack.c.h.b16 %v630
    %v974 = vunpack.c.l.b16 %v631
    %v975 = vunpack.c.h.b16 %v631
    %v976 = vunpack.c.l.b16 %v632
    %v977 = vunpack.c.h.b16 %v632
    %v978 = vunpack.c.l.b16 %v633
    %v979 = vunpack.c.h.b16 %v633
    %v980 = vunpack.c.l.b16 %v634
    %v981 = vunpack.c.h.b16 %v634
    %v982 = vunpack.c.l.b16 %v635
    %v983 = vunpack.c.h.b16 %v635
    %v984 = vunpack.c.l.b16 %v636
    %v985 = vunpack.c.h.b16 %v636
    %v986 = vunpack.c.l.b16 %v637
    %v987 = vunpack.c.h.b16 %v637
    %v988 = vunpack.c.l.b16 %v638
    %v989 = vunpack.c.h.b16 %v638
    %v990 = vunpack.c.l.b16 %v639
    %v991 = vunpack.c.h.b16 %v639
    %v992 = vunpack.c.l.b16 %v640
    %v993 = vunpack.c.h.b16 %v640
    %v994 = vunpack.c.l.b16 %v641
    %v995 = vunpack.c.h.b16 %v641
    %v996 = vunpack.c.l.b16 %v642
    %v997 = vunpack.c.h.b16 %v642
    %v998 = vunpack.c.l.b16 %v643
    %v999 = vunpack.c.h.b16 %v643
    %v1000 = vunpack.c.l.b16 %v644
    %v1001 = vunpack.c.h.b16 %v644
    %v1002 = vunpack.c.l.b16 %v645
    %v1003 = vunpack.c.h.b16 %v645
    %v1004 = vunpack.c.l.b16 %v646
    %v1005 = vunpack.c.h.b16 %v646
    %v1006 = vunpack.c.l.b16 %v647
    %v1007 = vunpack.c.h.b16 %v647
    %v1008 = vunpack.c.l.b16 %v648
    %v1009 = vunpack.c.h.b16 %v648
    %v1010 = vunpack.c.l.b16 %v649
    %v1011 = vunpack.c.h.b16 %v649
    %v1012 = vunpack.c.l.b16 %v650
    %v1013 = vunpack.c.h.b16 %v650
    %v1014 = vunpack.c.l.b16 %v651
    %v1015 = vunpack.c.h.b16 %v651
    %v1016 = vunpack.c.l.b16 %v652
    %v1017 = vunpack.c.h.b16 %v652
    %v1018 = vunpack.c.l.b16 %v653
    %v1019 = vunpack.c.h.b16 %v653
    %v1020 = vunpack.c.l.b16 %v654
    %v1021 = vunpack.c.h.b16 %v654
    %v1022 = vunpack.c.l.b16 %v655
    %v1023 = vunpack.c.h.b16 %v655
    %v1024 = vunpack.c.l.b16 %v656
    %v1025 = vunpack.c.h.b16 %v656
    %v1026 = vunpack.c.l.b16 %v657
    %v1027 = vunpack.c.h.b16 %v657
    %v1028 = vunpack.c.l.b16 %v658
    %v1029 = vunpack.c.h.b16 %v658
    %v1030 = vunpack.c.l.b16 %v659
    %v1031 = vunpack.c.h.b16 %v659
    %v1032 = vunpack.c.l.b16 %v660
    %v1033 = vunpack.c.h.b16 %v660
    %v1034 = vunpack.c.l.b16 %v661
    %v1035 = vunpack.c.h.b16 %v661
    %v1036 = vunpack.c.l.b16 %v662
    %v1037 = vunpack.c.h.b16 %v662
    %v1038 = vunpack.c.l.b16 %v663
    %v1039 = vunpack.c.h.b16 %v663
    %v1040 = vunpack.c.l.b16 %v664
    %v1041 = vunpack.c.h.b16 %v664
    %v1042 = vunpack.c.l.b16 %v665
    %v1043 = vunpack.c.h.b16 %v665
    %v1044 = vunpack.c.l.b16 %v666
    %v1045 = vunpack.c.h.b16 %v666
    %v1046 = vunpack.c.l.b16 %v667
    %v1047 = vunpack.c.h.b16 %v667
    %v1048 = vunpack.c.l.b16 %v668
    %v1049 = vunpack.c.h.b16 %v668
    %v1050 = vunpack.c.l.b16 %v669
    %v1051 = vunpack.c.h.b16 %v669
    %v1052 = vunpack.c.l.b16 %v670
    %v1053 = vunpack.c.h.b16 %v670
    %v1054 = vunpack.c.l.b16 %v671
    %v1055 = vunpack.c.h.b16 %v671
    %v1056 = vunpack.c.l.b16 %v672
    %v1057 = vunpack.c.h.b16 %v672
    %v1058 = vunpack.c.l.b16 %v673
    %v1059 = vunpack.c.h.b16 %v673
    %v1060 = vunpack.c.l.b16 %v674
    %v1061 = vunpack.c.h.b16 %v674
    %v1062 = vunpack.c.l.b16 %v675
    %v1063 = vunpack.c.h.b16 %v675
    %v1064 = vunpack.c.l.b16 %v676
    %v1065 = vunpack.c.h.b16 %v676
    %v1066 = vunpack.c.l.b16 %v677
    %v1067 = vunpack.c.h.b16 %v677
    %v1068 = vunpack.c.l.b16 %v678
    %v1069 = vunpack.c.h.b16 %v678
    %v1070 = vunpack.c.l.b16 %v679
    %v1071 = vunpack.c.h.b16 %v679
    %v1072 = vunpack.c.l.b16 %v680
    %v1073 = vunpack.c.h.b16 %v680
    %v1074 = vunpack.c.l.b16 %v681
    %v1075 = vunpack.c.h.b16 %v681
    %v1076 = vunpack.c.l.b16 %v682
    %v1077 = vunpack.c.h.b16 %v682
    %v1078 = vunpack.c.l.b16 %v683
    %v1079 = vunpack.c.h.b16 %v683
    %v1080 = vunpack.c.l.b16 %v684
    %v1081 = vunpack.c.h.b16 %v684
    %v1082 = vunpack.c.l.b16 %v685
    %v1083 = vunpack.c.h.b16 %v685
    %v1084 = vunpack.c.l.b16 %v686
    %v1085 = vunpack.c.h.b16 %v686
    %v1086 = vunpack.c.l.b16 %v687
    %v1087 = vunpack.c.h.b16 %v687
    %v1088 = vunpack.c.l.b16 %v688
    %v1089 = vunpack.c.h.b16 %v688
    %v1090 = vunpack.c.l.b16 %v689
    %v1091 = vunpack.c.h.b16 %v689
    %v1092 = vunpack.c.l.b16 %v690
    %v1093 = vunpack.c.h.b16 %v690
    %v1094 = vunpack.c.l.b16 %v691
    %v1095 = vunpack.c.h.b16 %v691
    %v1096 = vunpack.c.l.b16 %v692
    %v1097 = vunpack.c.h.b16 %v692
    %v1098 = vunpack.c.l.b16 %v693
    %v1099 = vunpack.c.h.b16 %v693
    %v1100 = vpack.c.b16 %v848, %v844
    %v1101 = vpack.c.b16 %v849, %v845
    %v1102 = vpack.c.b16 %v850, %v846
    %v1103 = vpack.c.b16 %v851, %v847
    %v1104 = vpack.c.b16 %v856, %v852
    %v1105 = vpack.c.b16 %v857, %v853
    %v1106 = vpack.c.b16 %v858, %v854
    %v1107 = vpack.c.b16 %v859, %v855
    %v1108 = vpack.c.b16 %v864, %v860
    %v1109 = vpack.c.b16 %v865, %v861
    %v1110 = vpack.c.b16 %v866, %v862
    %v1111 = vpack.c.b16 %v867, %v863
    %v1112 = vpack.c.b16 %v872, %v868
    %v1113 = vpack.c.b16 %v873, %v869
    %v1114 = vpack.c.b16 %v874, %v870
    %v1115 = vpack.c.b16 %v875, %v871
    %v1116 = vpack.c.b16 %v880, %v876
    %v1117 = vpack.c.b16 %v881, %v877
    %v1118 = vpack.c.b16 %v882, %v878
    %v1119 = vpack.c.b16 %v883, %v879
    %v1120 = vpack.c.b16 %v888, %v884
    %v1121 = vpack.c.b16 %v889, %v885
    %v1122 = vpack.c.b16 %v890, %v886
    %v1123 = vpack.c.b16 %v891, %v887
    %v1124 = vpack.c.b16 %v896, %v892
    %v1125 = vpack.c.b16 %v897, %v893
    %v1126 = vpack.c.b16 %v898, %v894
    %v1127 = vpack.c.b16 %v899, %v895
    %v1128 = vpack.c.b16 %v904, %v900
    %v1129 = vpack.c.b16 %v905, %v901
    %v1130 = vpack.c.b16 %v906, %v902
    %v1131 = vpack.c.b16 %v907, %v903
    %v1132 = vpack.c.b16 %v912, %v908
    %v1133 = vpack.c.b16 %v913, %v909
    %v1134 = vpack.c.b16 %v914, %v910
    %v1135 = vpack.c.b16 %v915, %v911
    %v1136 = vpack.c.b16 %v920, %v916
    %v1137 = vpack.c.b16 %v921, %v917
    %v1138 = vpack.c.b16 %v922, %v918
    %v1139 = vpack.c.b16 %v923, %v919
    %v1140 = vpack.c.b16 %v928, %v924
    %v1141 = vpack.c.b16 %v929, %v925
    %v1142 = vpack.c.b16 %v930, %v926
    %v1143 = vpack.c.b16 %v931, %v927
    %v1144 = vpack.c.b16 %v936, %v932
    %v1145 = vpack.c.b16 %v937, %v933
    %v1146 = vpack.c.b16 %v938, %v934
    %v1147 = vpack.c.b16 %v939, %v935
    %v1148 = vpack.c.b16 %v944, %v940
    %v1149 = vpack.c.b16 %v945, %v941
    %v1150 = vpack.c.b16 %v946, %v942
    %v1151 = vpack.c.b16 %v947, %v943
    %v1152 = vpack.c.b16 %v952, %v948
    %v1153 = vpack.c.b16 %v953, %v949
    %v1154 = vpack.c.b16 %v954, %v950
    %v1155 = vpack.c.b16 %v955, %v951
    %v1156 = vpack.c.b16 %v960, %v956
    %v1157 = vpack.c.b16 %v961, %v957
    %v1158 = vpack.c.b16 %v962, %v958
    %v1159 = vpack.c.b16 %v963, %v959
    %v1160 = vpack.c.b16 %v968, %v964
    %v1161 = vpack.c.b16 %v969, %v965
    %v1162 = vpack.c.b16 %v970, %v966
    %v1163 = vpack.c.b16 %v971, %v967
    %v1164 = vpack.c.b16 %v976, %v972
    %v1165 = vpack.c.b16 %v977, %v973
    %v1166 = vpack.c.b16 %v978, %v974
    %v1167 = vpack.c.b16 %v979, %v975
    %v1168 = vpack.c.b16 %v984, %v980
    %v1169 = vpack.c.b16 %v985, %v981
    %v1170 = vpack.c.b16 %v986, %v982
    %v1171 = vpack.c.b16 %v987, %v983
    %v1172 = vpack.c.b16 %v992, %v988
    %v1173 = vpack.c.b16 %v993, %v989
    %v1174 = vpack.c.b16 %v994, %v990
    %v1175 = vpack.c.b16 %v995, %v991
    %v1176 = vpack.c.b16 %v1000, %v996
    %v1177 = vpack.c.b16 %v1001, %v997
    %v1178 = vpack.c.b16 %v1002, %v998
    %v1179 = vpack.c.b16 %v1003, %v999
    %v1180 = vpack.c.b16 %v1008, %v1004
    %v1181 = vpack.c.b16 %v1009, %v1005
    %v1182 = vpack.c.b16 %v1010, %v1006
    %v1183 = vpack.c.b16 %v1011, %v1007
    %v1184 = vpack.c.b16 %v1016, %v1012
    %v1185 = vpack.c.b16 %v1017, %v1013
    %v1186 = vpack.c.b16 %v1018, %v1014
    %v1187 = vpack.c.b16 %v1019, %v1015
    %v1188 = vpack.c.b16 %v1024, %v1020
    %v1189 = vpack.c.b16 %v1025, %v1021
    %v1190 = vpack.c.b16 %v1026, %v1022
    %v1191 = vpack.c.b16 %v1027, %v1023
    %v1192 = vpack.c.b16 %v1032, %v1028
    %v1193 = vpack.c.b16 %v1033, %v1029
    %v1194 = vpack.c.b16 %v1034, %v1030
    %v1195 = vpack.c.b16 %v1035, %v1031
    %v1196 = vpack.c.b16 %v1040, %v1036
    %v1197 = vpack.c.b16 %v1041, %v1037
    %v1198 = vpack.c.b16 %v1042, %v1038
    %v1199 = vpack.c.b16 %v1043, %v1039
    %v1200 = vpack.c.b16 %v1048, %v1044
    %v1201 = vpack.c.b16 %v1049, %v1045
    %v1202 = vpack.c.b16 %v1050, %v1046
    %v1203 = vpack.c.b16 %v1051, %v1047
    %v1204 = vpack.c.b16 %v1056, %v1052
    %v1205 = vpack.c.b16 %v1057, %v1053
    %v1206 = vpack.c.b16 %v1058, %v1054
    %v1207 = vpack.c.b16 %v1059, %v1055
    %v1208 = vpack.c.b16 %v1064, %v1060
    %v1209 = vpack.c.b16 %v1065, %v1061
    %v1210 = vpack.c.b16 %v1066, %v1062
    %v1211 = vpack.c.b16 %v1067, %v1063
    %v1212 = vpack.c.b16 %v1072, %v1068
    %v1213 = vpack.c.b16 %v1073, %v1069
    %v1214 = vpack.c.b16 %v1074, %v1070
    %v1215 = vpack.c.b16 %v1075, %v1071
    %v1216 = vpack.c.b16 %v1080, %v1076
    %v1217 = vpack.c.b16 %v1081, %v1077
    %v1218 = vpack.c.b16 %v1082, %v1078
    %v1219 = vpack.c.b16 %v1083, %v1079
    %v1220 = vpack.c.b16 %v1088, %v1084
    %v1221 = vpack.c.b16 %v1089, %v1085
    %v1222 = vpack.c.b16 %v1090, %v1086
    %v1223 = vpack.c.b16 %v1091, %v1087
    %v1224 = vpack.c.b16 %v1096, %v1092
    %v1225 = vpack.c.b16 %v1097, %v1093
    %v1226 = vpack.c.b16 %v1098, %v1094
    %v1227 = vpack.c.b16 %v1099, %v1095
    %1356 = vmatprep.subr.bf16.mxu0 %v1129
    %1357 = vmatpush1.bf16.msra.mxu0 %v1128
    %1358 = vmatprep.subr.bf16.mxu0 %v1125
    %1359 = vmatpush1.bf16.msra.mxu0 %v1124
    %1360 = vmatprep.subr.bf16.mxu0 %v1121
    %1361 = vmatpush1.bf16.msra.mxu0 %v1120
    %1362 = vmatprep.subr.bf16.mxu0 %v1117
    %1363 = vmatpush1.bf16.msra.mxu0 %v1116
    %1364 = vmatprep.subr.bf16.mxu0 %v1113
    %1365 = vmatpush1.bf16.msra.mxu0 %v1112
    %1366 = vmatprep.subr.bf16.mxu0 %v1109
    %1367 = vmatpush1.bf16.msra.mxu0 %v1108
    %1368 = vmatprep.subr.bf16.mxu0 %v1105
    %1369 = vmatpush1.bf16.msra.mxu0 %v1104
    %1370 = vmatprep.subr.bf16.mxu0 %v1101
    %1371 = vmatpush1.bf16.msra.mxu0 %v1100
    %1372 = vmatprep.subr.bf16.mxu0 %v1161
    %1373 = vmatpush2.bf16.msra.mxu0 %v1160
    %1374 = vmatprep.subr.bf16.mxu0 %v1157
    %1375 = vmatpush2.bf16.msra.mxu0 %v1156
    %1376 = vmatprep.subr.bf16.mxu0 %v1153
    %1377 = vmatpush2.bf16.msra.mxu0 %v1152
    %1378 = vmatprep.subr.bf16.mxu0 %v1149
    %1379 = vmatpush2.bf16.msra.mxu0 %v1148
    %1380 = vmatprep.subr.bf16.mxu0 %v1145
    %1381 = vmatpush2.bf16.msra.mxu0 %v1144
    %1382 = vmatprep.subr.bf16.mxu0 %v1141
    %1383 = vmatpush2.bf16.msra.mxu0 %v1140
    %1384 = vmatprep.subr.bf16.mxu0 %v1137
    %1385 = vmatpush2.bf16.msra.mxu0 %v1136
    %1386 = vmatprep.subr.bf16.mxu0 %v1133
    %1387 = vmatpush2.bf16.msra.mxu0 %v1132
    %1388 = vmatprep.mubr.bf16.mxu0 %v563
    %1389 = vmatmul.mubr.bf16.gmra.mxu0 %v562
    %v1390 = vpop.f32.mrf.mxu0
    %v1391 = vadd.f32 %v699, %v1390
    %v1392 = vpop.f32.mrf.mxu0
    %v1393 = vadd.f32 %v703, %v1392
    %v1394 = vpop.f32.mrf.mxu0
    %v1395 = vadd.f32 %v699, %v1394
    %v1396 = vpop.f32.mrf.mxu0
    %v1397 = vadd.f32 %v703, %v1396
    %1398 = vdwg.mxu0
    %1399 = vmatprep.subr.bf16.mxu0 %v1193
    %1400 = vmatpush1.bf16.msra.mxu0 %v1192
    %1401 = vmatprep.subr.bf16.mxu0 %v1189
    %1402 = vmatpush1.bf16.msra.mxu0 %v1188
    %1403 = vmatprep.subr.bf16.mxu0 %v1185
    %1404 = vmatpush1.bf16.msra.mxu0 %v1184
    %1405 = vmatprep.subr.bf16.mxu0 %v1181
    %1406 = vmatpush1.bf16.msra.mxu0 %v1180
    %1407 = vmatprep.subr.bf16.mxu0 %v1177
    %1408 = vmatpush1.bf16.msra.mxu0 %v1176
    %1409 = vmatprep.subr.bf16.mxu0 %v1173
    %1410 = vmatpush1.bf16.msra.mxu0 %v1172
    %1411 = vmatprep.subr.bf16.mxu0 %v1169
    %1412 = vmatpush1.bf16.msra.mxu0 %v1168
    %1413 = vmatprep.subr.bf16.mxu0 %v1165
    %1414 = vmatpush1.bf16.msra.mxu0 %v1164
    %1415 = vmatprep.subr.bf16.mxu0 %v1225
    %1416 = vmatpush2.bf16.msra.mxu0 %v1224
    %1417 = vmatprep.subr.bf16.mxu0 %v1221
    %1418 = vmatpush2.bf16.msra.mxu0 %v1220
    %1419 = vmatprep.subr.bf16.mxu0 %v1217
    %1420 = vmatpush2.bf16.msra.mxu0 %v1216
    %1421 = vmatprep.subr.bf16.mxu0 %v1213
    %1422 = vmatpush2.bf16.msra.mxu0 %v1212
    %1423 = vmatprep.subr.bf16.mxu0 %v1209
    %1424 = vmatpush2.bf16.msra.mxu0 %v1208
    %1425 = vmatprep.subr.bf16.mxu0 %v1205
    %1426 = vmatpush2.bf16.msra.mxu0 %v1204
    %1427 = vmatprep.subr.bf16.mxu0 %v1201
    %1428 = vmatpush2.bf16.msra.mxu0 %v1200
    %1429 = vmatprep.subr.bf16.mxu0 %v1197
    %1430 = vmatpush2.bf16.msra.mxu0 %v1196
    %1431 = vmatprep.mubr.bf16.mxu0 %v565
    %1432 = vmatmul.mubr.bf16.gmra.mxu0 %v564
    %v1433 = vpop.f32.mrf.mxu0
    %v1434 = vadd.f32 %v1391, %v1433
    %v1435 = vpop.f32.mrf.mxu0
    %v1436 = vadd.f32 %v1393, %v1435
    %v1437 = vpop.f32.mrf.mxu0
    %v1438 = vadd.f32 %v1395, %v1437
    %v1439 = vpop.f32.mrf.mxu0
    %v1440 = vadd.f32 %v1397, %v1439
    %1441 = vdwg.mxu0
    %1442 = vmatprep.subr.bf16.mxu0 %v1131
    %1443 = vmatpush1.bf16.msra.mxu0 %v1130
    %1444 = vmatprep.subr.bf16.mxu0 %v1127
    %1445 = vmatpush1.bf16.msra.mxu0 %v1126
    %1446 = vmatprep.subr.bf16.mxu0 %v1123
    %1447 = vmatpush1.bf16.msra.mxu0 %v1122
    %1448 = vmatprep.subr.bf16.mxu0 %v1119
    %1449 = vmatpush1.bf16.msra.mxu0 %v1118
    %1450 = vmatprep.subr.bf16.mxu0 %v1115
    %1451 = vmatpush1.bf16.msra.mxu0 %v1114
    %1452 = vmatprep.subr.bf16.mxu0 %v1111
    %1453 = vmatpush1.bf16.msra.mxu0 %v1110
    %1454 = vmatprep.subr.bf16.mxu0 %v1107
    %1455 = vmatpush1.bf16.msra.mxu0 %v1106
    %1456 = vmatprep.subr.bf16.mxu0 %v1103
    %1457 = vmatpush1.bf16.msra.mxu0 %v1102
    %1458 = vmatprep.subr.bf16.mxu0 %v1163
    %1459 = vmatpush2.bf16.msra.mxu0 %v1162
    %1460 = vmatprep.subr.bf16.mxu0 %v1159
    %1461 = vmatpush2.bf16.msra.mxu0 %v1158
    %1462 = vmatprep.subr.bf16.mxu0 %v1155
    %1463 = vmatpush2.bf16.msra.mxu0 %v1154
    %1464 = vmatprep.subr.bf16.mxu0 %v1151
    %1465 = vmatpush2.bf16.msra.mxu0 %v1150
    %1466 = vmatprep.subr.bf16.mxu0 %v1147
    %1467 = vmatpush2.bf16.msra.mxu0 %v1146
    %1468 = vmatprep.subr.bf16.mxu0 %v1143
    %1469 = vmatpush2.bf16.msra.mxu0 %v1142
    %1470 = vmatprep.subr.bf16.mxu0 %v1139
    %1471 = vmatpush2.bf16.msra.mxu0 %v1138
    %1472 = vmatprep.subr.bf16.mxu0 %v1135
    %1473 = vmatpush2.bf16.msra.mxu0 %v1134
    %1474 = vmatprep.mubr.bf16.mxu0 %v563
    %1475 = vmatmul.mubr.bf16.gmra.mxu0 %v562
    %v1476 = vpop.f32.mrf.mxu0
    %v1477 = vadd.f32 %v707, %v1476
    %v1478 = vpop.f32.mrf.mxu0
    %v1479 = vadd.f32 %v711, %v1478
    %v1480 = vpop.f32.mrf.mxu0
    %v1481 = vadd.f32 %v707, %v1480
    %v1482 = vpop.f32.mrf.mxu0
    %v1483 = vadd.f32 %v711, %v1482
    %1484 = vdwg.mxu0
    %1485 = vmatprep.subr.bf16.mxu0 %v1195
    %1486 = vmatpush1.bf16.msra.mxu0 %v1194
    %1487 = vmatprep.subr.bf16.mxu0 %v1191
    %1488 = vmatpush1.bf16.msra.mxu0 %v1190
    %1489 = vmatprep.subr.bf16.mxu0 %v1187
    %1490 = vmatpush1.bf16.msra.mxu0 %v1186
    %1491 = vmatprep.subr.bf16.mxu0 %v1183
    %1492 = vmatpush1.bf16.msra.mxu0 %v1182
    %1493 = vmatprep.subr.bf16.mxu0 %v1179
    %1494 = vmatpush1.bf16.msra.mxu0 %v1178
    %1495 = vmatprep.subr.bf16.mxu0 %v1175
    %1496 = vmatpush1.bf16.msra.mxu0 %v1174
    %1497 = vmatprep.subr.bf16.mxu0 %v1171
    %1498 = vmatpush1.bf16.msra.mxu0 %v1170
    %1499 = vmatprep.subr.bf16.mxu0 %v1167
    %1500 = vmatpush1.bf16.msra.mxu0 %v1166
    %1501 = vmatprep.subr.bf16.mxu0 %v1227
    %1502 = vmatpush2.bf16.msra.mxu0 %v1226
    %1503 = vmatprep.subr.bf16.mxu0 %v1223
    %1504 = vmatpush2.bf16.msra.mxu0 %v1222
    %1505 = vmatprep.subr.bf16.mxu0 %v1219
    %1506 = vmatpush2.bf16.msra.mxu0 %v1218
    %1507 = vmatprep.subr.bf16.mxu0 %v1215
    %1508 = vmatpush2.bf16.msra.mxu0 %v1214
    %1509 = vmatprep.subr.bf16.mxu0 %v1211
    %1510 = vmatpush2.bf16.msra.mxu0 %v1210
    %1511 = vmatprep.subr.bf16.mxu0 %v1207
    %1512 = vmatpush2.bf16.msra.mxu0 %v1206
    %1513 = vmatprep.subr.bf16.mxu0 %v1203
    %1514 = vmatpush2.bf16.msra.mxu0 %v1202
    %1515 = vmatprep.subr.bf16.mxu0 %v1199
    %1516 = vmatpush2.bf16.msra.mxu0 %v1198
    %1517 = vmatprep.mubr.bf16.mxu0 %v565
    %1518 = vmatmul.mubr.bf16.gmra.mxu0 %v564
    %v1519 = vpop.f32.mrf.mxu0
    %v1520 = vadd.f32 %v1477, %v1519
    %v1521 = vpop.f32.mrf.mxu0
    %v1522 = vadd.f32 %v1479, %v1521
    %v1523 = vpop.f32.mrf.mxu0
    %v1524 = vadd.f32 %v1481, %v1523
    %v1525 = vpop.f32.mrf.mxu0
    %v1526 = vadd.f32 %v1483, %v1525
    %1527 = vdwg.mxu0
    %v1528 = vmax.f32 %v1434, 0.0
    %v1529 = vmax.f32 %v1436, 0.0
    %v1530 = vmax.f32 %v1520, 0.0
    %v1531 = vmax.f32 %v1522, 0.0
    %v1532 = vmax.f32 %v1438, 0.0
    %v1533 = vmax.f32 %v1440, 0.0
    %v1534 = vmax.f32 %v1524, 0.0
    %v1535 = vmax.f32 %v1526, 0.0
    %v1536 = vpack.c.bf16 %v1532, %v1528
    %v1537 = vpack.c.bf16 %v1533, %v1529
    %v1538 = vpack.c.bf16 %v1534, %v1530
    %v1539 = vpack.c.bf16 %v1535, %v1531
    %v1540 = vld [vmem:[#allocation8] sm:$0xf]
    %v1541 = vld [vmem:[#allocation8 + $0x4] sm:$0xf]
    %v1542 = vld [vmem:[#allocation8 + $0x8] sm:$0xf]
    %v1543 = vld [vmem:[#allocation8 + $0xc] sm:$0xf]
    %v1544 = vld [vmem:[#allocation8 + $0x10] sm:$0xf]
    %v1545 = vld [vmem:[#allocation8 + $0x14] sm:$0xf]
    %v1546 = vld [vmem:[#allocation8 + $0x18] sm:$0xf]
    %v1547 = vld [vmem:[#allocation8 + $0x1c] sm:$0xf]
    %v1548 = vld [vmem:[#allocation8 + $0x20] sm:$0xf]
    %v1549 = vld [vmem:[#allocation8 + $0x24] sm:$0xf]
    %v1550 = vld [vmem:[#allocation8 + $0x28] sm:$0xf]
    %v1551 = vld [vmem:[#allocation8 + $0x2c] sm:$0xf]
    %v1552 = vld [vmem:[#allocation8 + $0x30] sm:$0xf]
    %v1553 = vld [vmem:[#allocation8 + $0x34] sm:$0xf]
    %v1554 = vld [vmem:[#allocation8 + $0x38] sm:$0xf]
    %v1555 = vld [vmem:[#allocation8 + $0x3c] sm:$0xf]
    %v1556 = vld [vmem:[#allocation8 + $0x40] sm:$0xf]
    %v1557 = vld [vmem:[#allocation8 + $0x44] sm:$0xf]
    %v1558 = vld [vmem:[#allocation8 + $0x48] sm:$0xf]
    %v1559 = vld [vmem:[#allocation8 + $0x4c] sm:$0xf]
    %v1560 = vld [vmem:[#allocation8 + $0x50] sm:$0xf]
    %v1561 = vld [vmem:[#allocation8 + $0x54] sm:$0xf]
    %v1562 = vld [vmem:[#allocation8 + $0x58] sm:$0xf]
    %v1563 = vld [vmem:[#allocation8 + $0x5c] sm:$0xf]
    %v1564 = vld [vmem:[#allocation8 + $0x60] sm:$0xf]
    %v1565 = vld [vmem:[#allocation8 + $0x64] sm:$0xf]
    %v1566 = vld [vmem:[#allocation8 + $0x68] sm:$0xf]
    %v1567 = vld [vmem:[#allocation8 + $0x6c] sm:$0xf]
    %v1568 = vld [vmem:[#allocation8 + $0x70] sm:$0xf]
    %v1569 = vld [vmem:[#allocation8 + $0x74] sm:$0xf]
    %v1570 = vld [vmem:[#allocation8 + $0x78] sm:$0xf]
    %v1571 = vld [vmem:[#allocation8 + $0x7c] sm:$0xf]
    %v1572 = vld [vmem:[#allocation8 + $0x80] sm:$0xf]
    %v1573 = vld [vmem:[#allocation8 + $0x84] sm:$0xf]
    %v1574 = vld [vmem:[#allocation8 + $0x88] sm:$0xf]
    %v1575 = vld [vmem:[#allocation8 + $0x8c] sm:$0xf]
    %v1576 = vld [vmem:[#allocation8 + $0x90] sm:$0xf]
    %v1577 = vld [vmem:[#allocation8 + $0x94] sm:$0xf]
    %v1578 = vld [vmem:[#allocation8 + $0x98] sm:$0xf]
    %v1579 = vld [vmem:[#allocation8 + $0x9c] sm:$0xf]
    %v1580 = vld [vmem:[#allocation8 + $0xa0] sm:$0xf]
    %v1581 = vld [vmem:[#allocation8 + $0xa4] sm:$0xf]
    %v1582 = vld [vmem:[#allocation8 + $0xa8] sm:$0xf]
    %v1583 = vld [vmem:[#allocation8 + $0xac] sm:$0xf]
    %v1584 = vld [vmem:[#allocation8 + $0xb0] sm:$0xf]
    %v1585 = vld [vmem:[#allocation8 + $0xb4] sm:$0xf]
    %v1586 = vld [vmem:[#allocation8 + $0xb8] sm:$0xf]
    %v1587 = vld [vmem:[#allocation8 + $0xbc] sm:$0xf]
    %v1588 = vld [vmem:[#allocation8 + $0xc0] sm:$0xf]
    %v1589 = vld [vmem:[#allocation8 + $0xc4] sm:$0xf]
    %v1590 = vld [vmem:[#allocation8 + $0xc8] sm:$0xf]
    %v1591 = vld [vmem:[#allocation8 + $0xcc] sm:$0xf]
    %v1592 = vld [vmem:[#allocation8 + $0xd0] sm:$0xf]
    %v1593 = vld [vmem:[#allocation8 + $0xd4] sm:$0xf]
    %v1594 = vld [vmem:[#allocation8 + $0xd8] sm:$0xf]
    %v1595 = vld [vmem:[#allocation8 + $0xdc] sm:$0xf]
    %v1596 = vld [vmem:[#allocation8 + $0xe0] sm:$0xf]
    %v1597 = vld [vmem:[#allocation8 + $0xe4] sm:$0xf]
    %v1598 = vld [vmem:[#allocation8 + $0xe8] sm:$0xf]
    %v1599 = vld [vmem:[#allocation8 + $0xec] sm:$0xf]
    %v1600 = vld [vmem:[#allocation8 + $0xf0] sm:$0xf]
    %v1601 = vld [vmem:[#allocation8 + $0xf4] sm:$0xf]
    %v1602 = vld [vmem:[#allocation8 + $0xf8] sm:$0xf]
    %v1603 = vld [vmem:[#allocation8 + $0xfc] sm:$0xf]
    %v1604 = vld [vmem:[%s5] sm:$0x1]
    %v1606 = vlaneseq
    %v1607 = vshrl.u32 %v1606, 7
    %v1608 = vsub.s32 0, %v1607
    %v1609 = vrot.slane %v1604, %v1608
    %v1675 = vunpack.c.l.b16 %v1540
    %v1676 = vunpack.c.l.b16 %v1541
    %v1677 = vunpack.c.l.b16 %v1542
    %v1678 = vunpack.c.l.b16 %v1543
    %v1679 = vunpack.c.l.b16 %v1544
    %v1680 = vunpack.c.l.b16 %v1545
    %v1681 = vunpack.c.l.b16 %v1546
    %v1682 = vunpack.c.l.b16 %v1547
    %v1683 = vunpack.c.l.b16 %v1548
    %v1684 = vunpack.c.l.b16 %v1549
    %v1685 = vunpack.c.l.b16 %v1550
    %v1686 = vunpack.c.l.b16 %v1551
    %v1687 = vunpack.c.l.b16 %v1552
    %v1688 = vunpack.c.l.b16 %v1553
    %v1689 = vunpack.c.l.b16 %v1554
    %v1690 = vunpack.c.l.b16 %v1555
    %v1691 = vunpack.c.l.b16 %v1556
    %v1692 = vunpack.c.l.b16 %v1557
    %v1693 = vunpack.c.l.b16 %v1558
    %v1694 = vunpack.c.l.b16 %v1559
    %v1695 = vunpack.c.l.b16 %v1560
    %v1696 = vunpack.c.l.b16 %v1561
    %v1697 = vunpack.c.l.b16 %v1562
    %v1698 = vunpack.c.l.b16 %v1563
    %v1699 = vunpack.c.l.b16 %v1564
    %v1700 = vunpack.c.l.b16 %v1565
    %v1701 = vunpack.c.l.b16 %v1566
    %v1702 = vunpack.c.l.b16 %v1567
    %v1703 = vunpack.c.l.b16 %v1568
    %v1704 = vunpack.c.l.b16 %v1569
    %v1705 = vunpack.c.l.b16 %v1570
    %v1706 = vunpack.c.l.b16 %v1571
    %v1707 = vunpack.c.l.b16 %v1572
    %v1708 = vunpack.c.l.b16 %v1573
    %v1709 = vunpack.c.l.b16 %v1574
    %v1710 = vunpack.c.l.b16 %v1575
    %v1711 = vunpack.c.l.b16 %v1576
    %v1712 = vunpack.c.l.b16 %v1577
    %v1713 = vunpack.c.l.b16 %v1578
    %v1714 = vunpack.c.l.b16 %v1579
    %v1715 = vunpack.c.l.b16 %v1580
    %v1716 = vunpack.c.l.b16 %v1581
    %v1717 = vunpack.c.l.b16 %v1582
    %v1718 = vunpack.c.l.b16 %v1583
    %v1719 = vunpack.c.l.b16 %v1584
    %v1720 = vunpack.c.l.b16 %v1585
    %v1721 = vunpack.c.l.b16 %v1586
    %v1722 = vunpack.c.l.b16 %v1587
    %v1723 = vunpack.c.l.b16 %v1588
    %v1724 = vunpack.c.l.b16 %v1589
    %v1725 = vunpack.c.l.b16 %v1590
    %v1726 = vunpack.c.l.b16 %v1591
    %v1727 = vunpack.c.l.b16 %v1592
    %v1728 = vunpack.c.l.b16 %v1593
    %v1729 = vunpack.c.l.b16 %v1594
    %v1730 = vunpack.c.l.b16 %v1595
    %v1731 = vunpack.c.l.b16 %v1596
    %v1732 = vunpack.c.l.b16 %v1597
    %v1733 = vunpack.c.l.b16 %v1598
    %v1734 = vunpack.c.l.b16 %v1599
    %v1735 = vunpack.c.l.b16 %v1600
    %v1736 = vunpack.c.l.b16 %v1601
    %v1737 = vunpack.c.l.b16 %v1602
    %v1738 = vunpack.c.l.b16 %v1603
    %v1739 = vpack.c.b16 %v1676, %v1675
    %v1740 = vpack.c.b16 %v1678, %v1677
    %v1741 = vpack.c.b16 %v1680, %v1679
    %v1742 = vpack.c.b16 %v1682, %v1681
    %v1743 = vpack.c.b16 %v1684, %v1683
    %v1744 = vpack.c.b16 %v1686, %v1685
    %v1745 = vpack.c.b16 %v1688, %v1687
    %v1746 = vpack.c.b16 %v1690, %v1689
    %v1747 = vpack.c.b16 %v1692, %v1691
    %v1748 = vpack.c.b16 %v1694, %v1693
    %v1749 = vpack.c.b16 %v1696, %v1695
    %v1750 = vpack.c.b16 %v1698, %v1697
    %v1751 = vpack.c.b16 %v1700, %v1699
    %v1752 = vpack.c.b16 %v1702, %v1701
    %v1753 = vpack.c.b16 %v1704, %v1703
    %v1754 = vpack.c.b16 %v1706, %v1705
    %v1755 = vpack.c.b16 %v1708, %v1707
    %v1756 = vpack.c.b16 %v1710, %v1709
    %v1757 = vpack.c.b16 %v1712, %v1711
    %v1758 = vpack.c.b16 %v1714, %v1713
    %v1759 = vpack.c.b16 %v1716, %v1715
    %v1760 = vpack.c.b16 %v1718, %v1717
    %v1761 = vpack.c.b16 %v1720, %v1719
    %v1762 = vpack.c.b16 %v1722, %v1721
    %v1763 = vpack.c.b16 %v1724, %v1723
    %v1764 = vpack.c.b16 %v1726, %v1725
    %v1765 = vpack.c.b16 %v1728, %v1727
    %v1766 = vpack.c.b16 %v1730, %v1729
    %v1767 = vpack.c.b16 %v1732, %v1731
    %v1768 = vpack.c.b16 %v1734, %v1733
    %v1769 = vpack.c.b16 %v1736, %v1735
    %v1770 = vpack.c.b16 %v1738, %v1737
    %1803 = vmatprep.subr.bf16.mxu0 0
    %1804 = vmatpush1.bf16.msra.mxu0 %v1746
    %1805 = vmatprep.subr.bf16.mxu0 0
    %1806 = vmatpush1.bf16.msra.mxu0 %v1745
    %1807 = vmatprep.subr.bf16.mxu0 0
    %1808 = vmatpush1.bf16.msra.mxu0 %v1744
    %1809 = vmatprep.subr.bf16.mxu0 0
    %1810 = vmatpush1.bf16.msra.mxu0 %v1743
    %1811 = vmatprep.subr.bf16.mxu0 0
    %1812 = vmatpush1.bf16.msra.mxu0 %v1742
    %1813 = vmatprep.subr.bf16.mxu0 0
    %1814 = vmatpush1.bf16.msra.mxu0 %v1741
    %1815 = vmatprep.subr.bf16.mxu0 0
    %1816 = vmatpush1.bf16.msra.mxu0 %v1740
    %1817 = vmatprep.subr.bf16.mxu0 0
    %1818 = vmatpush1.bf16.msra.mxu0 %v1739
    %1819 = vmatprep.subr.bf16.mxu0 0
    %1820 = vmatpush2.bf16.msra.mxu0 %v1754
    %1821 = vmatprep.subr.bf16.mxu0 0
    %1822 = vmatpush2.bf16.msra.mxu0 %v1753
    %1823 = vmatprep.subr.bf16.mxu0 0
    %1824 = vmatpush2.bf16.msra.mxu0 %v1752
    %1825 = vmatprep.subr.bf16.mxu0 0
    %1826 = vmatpush2.bf16.msra.mxu0 %v1751
    %1827 = vmatprep.subr.bf16.mxu0 0
    %1828 = vmatpush2.bf16.msra.mxu0 %v1750
    %1829 = vmatprep.subr.bf16.mxu0 0
    %1830 = vmatpush2.bf16.msra.mxu0 %v1749
    %1831 = vmatprep.subr.bf16.mxu0 0
    %1832 = vmatpush2.bf16.msra.mxu0 %v1748
    %1833 = vmatprep.subr.bf16.mxu0 0
    %1834 = vmatpush2.bf16.msra.mxu0 %v1747
    %1835 = vmatprep.mubr.bf16.mxu0 %v1537
    %1836 = vmatmul.mubr.bf16.gmra.mxu0 %v1536
    %v1837 = vpop.f32.mrf.mxu0
    %v1838 = vadd.f32 %v1609, %v1837
    %v1839 = vpop.f32.mrf.mxu0
    %v1840 = vpop.f32.mrf.mxu0
    %v1841 = vadd.f32 %v1609, %v1840
    %v1842 = vpop.f32.mrf.mxu0
    %1843 = vdwg.mxu0
    %1844 = vmatprep.subr.bf16.mxu0 0
    %1845 = vmatpush1.bf16.msra.mxu0 %v1762
    %1846 = vmatprep.subr.bf16.mxu0 0
    %1847 = vmatpush1.bf16.msra.mxu0 %v1761
    %1848 = vmatprep.subr.bf16.mxu0 0
    %1849 = vmatpush1.bf16.msra.mxu0 %v1760
    %1850 = vmatprep.subr.bf16.mxu0 0
    %1851 = vmatpush1.bf16.msra.mxu0 %v1759
    %1852 = vmatprep.subr.bf16.mxu0 0
    %1853 = vmatpush1.bf16.msra.mxu0 %v1758
    %1854 = vmatprep.subr.bf16.mxu0 0
    %1855 = vmatpush1.bf16.msra.mxu0 %v1757
    %1856 = vmatprep.subr.bf16.mxu0 0
    %1857 = vmatpush1.bf16.msra.mxu0 %v1756
    %1858 = vmatprep.subr.bf16.mxu0 0
    %1859 = vmatpush1.bf16.msra.mxu0 %v1755
    %1860 = vmatprep.subr.bf16.mxu0 0
    %1861 = vmatpush2.bf16.msra.mxu0 %v1770
    %1862 = vmatprep.subr.bf16.mxu0 0
    %1863 = vmatpush2.bf16.msra.mxu0 %v1769
    %1864 = vmatprep.subr.bf16.mxu0 0
    %1865 = vmatpush2.bf16.msra.mxu0 %v1768
    %1866 = vmatprep.subr.bf16.mxu0 0
    %1867 = vmatpush2.bf16.msra.mxu0 %v1767
    %1868 = vmatprep.subr.bf16.mxu0 0
    %1869 = vmatpush2.bf16.msra.mxu0 %v1766
    %1870 = vmatprep.subr.bf16.mxu0 0
    %1871 = vmatpush2.bf16.msra.mxu0 %v1765
    %1872 = vmatprep.subr.bf16.mxu0 0
    %1873 = vmatpush2.bf16.msra.mxu0 %v1764
    %1874 = vmatprep.subr.bf16.mxu0 0
    %1875 = vmatpush2.bf16.msra.mxu0 %v1763
    %1876 = vmatprep.mubr.bf16.mxu0 %v1539
    %1877 = vmatmul.mubr.bf16.gmra.mxu0 %v1538
    %v1878 = vpop.f32.mrf.mxu0
    %v1879 = vadd.f32 %v1838, %v1878
    %v1880 = vpop.f32.mrf.mxu0
    %v1881 = vpop.f32.mrf.mxu0
    %v1882 = vadd.f32 %v1841, %v1881
    %v1883 = vpop.f32.mrf.mxu0
    %1884 = vdwg.mxu0
    %1885 = vst [vmem:[#allocation10] sm:$0xff] %v1879
    %1886 = vst [vmem:[#allocation10 + $0x8] sm:$0xff] %v1882
    // Predicated region
    $region42: #{tpu_custom_call.1} parent=1 // pred_check
      _
    $region43: #{tpu_custom_call.1} parent=1 // pred_check_branch
      %1888 = sbr.rel (0) target = $region45
    $region44: #{tpu_custom_call.1} parent=1 // pred_region
      %s1890 = ssub.s32 256, 256
      %1891 = vsyncadd [#allocation4], %s1890
      %s1892 = sshll.u32 [#allocation10], 4
      %s1893 = int_to_ptr.vmem [resolvable:$true] %s1892
      %1898 = dma.vmem_to_hbm [thread:$0]  %s1893, 256, %s6, [#allocation4], 128, 128, 8
    $region45: #{tpu_custom_call.1} parent=1 // pred_fallthru
      _
    // Predicated region
    $region46: #{tpu_custom_call.1} parent=1 // pred_check
      _
    $region47: #{tpu_custom_call.1} parent=1 // pred_check_branch
      %1900 = sbr.rel (0) target = $region49
    $region48: #{tpu_custom_call.1} parent=1 // pred_region
      %1901 = dma.done [#allocation4], 256
    $region49: #{tpu_custom_call.1} parent=1 // pred_fallthru
      _
    %1902 = vsyncpa [#allocation3], 1
    %1903 = vsyncpa [#allocation6], 1
    %1904 = vsyncpa [#allocation9], 1
    %1905 = vsyncpa [#allocation4], 1

// kernel: tpu_custom_call.1
$region0: #{tpu_custom_call.1}
  #allocation0 [shape = 'u32[]', space=smem, size = 0x4, offset = 0x4, fixed_abs, tag = 'smem constant byte address 0x4 - core index']
  #allocation1 [shape = 'u32[144,128]{1,0:T(1,128)}', space=vmem, size = 0x12000, scoped, tag = 'internal scratch']
  %s0 = inlined_call_operand.hbm [shape: bf16[16,256], index: 0, kind: input, shape index: {}]
  %s1 = inlined_call_operand.hbm [shape: bf16[256,512], index: 1, kind: input, shape index: {}]
  %s2 = inlined_call_operand.hbm [shape: bf16[512,512], index: 2, kind: input, shape index: {}]
  %s3 = inlined_call_operand.vmem [shape: f32[1,512], index: 3, kind: input, shape index: {}]
  %s4 = inlined_call_operand.hbm [shape: bf16[512,128], index: 4, kind: input, shape index: {}]
  %s5 = inlined_call_operand.vmem [shape: f32[1,128], index: 5, kind: input, shape index: {}]
  %s6 = inlined_call_operand.hbm [shape: f32[16,128], index: 6, kind: output, shape index: {}]
  %s7 = sld [smem:[#allocation0]]
  $region50: #{tpu_custom_call.1} parent=0
    _
  %s9 = ssub.s32 1, %s7
  %s10 = scalar_select 0, %s9, %s7
  $region1: #{tpu_custom_call.1} parent=0
    #allocation2 [shape = 'u8[8192]{0}', space=vmem, size = 0x2000, scoped, tag = 'input window, operand 0, single buffered']
    #allocation3 [shape = 's32[1]{0}', space=sflag, size = 0x4, scoped, tag = 'scoped memory for tpu_custom_call.1']
    #allocation4 [shape = 's32[1]{0}', space=sflag, size = 0x4, scoped, tag = 'scoped memory for tpu_custom_call.1']
    #allocation5 [shape = 'u8[262144]{0}', space=vmem, size = 0x40000, scoped, tag = 'input window, operand 1, single buffered']
    #allocation6 [shape = 's32[1]{0}', space=sflag, size = 0x4, scoped, tag = 'scoped memory for tpu_custom_call.1']
    #allocation7 [shape = 'u8[524288]{0}', space=vmem, size = 0x80000, scoped, tag = 'input window, operand 2, single buffered']
    #allocation8 [shape = 'u8[131072]{0}', space=vmem, size = 0x20000, scoped, tag = 'input window, operand 4, single buffered']
    #allocation9 [shape = 's32[1]{0}', space=sflag, size = 0x4, scoped, tag = 'scoped memory for tpu_custom_call.1']
    #allocation10 [shape = 'u8[8192]{0}', space=vmem, size = 0x2000, scoped, tag = 'output window, operand 0, single buffered']
    %11 = vsyncpa [#allocation3], 0
    %12 = vsyncpa [#allocation6], 0
    %13 = vsyncpa [#allocation9], 0
    %14 = vsyncpa [#allocation4], 0
    // Predicated region
    $region2: #{tpu_custom_call.1} parent=1 // pred_check
      _
    $region3: #{tpu_custom_call.1} parent=1 // pred_check_branch
      %16 = sbr.rel (0) target = $region5
    $region4: #{tpu_custom_call.1} parent=1 // pred_region
      %s18 = ssub.s32 256, 256
      %19 = vsyncadd [#allocation3], %s18
      %s20 = sshll.u32 [#allocation2], 4
      %s21 = int_to_ptr.vmem [resolvable:$true] %s20
      %26 = dma.hbm_to_vmem [thread:$0]  %s0, 256, %s21, [#allocation3], 128, 128, 8
    $region5: #{tpu_custom_call.1} parent=1 // pred_fallthru
      _
    // Predicated region
    $region6: #{tpu_custom_call.1} parent=1 // pred_check
      _
    $region7: #{tpu_custom_call.1} parent=1 // pred_check_branch
      %28 = sbr.rel (0) target = $region9
    $region8: #{tpu_custom_call.1} parent=1 // pred_region
      %s30 = ssub.s32 8192, 8192
      %31 = vsyncadd [#allocation6], %s30
      %s32 = sshll.u32 [#allocation5], 4
      %s33 = int_to_ptr.vmem [resolvable:$true] %s32
      %38 = dma.hbm_to_vmem [thread:$0]  %s1, 8192, %s33, [#allocation6], 256, 256, 16
    $region9: #{tpu_custom_call.1} parent=1 // pred_fallthru
      _
    // Predicated region
    $region10: #{tpu_custom_call.1} parent=1 // pred_check
      _
    $region11: #{tpu_custom_call.1} parent=1 // pred_check_branch
      %40 = sbr.rel (0) target = $region13
    $region12: #{tpu_custom_call.1} parent=1 // pred_region
      %s42 = ssub.s32 16384, 16384
      %43 = vsyncadd [#allocation6], %s42
      %s44 = sshll.u32 [#allocation7], 4
      %s45 = int_to_ptr.vmem [resolvable:$true] %s44
      %50 = dma.hbm_to_vmem [thread:$0]  %s2, 16384, %s45, [#allocation6], 256, 256, 16
    $region13: #{tpu_custom_call.1} parent=1 // pred_fallthru
      _
    // Predicated region
    $region14: #{tpu_custom_call.1} parent=1 // pred_check
      _
    $region15: #{tpu_custom_call.1} parent=1 // pred_check_branch
      %52 = sbr.rel (0) target = $region17
    $region16: #{tpu_custom_call.1} parent=1 // pred_region
      _
    $region17: #{tpu_custom_call.1} parent=1 // pred_fallthru
      _
    // Predicated region
    $region18: #{tpu_custom_call.1} parent=1 // pred_check
      _
    $region19: #{tpu_custom_call.1} parent=1 // pred_check_branch
      %54 = sbr.rel (0) target = $region21
    $region20: #{tpu_custom_call.1} parent=1 // pred_region
      %s56 = ssub.s32 4096, 4096
      %57 = vsyncadd [#allocation9], %s56
      %s58 = sshll.u32 [#allocation8], 4
      %s59 = int_to_ptr.vmem [resolvable:$true] %s58
      %64 = dma.hbm_to_vmem [thread:$0]  %s4, 4096, %s59, [#allocation9], 64, 64, 4
    $region21: #{tpu_custom_call.1} parent=1 // pred_fallthru
      _
    // Predicated region
    $region22: #{tpu_custom_call.1} parent=1 // pred_check
      _
    $region23: #{tpu_custom_call.1} parent=1 // pred_check_branch
      %66 = sbr.rel (0) target = $region25
    $region24: #{tpu_custom_call.1} parent=1 // pred_region
      _
    $region25: #{tpu_custom_call.1} parent=1 // pred_fallthru
      _
    // Predicated region
    $region26: #{tpu_custom_call.1} parent=1 // pred_check
      _
    $region27: #{tpu_custom_call.1} parent=1 // pred_check_branch
      %68 = sbr.rel (0) target = $region29
    $region28: #{tpu_custom_call.1} parent=1 // pred_region
      %69 = dma.done [#allocation3], 256
    $region29: #{tpu_custom_call.1} parent=1 // pred_fallthru
      _
    // Predicated region
    $region30: #{tpu_custom_call.1} parent=1 // pred_check
      _
    $region31: #{tpu_custom_call.1} parent=1 // pred_check_branch
      %71 = sbr.rel (0) target = $region33
    $region32: #{tpu_custom_call.1} parent=1 // pred_region
      %72 = dma.done [#allocation6], 8192
    $region33: #{tpu_custom_call.1} parent=1 // pred_fallthru
      _
    // Predicated region
    $region34: #{tpu_custom_call.1} parent=1 // pred_check
      _
    $region35: #{tpu_custom_call.1} parent=1 // pred_check_branch
      %74 = sbr.rel (0) target = $region37
    $region36: #{tpu_custom_call.1} parent=1 // pred_region
      %75 = dma.done [#allocation6], 16384
    $region37: #{tpu_custom_call.1} parent=1 // pred_fallthru
      _
    // Predicated region
    $region38: #{tpu_custom_call.1} parent=1 // pred_check
      _
    $region39: #{tpu_custom_call.1} parent=1 // pred_check_branch
      %77 = sbr.rel (0) target = $region41
    $region40: #{tpu_custom_call.1} parent=1 // pred_region
      %78 = dma.done [#allocation9], 4096
    $region41: #{tpu_custom_call.1} parent=1 // pred_fallthru
      _
    %v80 = vld [vmem:[#allocation2] sm:$0xff]
    %v81 = vld [vmem:[#allocation2 + $0x8] sm:$0xff]
    %v82 = vld [vmem:[#allocation5] sm:$0xff]
    %v83 = vld [vmem:[#allocation5 + $0x8] sm:$0xff]
    %v84 = vld [vmem:[#allocation5 + $0x10] sm:$0xff]
    %v85 = vld [vmem:[#allocation5 + $0x18] sm:$0xff]
    %v86 = vld [vmem:[#allocation5 + $0x20] sm:$0xff]
    %v87 = vld [vmem:[#allocation5 + $0x28] sm:$0xff]
    %v88 = vld [vmem:[#allocation5 + $0x30] sm:$0xff]
    %v89 = vld [vmem:[#allocation5 + $0x38] sm:$0xff]
    %v90 = vld [vmem:[#allocation5 + $0x40] sm:$0xff]
    %v91 = vld [vmem:[#allocation5 + $0x48] sm:$0xff]
    %v92 = vld [vmem:[#allocation5 + $0x50] sm:$0xff]
    %v93 = vld [vmem:[#allocation5 + $0x58] sm:$0xff]
    %v94 = vld [vmem:[#allocation5 + $0x60] sm:$0xff]
    %v95 = vld [vmem:[#allocation5 + $0x68] sm:$0xff]
    %v96 = vld [vmem:[#allocation5 + $0x70] sm:$0xff]
    %v97 = vld [vmem:[#allocation5 + $0x78] sm:$0xff]
    %v98 = vld [vmem:[#allocation5 + $0x80] sm:$0xff]
    %v99 = vld [vmem:[#allocation5 + $0x88] sm:$0xff]
    %v100 = vld [vmem:[#allocation5 + $0x90] sm:$0xff]
    %v101 = vld [vmem:[#allocation5 + $0x98] sm:$0xff]
    %v102 = vld [vmem:[#allocation5 + $0xa0] sm:$0xff]
    %v103 = vld [vmem:[#allocation5 + $0xa8] sm:$0xff]
    %v104 = vld [vmem:[#allocation5 + $0xb0] sm:$0xff]
    %v105 = vld [vmem:[#allocation5 + $0xb8] sm:$0xff]
    %v106 = vld [vmem:[#allocation5 + $0xc0] sm:$0xff]
    %v107 = vld [vmem:[#allocation5 + $0xc8] sm:$0xff]
    %v108 = vld [vmem:[#allocation5 + $0xd0] sm:$0xff]
    %v109 = vld [vmem:[#allocation5 + $0xd8] sm:$0xff]
    %v110 = vld [vmem:[#allocation5 + $0xe0] sm:$0xff]
    %v111 = vld [vmem:[#allocation5 + $0xe8] sm:$0xff]
    %v112 = vld [vmem:[#allocation5 + $0xf0] sm:$0xff]
    %v113 = vld [vmem:[#allocation5 + $0xf8] sm:$0xff]
    %v114 = vld [vmem:[#allocation5 + $0x100] sm:$0xff]
    %v115 = vld [vmem:[#allocation5 + $0x108] sm:$0xff]
    %v116 = vld [vmem:[#allocation5 + $0x110] sm:$0xff]
    %v117 = vld [vmem:[#allocation5 + $0x118] sm:$0xff]
    %v118 = vld [vmem:[#allocation5 + $0x120] sm:$0xff]
    %v119 = vld [vmem:[#allocation5 + $0x128] sm:$0xff]
    %v120 = vld [vmem:[#allocation5 + $0x130] sm:$0xff]
    %v121 = vld [vmem:[#allocation5 + $0x138] sm:$0xff]
    %v122 = vld [vmem:[#allocation5 + $0x140] sm:$0xff]
    %v123 = vld [vmem:[#allocation5 + $0x148] sm:$0xff]
    %v124 = vld [vmem:[#allocation5 + $0x150] sm:$0xff]
    %v125 = vld [vmem:[#allocation5 + $0x158] sm:$0xff]
    %v126 = vld [vmem:[#allocation5 + $0x160] sm:$0xff]
    %v127 = vld [vmem:[#allocation5 + $0x168] sm:$0xff]
    %v128 = vld [vmem:[#allocation5 + $0x170] sm:$0xff]
    %v129 = vld [vmem:[#allocation5 + $0x178] sm:$0xff]
    %v130 = vld [vmem:[#allocation5 + $0x180] sm:$0xff]
    %v131 = vld [vmem:[#allocation5 + $0x188] sm:$0xff]
    %v132 = vld [vmem:[#allocation5 + $0x190] sm:$0xff]
    %v133 = vld [vmem:[#allocation5 + $0x198] sm:$0xff]
    %v134 = vld [vmem:[#allocation5 + $0x1a0] sm:$0xff]
    %v135 = vld [vmem:[#allocation5 + $0x1a8] sm:$0xff]
    %v136 = vld [vmem:[#allocation5 + $0x1b0] sm:$0xff]
    %v137 = vld [vmem:[#allocation5 + $0x1b8] sm:$0xff]
    %v138 = vld [vmem:[#allocation5 + $0x1c0] sm:$0xff]
    %v139 = vld [vmem:[#allocation5 + $0x1c8] sm:$0xff]
    %v140 = vld [vmem:[#allocation5 + $0x1d0] sm:$0xff]
    %v141 = vld [vmem:[#allocation5 + $0x1d8] sm:$0xff]
    %v142 = vld [vmem:[#allocation5 + $0x1e0] sm:$0xff]
    %v143 = vld [vmem:[#allocation5 + $0x1e8] sm:$0xff]
    %v144 = vld [vmem:[#allocation5 + $0x1f0] sm:$0xff]
    %v145 = vld [vmem:[#allocation5 + $0x1f8] sm:$0xff]
    %v148 = vunpack.c.l.b16 %v80
    %v149 = vunpack.c.h.b16 %v80
    %v150 = vunpack.c.l.b16 %v81
    %v151 = vunpack.c.h.b16 %v81
    %v152 = vpack.c.b16 %v150, %v148
    %v153 = vpack.c.b16 %v151, %v149
    %v220 = vunpack.c.l.b16 %v82
    %v221 = vunpack.c.h.b16 %v82
    %v222 = vunpack.c.l.b16 %v83
    %v223 = vunpack.c.h.b16 %v83
    %v224 = vunpack.c.l.b16 %v84
    %v225 = vunpack.c.h.b16 %v84
    %v226 = vunpack.c.l.b16 %v85
    %v227 = vunpack.c.h.b16 %v85
    %v228 = vunpack.c.l.b16 %v86
    %v229 = vunpack.c.h.b16 %v86
    %v230 = vunpack.c.l.b16 %v87
    %v231 = vunpack.c.h.b16 %v87
    %v232 = vunpack.c.l.b16 %v88
    %v233 = vunpack.c.h.b16 %v88
    %v234 = vunpack.c.l.b16 %v89
    %v235 = vunpack.c.h.b16 %v89
    %v236 = vunpack.c.l.b16 %v90
    %v237 = vunpack.c.h.b16 %v90
    %v238 = vunpack.c.l.b16 %v91
    %v239 = vunpack.c.h.b16 %v91
    %v240 = vunpack.c.l.b16 %v92
    %v241 = vunpack.c.h.b16 %v92
    %v242 = vunpack.c.l.b16 %v93
    %v243 = vunpack.c.h.b16 %v93
    %v244 = vunpack.c.l.b16 %v94
    %v245 = vunpack.c.h.b16 %v94
    %v246 = vunpack.c.l.b16 %v95
    %v247 = vunpack.c.h.b16 %v95
    %v248 = vunpack.c.l.b16 %v96
    %v249 = vunpack.c.h.b16 %v96
    %v250 = vunpack.c.l.b16 %v97
    %v251 = vunpack.c.h.b16 %v97
    %v252 = vunpack.c.l.b16 %v98
    %v253 = vunpack.c.h.b16 %v98
    %v254 = vunpack.c.l.b16 %v99
    %v255 = vunpack.c.h.b16 %v99
    %v256 = vunpack.c.l.b16 %v100
    %v257 = vunpack.c.h.b16 %v100
    %v258 = vunpack.c.l.b16 %v101
    %v259 = vunpack.c.h.b16 %v101
    %v260 = vunpack.c.l.b16 %v102
    %v261 = vunpack.c.h.b16 %v102
    %v262 = vunpack.c.l.b16 %v103
    %v263 = vunpack.c.h.b16 %v103
    %v264 = vunpack.c.l.b16 %v104
    %v265 = vunpack.c.h.b16 %v104
    %v266 = vunpack.c.l.b16 %v105
    %v267 = vunpack.c.h.b16 %v105
    %v268 = vunpack.c.l.b16 %v106
    %v269 = vunpack.c.h.b16 %v106
    %v270 = vunpack.c.l.b16 %v107
    %v271 = vunpack.c.h.b16 %v107
    %v272 = vunpack.c.l.b16 %v108
    %v273 = vunpack.c.h.b16 %v108
    %v274 = vunpack.c.l.b16 %v109
    %v275 = vunpack.c.h.b16 %v109
    %v276 = vunpack.c.l.b16 %v110
    %v277 = vunpack.c.h.b16 %v110
    %v278 = vunpack.c.l.b16 %v111
    %v279 = vunpack.c.h.b16 %v111
    %v280 = vunpack.c.l.b16 %v112
    %v281 = vunpack.c.h.b16 %v112
    %v282 = vunpack.c.l.b16 %v113
    %v283 = vunpack.c.h.b16 %v113
    %v284 = vunpack.c.l.b16 %v114
    %v285 = vunpack.c.h.b16 %v114
    %v286 = vunpack.c.l.b16 %v115
    %v287 = vunpack.c.h.b16 %v115
    %v288 = vunpack.c.l.b16 %v116
    %v289 = vunpack.c.h.b16 %v116
    %v290 = vunpack.c.l.b16 %v117
    %v291 = vunpack.c.h.b16 %v117
    %v292 = vunpack.c.l.b16 %v118
    %v293 = vunpack.c.h.b16 %v118
    %v294 = vunpack.c.l.b16 %v119
    %v295 = vunpack.c.h.b16 %v119
    %v296 = vunpack.c.l.b16 %v120
    %v297 = vunpack.c.h.b16 %v120
    %v298 = vunpack.c.l.b16 %v121
    %v299 = vunpack.c.h.b16 %v121
    %v300 = vunpack.c.l.b16 %v122
    %v301 = vunpack.c.h.b16 %v122
    %v302 = vunpack.c.l.b16 %v123
    %v303 = vunpack.c.h.b16 %v123
    %v304 = vunpack.c.l.b16 %v124
    %v305 = vunpack.c.h.b16 %v124
    %v306 = vunpack.c.l.b16 %v125
    %v307 = vunpack.c.h.b16 %v125
    %v308 = vunpack.c.l.b16 %v126
    %v309 = vunpack.c.h.b16 %v126
    %v310 = vunpack.c.l.b16 %v127
    %v311 = vunpack.c.h.b16 %v127
    %v312 = vunpack.c.l.b16 %v128
    %v313 = vunpack.c.h.b16 %v128
    %v314 = vunpack.c.l.b16 %v129
    %v315 = vunpack.c.h.b16 %v129
    %v316 = vunpack.c.l.b16 %v130
    %v317 = vunpack.c.h.b16 %v130
    %v318 = vunpack.c.l.b16 %v131
    %v319 = vunpack.c.h.b16 %v131
    %v320 = vunpack.c.l.b16 %v132
    %v321 = vunpack.c.h.b16 %v132
    %v322 = vunpack.c.l.b16 %v133
    %v323 = vunpack.c.h.b16 %v133
    %v324 = vunpack.c.l.b16 %v134
    %v325 = vunpack.c.h.b16 %v134
    %v326 = vunpack.c.l.b16 %v135
    %v327 = vunpack.c.h.b16 %v135
    %v328 = vunpack.c.l.b16 %v136
    %v329 = vunpack.c.h.b16 %v136
    %v330 = vunpack.c.l.b16 %v137
    %v331 = vunpack.c.h.b16 %v137
    %v332 = vunpack.c.l.b16 %v138
    %v333 = vunpack.c.h.b16 %v138
    %v334 = vunpack.c.l.b16 %v139
    %v335 = vunpack.c.h.b16 %v139
    %v336 = vunpack.c.l.b16 %v140
    %v337 = vunpack.c.h.b16 %v140
    %v338 = vunpack.c.l.b16 %v141
    %v339 = vunpack.c.h.b16 %v141
    %v340 = vunpack.c.l.b16 %v142
    %v341 = vunpack.c.h.b16 %v142
    %v342 = vunpack.c.l.b16 %v143
    %v343 = vunpack.c.h.b16 %v143
    %v344 = vunpack.c.l.b16 %v144
    %v345 = vunpack.c.h.b16 %v144
    %v346 = vunpack.c.l.b16 %v145
    %v347 = vunpack.c.h.b16 %v145
    %v348 = vpack.c.b16 %v224, %v220
    %v349 = vpack.c.b16 %v225, %v221
    %v350 = vpack.c.b16 %v226, %v222
    %v351 = vpack.c.b16 %v227, %v223
    %v352 = vpack.c.b16 %v232, %v228
    %v353 = vpack.c.b16 %v233, %v229
    %v354 = vpack.c.b16 %v234, %v230
    %v355 = vpack.c.b16 %v235, %v231
    %v356 = vpack.c.b16 %v240, %v236
    %v357 = vpack.c.b16 %v241, %v237
    %v358 = vpack.c.b16 %v242, %v238
    %v359 = vpack.c.b16 %v243, %v239
    %v360 = vpack.c.b16 %v248, %v244
    %v361 = vpack.c.b16 %v249, %v245
    %v362 = vpack.c.b16 %v250, %v246
    %v363 = vpack.c.b16 %v251, %v247
    %v364 = vpack.c.b16 %v256, %v252
    %v365 = vpack.c.b16 %v257, %v253
    %v366 = vpack.c.b16 %v258, %v254
    %v367 = vpack.c.b16 %v259, %v255
    %v368 = vpack.c.b16 %v264, %v260
    %v369 = vpack.c.b16 %v265, %v261
    %v370 = vpack.c.b16 %v266, %v262
    %v371 = vpack.c.b16 %v267, %v263
    %v372 = vpack.c.b16 %v272, %v268
    %v373 = vpack.c.b16 %v273, %v269
    %v374 = vpack.c.b16 %v274, %v270
    %v375 = vpack.c.b16 %v275, %v271
    %v376 = vpack.c.b16 %v280, %v276
    %v377 = vpack.c.b16 %v281, %v277
    %v378 = vpack.c.b16 %v282, %v278
    %v379 = vpack.c.b16 %v283, %v279
    %v380 = vpack.c.b16 %v288, %v284
    %v381 = vpack.c.b16 %v289, %v285
    %v382 = vpack.c.b16 %v290, %v286
    %v383 = vpack.c.b16 %v291, %v287
    %v384 = vpack.c.b16 %v296, %v292
    %v385 = vpack.c.b16 %v297, %v293
    %v386 = vpack.c.b16 %v298, %v294
    %v387 = vpack.c.b16 %v299, %v295
    %v388 = vpack.c.b16 %v304, %v300
    %v389 = vpack.c.b16 %v305, %v301
    %v390 = vpack.c.b16 %v306, %v302
    %v391 = vpack.c.b16 %v307, %v303
    %v392 = vpack.c.b16 %v312, %v308
    %v393 = vpack.c.b16 %v313, %v309
    %v394 = vpack.c.b16 %v314, %v310
    %v395 = vpack.c.b16 %v315, %v311
    %v396 = vpack.c.b16 %v320, %v316
    %v397 = vpack.c.b16 %v321, %v317
    %v398 = vpack.c.b16 %v322, %v318
    %v399 = vpack.c.b16 %v323, %v319
    %v400 = vpack.c.b16 %v328, %v324
    %v401 = vpack.c.b16 %v329, %v325
    %v402 = vpack.c.b16 %v330, %v326
    %v403 = vpack.c.b16 %v331, %v327
    %v404 = vpack.c.b16 %v336, %v332
    %v405 = vpack.c.b16 %v337, %v333
    %v406 = vpack.c.b16 %v338, %v334
    %v407 = vpack.c.b16 %v339, %v335
    %v408 = vpack.c.b16 %v344, %v340
    %v409 = vpack.c.b16 %v345, %v341
    %v410 = vpack.c.b16 %v346, %v342
    %v411 = vpack.c.b16 %v347, %v343
    %476 = vmatprep.subr.bf16.mxu0 %v377
    %477 = vmatpush1.bf16.msra.mxu0 %v376
    %478 = vmatprep.subr.bf16.mxu0 %v373
    %479 = vmatpush1.bf16.msra.mxu0 %v372
    %480 = vmatprep.subr.bf16.mxu0 %v369
    %481 = vmatpush1.bf16.msra.mxu0 %v368
    %482 = vmatprep.subr.bf16.mxu0 %v365
    %483 = vmatpush1.bf16.msra.mxu0 %v364
    %484 = vmatprep.subr.bf16.mxu0 %v361
    %485 = vmatpush1.bf16.msra.mxu0 %v360
    %486 = vmatprep.subr.bf16.mxu0 %v357
    %487 = vmatpush1.bf16.msra.mxu0 %v356
    %488 = vmatprep.subr.bf16.mxu0 %v353
    %489 = vmatpush1.bf16.msra.mxu0 %v352
    %490 = vmatprep.subr.bf16.mxu0 %v349
    %491 = vmatpush1.bf16.msra.mxu0 %v348
    %492 = vmatprep.subr.bf16.mxu0 %v409
    %493 = vmatpush2.bf16.msra.mxu0 %v408
    %494 = vmatprep.subr.bf16.mxu0 %v405
    %495 = vmatpush2.bf16.msra.mxu0 %v404
    %496 = vmatprep.subr.bf16.mxu0 %v401
    %497 = vmatpush2.bf16.msra.mxu0 %v400
    %498 = vmatprep.subr.bf16.mxu0 %v397
    %499 = vmatpush2.bf16.msra.mxu0 %v396
    %500 = vmatprep.subr.bf16.mxu0 %v393
    %501 = vmatpush2.bf16.msra.mxu0 %v392
    %502 = vmatprep.subr.bf16.mxu0 %v389
    %503 = vmatpush2.bf16.msra.mxu0 %v388
    %504 = vmatprep.subr.bf16.mxu0 %v385
    %505 = vmatpush2.bf16.msra.mxu0 %v384
    %506 = vmatprep.subr.bf16.mxu0 %v381
    %507 = vmatpush2.bf16.msra.mxu0 %v380
    %508 = vmatprep.mubr.bf16.mxu0 %v153
    %509 = vmatmul.mubr.bf16.gmra.mxu0 %v152
    %v510 = vpop.f32.mrf.mxu0
    %v511 = vadd.f32 0.0, %v510
    %v512 = vpop.f32.mrf.mxu0
    %v513 = vadd.f32 0.0, %v512
    %v514 = vpop.f32.mrf.mxu0
    %v515 = vadd.f32 0.0, %v514
    %v516 = vpop.f32.mrf.mxu0
    %v517 = vadd.f32 0.0, %v516
    %518 = vdwg.mxu0
    %519 = vmatprep.subr.bf16.mxu0 %v379
    %520 = vmatpush1.bf16.msra.mxu0 %v378
    %521 = vmatprep.subr.bf16.mxu0 %v375
    %522 = vmatpush1.bf16.msra.mxu0 %v374
    %523 = vmatprep.subr.bf16.mxu0 %v371
    %524 = vmatpush1.bf16.msra.mxu0 %v370
    %525 = vmatprep.subr.bf16.mxu0 %v367
    %526 = vmatpush1.bf16.msra.mxu0 %v366
    %527 = vmatprep.subr.bf16.mxu0 %v363
    %528 = vmatpush1.bf16.msra.mxu0 %v362
    %529 = vmatprep.subr.bf16.mxu0 %v359
    %530 = vmatpush1.bf16.msra.mxu0 %v358
    %531 = vmatprep.subr.bf16.mxu0 %v355
    %532 = vmatpush1.bf16.msra.mxu0 %v354
    %533 = vmatprep.subr.bf16.mxu0 %v351
    %534 = vmatpush1.bf16.msra.mxu0 %v350
    %535 = vmatprep.subr.bf16.mxu0 %v411
    %536 = vmatpush2.bf16.msra.mxu0 %v410
    %537 = vmatprep.subr.bf16.mxu0 %v407
    %538 = vmatpush2.bf16.msra.mxu0 %v406
    %539 = vmatprep.subr.bf16.mxu0 %v403
    %540 = vmatpush2.bf16.msra.mxu0 %v402
    %541 = vmatprep.subr.bf16.mxu0 %v399
    %542 = vmatpush2.bf16.msra.mxu0 %v398
    %543 = vmatprep.subr.bf16.mxu0 %v395
    %544 = vmatpush2.bf16.msra.mxu0 %v394
    %545 = vmatprep.subr.bf16.mxu0 %v391
    %546 = vmatpush2.bf16.msra.mxu0 %v390
    %547 = vmatprep.subr.bf16.mxu0 %v387
    %548 = vmatpush2.bf16.msra.mxu0 %v386
    %549 = vmatprep.subr.bf16.mxu0 %v383
    %550 = vmatpush2.bf16.msra.mxu0 %v382
    %551 = vmatprep.mubr.bf16.mxu0 %v153
    %552 = vmatmul.mubr.bf16.gmra.mxu0 %v152
    %v553 = vpop.f32.mrf.mxu0
    %v554 = vadd.f32 0.0, %v553
    %v555 = vpop.f32.mrf.mxu0
    %v556 = vadd.f32 0.0, %v555
    %v557 = vpop.f32.mrf.mxu0
    %v558 = vadd.f32 0.0, %v557
    %v559 = vpop.f32.mrf.mxu0
    %v560 = vadd.f32 0.0, %v559
    %561 = vdwg.mxu0
    %v562 = vpack.c.bf16 %v515, %v511
    %v563 = vpack.c.bf16 %v517, %v513
    %v564 = vpack.c.bf16 %v558, %v554
    %v565 = vpack.c.bf16 %v560, %v556
    %v566 = vld [vmem:[#allocation7] sm:$0xff]
    %v567 = vld [vmem:[#allocation7 + $0x8] sm:$0xff]
    %v568 = vld [vmem:[#allocation7 + $0x10] sm:$0xff]
    %v569 = vld [vmem:[#allocation7 + $0x18] sm:$0xff]
    %v570 = vld [vmem:[#allocation7 + $0x20] sm:$0xff]
    %v571 = vld [vmem:[#allocation7 + $0x28] sm:$0xff]
    %v572 = vld [vmem:[#allocation7 + $0x30] sm:$0xff]
    %v573 = vld [vmem:[#allocation7 + $0x38] sm:$0xff]
    %v574 = vld [vmem:[#allocation7 + $0x40] sm:$0xff]
    %v575 = vld [vmem:[#allocation7 + $0x48] sm:$0xff]
    %v576 = vld [vmem:[#allocation7 + $0x50] sm:$0xff]
    %v577 = vld [vmem:[#allocation7 + $0x58] sm:$0xff]
    %v578 = vld [vmem:[#allocation7 + $0x60] sm:$0xff]
    %v579 = vld [vmem:[#allocation7 + $0x68] sm:$0xff]
    %v580 = vld [vmem:[#allocation7 + $0x70] sm:$0xff]
    %v581 = vld [vmem:[#allocation7 + $0x78] sm:$0xff]
    %v582 = vld [vmem:[#allocation7 + $0x80] sm:$0xff]
    %v583 = vld [vmem:[#allocation7 + $0x88] sm:$0xff]
    %v584 = vld [vmem:[#allocation7 + $0x90] sm:$0xff]
    %v585 = vld [vmem:[#allocation7 + $0x98] sm:$0xff]
    %v586 = vld [vmem:[#allocation7 + $0xa0] sm:$0xff]
    %v587 = vld [vmem:[#allocation7 + $0xa8] sm:$0xff]
    %v588 = vld [vmem:[#allocation7 + $0xb0] sm:$0xff]
    %v589 = vld [vmem:[#allocation7 + $0xb8] sm:$0xff]
    %v590 = vld [vmem:[#allocation7 + $0xc0] sm:$0xff]
    %v591 = vld [vmem:[#allocation7 + $0xc8] sm:$0xff]
    %v592 = vld [vmem:[#allocation7 + $0xd0] sm:$0xff]
    %v593 = vld [vmem:[#allocation7 + $0xd8] sm:$0xff]
    %v594 = vld [vmem:[#allocation7 + $0xe0] sm:$0xff]
    %v595 = vld [vmem:[#allocation7 + $0xe8] sm:$0xff]
    %v596 = vld [vmem:[#allocation7 + $0xf0] sm:$0xff]
    %v597 = vld [vmem:[#allocation7 + $0xf8] sm:$0xff]
    %v598 = vld [vmem:[#allocation7 + $0x100] sm:$0xff]
    %v599 = vld [vmem:[#allocation7 + $0x108] sm:$0xff]
    %v600 = vld [vmem:[#allocation7 + $0x110] sm:$0xff]
    %v601 = vld [vmem:[#allocation7 + $0x118] sm:$0xff]
    %v602 = vld [vmem:[#allocation7 + $0x120] sm:$0xff]
    %v603 = vld [vmem:[#allocation7 + $0x128] sm:$0xff]
    %v604 = vld [vmem:[#allocation7 + $0x130] sm:$0xff]
    %v605 = vld [vmem:[#allocation7 + $0x138] sm:$0xff]
    %v606 = vld [vmem:[#allocation7 + $0x140] sm:$0xff]
    %v607 = vld [vmem:[#allocation7 + $0x148] sm:$0xff]
    %v608 = vld [vmem:[#allocation7 + $0x150] sm:$0xff]
    %v609 = vld [vmem:[#allocation7 + $0x158] sm:$0xff]
    %v610 = vld [vmem:[#allocation7 + $0x160] sm:$0xff]
    %v611 = vld [vmem:[#allocation7 + $0x168] sm:$0xff]
    %v612 = vld [vmem:[#allocation7 + $0x170] sm:$0xff]
    %v613 = vld [vmem:[#allocation7 + $0x178] sm:$0xff]
    %v614 = vld [vmem:[#allocation7 + $0x180] sm:$0xff]
    %v615 = vld [vmem:[#allocation7 + $0x188] sm:$0xff]
    %v616 = vld [vmem:[#allocation7 + $0x190] sm:$0xff]
    %v617 = vld [vmem:[#allocation7 + $0x198] sm:$0xff]
    %v618 = vld [vmem:[#allocation7 + $0x1a0] sm:$0xff]
    %v619 = vld [vmem:[#allocation7 + $0x1a8] sm:$0xff]
    %v620 = vld [vmem:[#allocation7 + $0x1b0] sm:$0xff]
    %v621 = vld [vmem:[#allocation7 + $0x1b8] sm:$0xff]
    %v622 = vld [vmem:[#allocation7 + $0x1c0] sm:$0xff]
    %v623 = vld [vmem:[#allocation7 + $0x1c8] sm:$0xff]
    %v624 = vld [vmem:[#allocation7 + $0x1d0] sm:$0xff]
    %v625 = vld [vmem:[#allocation7 + $0x1d8] sm:$0xff]
    %v626 = vld [vmem:[#allocation7 + $0x1e0] sm:$0xff]
    %v627 = vld [vmem:[#allocation7 + $0x1e8] sm:$0xff]
    %v628 = vld [vmem:[#allocation7 + $0x1f0] sm:$0xff]
    %v629 = vld [vmem:[#allocation7 + $0x1f8] sm:$0xff]
    %v630 = vld [vmem:[#allocation7 + $0x200] sm:$0xff]
    %v631 = vld [vmem:[#allocation7 + $0x208] sm:$0xff]
    %v632 = vld [vmem:[#allocation7 + $0x210] sm:$0xff]
    %v633 = vld [vmem:[#allocation7 + $0x218] sm:$0xff]
    %v634 = vld [vmem:[#allocation7 + $0x220] sm:$0xff]
    %v635 = vld [vmem:[#allocation7 + $0x228] sm:$0xff]
    %v636 = vld [vmem:[#allocation7 + $0x230] sm:$0xff]
    %v637 = vld [vmem:[#allocation7 + $0x238] sm:$0xff]
    %v638 = vld [vmem:[#allocation7 + $0x240] sm:$0xff]
    %v639 = vld [vmem:[#allocation7 + $0x248] sm:$0xff]
    %v640 = vld [vmem:[#allocation7 + $0x250] sm:$0xff]
    %v641 = vld [vmem:[#allocation7 + $0x258] sm:$0xff]
    %v642 = vld [vmem:[#allocation7 + $0x260] sm:$0xff]
    %v643 = vld [vmem:[#allocation7 + $0x268] sm:$0xff]
    %v644 = vld [vmem:[#allocation7 + $0x270] sm:$0xff]
    %v645 = vld [vmem:[#allocation7 + $0x278] sm:$0xff]
    %v646 = vld [vmem:[#allocation7 + $0x280] sm:$0xff]
    %v647 = vld [vmem:[#allocation7 + $0x288] sm:$0xff]
    %v648 = vld [vmem:[#allocation7 + $0x290] sm:$0xff]
    %v649 = vld [vmem:[#allocation7 + $0x298] sm:$0xff]
    %v650 = vld [vmem:[#allocation7 + $0x2a0] sm:$0xff]
    %v651 = vld [vmem:[#allocation7 + $0x2a8] sm:$0xff]
    %v652 = vld [vmem:[#allocation7 + $0x2b0] sm:$0xff]
    %v653 = vld [vmem:[#allocation7 + $0x2b8] sm:$0xff]
    %v654 = vld [vmem:[#allocation7 + $0x2c0] sm:$0xff]
    %v655 = vld [vmem:[#allocation7 + $0x2c8] sm:$0xff]
    %v656 = vld [vmem:[#allocation7 + $0x2d0] sm:$0xff]
    %v657 = vld [vmem:[#allocation7 + $0x2d8] sm:$0xff]
    %v658 = vld [vmem:[#allocation7 + $0x2e0] sm:$0xff]
    %v659 = vld [vmem:[#allocation7 + $0x2e8] sm:$0xff]
    %v660 = vld [vmem:[#allocation7 + $0x2f0] sm:$0xff]
    %v661 = vld [vmem:[#allocation7 + $0x2f8] sm:$0xff]
    %v662 = vld [vmem:[#allocation7 + $0x300] sm:$0xff]
    %v663 = vld [vmem:[#allocation7 + $0x308] sm:$0xff]
    %v664 = vld [vmem:[#allocation7 + $0x310] sm:$0xff]
    %v665 = vld [vmem:[#allocation7 + $0x318] sm:$0xff]
    %v666 = vld [vmem:[#allocation7 + $0x320] sm:$0xff]
    %v667 = vld [vmem:[#allocation7 + $0x328] sm:$0xff]
    %v668 = vld [vmem:[#allocation7 + $0x330] sm:$0xff]
    %v669 = vld [vmem:[#allocation7 + $0x338] sm:$0xff]
    %v670 = vld [vmem:[#allocation7 + $0x340] sm:$0xff]
    %v671 = vld [vmem:[#allocation7 + $0x348] sm:$0xff]
    %v672 = vld [vmem:[#allocation7 + $0x350] sm:$0xff]
    %v673 = vld [vmem:[#allocation7 + $0x358] sm:$0xff]
    %v674 = vld [vmem:[#allocation7 + $0x360] sm:$0xff]
    %v675 = vld [vmem:[#allocation7 + $0x368] sm:$0xff]
    %v676 = vld [vmem:[#allocation7 + $0x370] sm:$0xff]
    %v677 = vld [vmem:[#allocation7 + $0x378] sm:$0xff]
    %v678 = vld [vmem:[#allocation7 + $0x380] sm:$0xff]
    %v679 = vld [vmem:[#allocation7 + $0x388] sm:$0xff]
    %v680 = vld [vmem:[#allocation7 + $0x390] sm:$0xff]
    %v681 = vld [vmem:[#allocation7 + $0x398] sm:$0xff]
    %v682 = vld [vmem:[#allocation7 + $0x3a0] sm:$0xff]
    %v683 = vld [vmem:[#allocation7 + $0x3a8] sm:$0xff]
    %v684 = vld [vmem:[#allocation7 + $0x3b0] sm:$0xff]
    %v685 = vld [vmem:[#allocation7 + $0x3b8] sm:$0xff]
    %v686 = vld [vmem:[#allocation7 + $0x3c0] sm:$0xff]
    %v687 = vld [vmem:[#allocation7 + $0x3c8] sm:$0xff]
    %v688 = vld [vmem:[#allocation7 + $0x3d0] sm:$0xff]
    %v689 = vld [vmem:[#allocation7 + $0x3d8] sm:$0xff]
    %v690 = vld [vmem:[#allocation7 + $0x3e0] sm:$0xff]
    %v691 = vld [vmem:[#allocation7 + $0x3e8] sm:$0xff]
    %v692 = vld [vmem:[#allocation7 + $0x3f0] sm:$0xff]
    %v693 = vld [vmem:[#allocation7 + $0x3f8] sm:$0xff]
    %v694 = vld [vmem:[%s3] sm:$0xf]
    %v696 = vlaneseq
    %v697 = vshrl.u32 %v696, 7
    %v698 = vsub.s32 0, %v697
    %v699 = vrot.slane %v694, %v698
    %v700 = vlaneseq
    %v701 = vshrl.u32 %v700, 7
    %v702 = vsub.s32 1, %v701
    %v703 = vrot.slane %v694, %v702
    %v704 = vlaneseq
    %v705 = vshrl.u32 %v704, 7
    %v706 = vsub.s32 2, %v705
    %v707 = vrot.slane %v694, %v706
    %v708 = vlaneseq
    %v709 = vshrl.u32 %v708, 7
    %v710 = vsub.s32 3, %v709
    %v711 = vrot.slane %v694, %v710
    %v844 = vunpack.c.l.b16 %v566
    %v845 = vunpack.c.h.b16 %v566
    %v846 = vunpack.c.l.b16 %v567
    %v847 = vunpack.c.h.b16 %v567
    %v848 = vunpack.c.l.b16 %v568
    %v849 = vunpack.c.h.b16 %v568
    %v850 = vunpack.c.l.b16 %v569
    %v851 = vunpack.c.h.b16 %v569
    %v852 = vunpack.c.l.b16 %v570
    %v853 = vunpack.c.h.b16 %v570
    %v854 = vunpack.c.l.b16 %v571
    %v855 = vunpack.c.h.b16 %v571
    %v856 = vunpack.c.l.b16 %v572
    %v857 = vunpack.c.h.b16 %v572
    %v858 = vunpack.c.l.b16 %v573
    %v859 = vunpack.c.h.b16 %v573
    %v860 = vunpack.c.l.b16 %v574
    %v861 = vunpack.c.h.b16 %v574
    %v862 = vunpack.c.l.b16 %v575
    %v863 = vunpack.c.h.b16 %v575
    %v864 = vunpack.c.l.b16 %v576
    %v865 = vunpack.c.h.b16 %v576
    %v866 = vunpack.c.l.b16 %v577
    %v867 = vunpack.c.h.b16 %v577
    %v868 = vunpack.c.l.b16 %v578
    %v869 = vunpack.c.h.b16 %v578
    %v870 = vunpack.c.l.b16 %v579
    %v871 = vunpack.c.h.b16 %v579
    %v872 = vunpack.c.l.b16 %v580
    %v873 = vunpack.c.h.b16 %v580
    %v874 = vunpack.c.l.b16 %v581
    %v875 = vunpack.c.h.b16 %v581
    %v876 = vunpack.c.l.b16 %v582
    %v877 = vunpack.c.h.b16 %v582
    %v878 = vunpack.c.l.b16 %v583
    %v879 = vunpack.c.h.b16 %v583
    %v880 = vunpack.c.l.b16 %v584
    %v881 = vunpack.c.h.b16 %v584
    %v882 = vunpack.c.l.b16 %v585
    %v883 = vunpack.c.h.b16 %v585
    %v884 = vunpack.c.l.b16 %v586
    %v885 = vunpack.c.h.b16 %v586
    %v886 = vunpack.c.l.b16 %v587
    %v887 = vunpack.c.h.b16 %v587
    %v888 = vunpack.c.l.b16 %v588
    %v889 = vunpack.c.h.b16 %v588
    %v890 = vunpack.c.l.b16 %v589
    %v891 = vunpack.c.h.b16 %v589
    %v892 = vunpack.c.l.b16 %v590
    %v893 = vunpack.c.h.b16 %v590
    %v894 = vunpack.c.l.b16 %v591
    %v895 = vunpack.c.h.b16 %v591
    %v896 = vunpack.c.l.b16 %v592
    %v897 = vunpack.c.h.b16 %v592
    %v898 = vunpack.c.l.b16 %v593
    %v899 = vunpack.c.h.b16 %v593
    %v900 = vunpack.c.l.b16 %v594
    %v901 = vunpack.c.h.b16 %v594
    %v902 = vunpack.c.l.b16 %v595
    %v903 = vunpack.c.h.b16 %v595
    %v904 = vunpack.c.l.b16 %v596
    %v905 = vunpack.c.h.b16 %v596
    %v906 = vunpack.c.l.b16 %v597
    %v907 = vunpack.c.h.b16 %v597
    %v908 = vunpack.c.l.b16 %v598
    %v909 = vunpack.c.h.b16 %v598
    %v910 = vunpack.c.l.b16 %v599
    %v911 = vunpack.c.h.b16 %v599
    %v912 = vunpack.c.l.b16 %v600
    %v913 = vunpack.c.h.b16 %v600
    %v914 = vunpack.c.l.b16 %v601
    %v915 = vunpack.c.h.b16 %v601
    %v916 = vunpack.c.l.b16 %v602
    %v917 = vunpack.c.h.b16 %v602
    %v918 = vunpack.c.l.b16 %v603
    %v919 = vunpack.c.h.b16 %v603
    %v920 = vunpack.c.l.b16 %v604
    %v921 = vunpack.c.h.b16 %v604
    %v922 = vunpack.c.l.b16 %v605
    %v923 = vunpack.c.h.b16 %v605
    %v924 = vunpack.c.l.b16 %v606
    %v925 = vunpack.c.h.b16 %v606
    %v926 = vunpack.c.l.b16 %v607
    %v927 = vunpack.c.h.b16 %v607
    %v928 = vunpack.c.l.b16 %v608
    %v929 = vunpack.c.h.b16 %v608
    %v930 = vunpack.c.l.b16 %v609
    %v931 = vunpack.c.h.b16 %v609
    %v932 = vunpack.c.l.b16 %v610
    %v933 = vunpack.c.h.b16 %v610
    %v934 = vunpack.c.l.b16 %v611
    %v935 = vunpack.c.h.b16 %v611
    %v936 = vunpack.c.l.b16 %v612
    %v937 = vunpack.c.h.b16 %v612
    %v938 = vunpack.c.l.b16 %v613
    %v939 = vunpack.c.h.b16 %v613
    %v940 = vunpack.c.l.b16 %v614
    %v941 = vunpack.c.h.b16 %v614
    %v942 = vunpack.c.l.b16 %v615
    %v943 = vunpack.c.h.b16 %v615
    %v944 = vunpack.c.l.b16 %v616
    %v945 = vunpack.c.h.b16 %v616
    %v946 = vunpack.c.l.b16 %v617
    %v947 = vunpack.c.h.b16 %v617
    %v948 = vunpack.c.l.b16 %v618
    %v949 = vunpack.c.h.b16 %v618
    %v950 = vunpack.c.l.b16 %v619
    %v951 = vunpack.c.h.b16 %v619
    %v952 = vunpack.c.l.b16 %v620
    %v953 = vunpack.c.h.b16 %v620
    %v954 = vunpack.c.l.b16 %v621
    %v955 = vunpack.c.h.b16 %v621
    %v956 = vunpack.c.l.b16 %v622
    %v957 = vunpack.c.h.b16 %v622
    %v958 = vunpack.c.l.b16 %v623
    %v959 = vunpack.c.h.b16 %v623
    %v960 = vunpack.c.l.b16 %v624
    %v961 = vunpack.c.h.b16 %v624
    %v962 = vunpack.c.l.b16 %v625
    %v963 = vunpack.c.h.b16 %v625
    %v964 = vunpack.c.l.b16 %v626
    %v965 = vunpack.c.h.b16 %v626
    %v966 = vunpack.c.l.b16 %v627
    %v967 = vunpack.c.h.b16 %v627
    %v968 = vunpack.c.l.b16 %v628
    %v969 = vunpack.c.h.b16 %v628
    %v970 = vunpack.c.l.b16 %v629
    %v971 = vunpack.c.h.b16 %v629
    %v972 = vunpack.c.l.b16 %v630
    %v973 = vunpack.c.h.b16 %v630
    %v974 = vunpack.c.l.b16 %v631
    %v975 = vunpack.c.h.b16 %v631
    %v976 = vunpack.c.l.b16 %v632
    %v977 = vunpack.c.h.b16 %v632
    %v978 = vunpack.c.l.b16 %v633
    %v979 = vunpack.c.h.b16 %v633
    %v980 = vunpack.c.l.b16 %v634
    %v981 = vunpack.c.h.b16 %v634
    %v982 = vunpack.c.l.b16 %v635
    %v983 = vunpack.c.h.b16 %v635
    %v984 = vunpack.c.l.b16 %v636
    %v985 = vunpack.c.h.b16 %v636
    %v986 = vunpack.c.l.b16 %v637
    %v987 = vunpack.c.h.b16 %v637
    %v988 = vunpack.c.l.b16 %v638
    %v989 = vunpack.c.h.b16 %v638
    %v990 = vunpack.c.l.b16 %v639
    %v991 = vunpack.c.h.b16 %v639
    %v992 = vunpack.c.l.b16 %v640
    %v993 = vunpack.c.h.b16 %v640
    %v994 = vunpack.c.l.b16 %v641
    %v995 = vunpack.c.h.b16 %v641
    %v996 = vunpack.c.l.b16 %v642
    %v997 = vunpack.c.h.b16 %v642
    %v998 = vunpack.c.l.b16 %v643
    %v999 = vunpack.c.h.b16 %v643
    %v1000 = vunpack.c.l.b16 %v644
    %v1001 = vunpack.c.h.b16 %v644
    %v1002 = vunpack.c.l.b16 %v645
    %v1003 = vunpack.c.h.b16 %v645
    %v1004 = vunpack.c.l.b16 %v646
    %v1005 = vunpack.c.h.b16 %v646
    %v1006 = vunpack.c.l.b16 %v647
    %v1007 = vunpack.c.h.b16 %v647
    %v1008 = vunpack.c.l.b16 %v648
    %v1009 = vunpack.c.h.b16 %v648
    %v1010 = vunpack.c.l.b16 %v649
    %v1011 = vunpack.c.h.b16 %v649
    %v1012 = vunpack.c.l.b16 %v650
    %v1013 = vunpack.c.h.b16 %v650
    %v1014 = vunpack.c.l.b16 %v651
    %v1015 = vunpack.c.h.b16 %v651
    %v1016 = vunpack.c.l.b16 %v652
    %v1017 = vunpack.c.h.b16 %v652
    %v1018 = vunpack.c.l.b16 %v653
    %v1019 = vunpack.c.h.b16 %v653
    %v1020 = vunpack.c.l.b16 %v654
    %v1021 = vunpack.c.h.b16 %v654
    %v1022 = vunpack.c.l.b16 %v655
    %v1023 = vunpack.c.h.b16 %v655
    %v1024 = vunpack.c.l.b16 %v656
    %v1025 = vunpack.c.h.b16 %v656
    %v1026 = vunpack.c.l.b16 %v657
    %v1027 = vunpack.c.h.b16 %v657
    %v1028 = vunpack.c.l.b16 %v658
    %v1029 = vunpack.c.h.b16 %v658
    %v1030 = vunpack.c.l.b16 %v659
    %v1031 = vunpack.c.h.b16 %v659
    %v1032 = vunpack.c.l.b16 %v660
    %v1033 = vunpack.c.h.b16 %v660
    %v1034 = vunpack.c.l.b16 %v661
    %v1035 = vunpack.c.h.b16 %v661
    %v1036 = vunpack.c.l.b16 %v662
    %v1037 = vunpack.c.h.b16 %v662
    %v1038 = vunpack.c.l.b16 %v663
    %v1039 = vunpack.c.h.b16 %v663
    %v1040 = vunpack.c.l.b16 %v664
    %v1041 = vunpack.c.h.b16 %v664
    %v1042 = vunpack.c.l.b16 %v665
    %v1043 = vunpack.c.h.b16 %v665
    %v1044 = vunpack.c.l.b16 %v666
    %v1045 = vunpack.c.h.b16 %v666
    %v1046 = vunpack.c.l.b16 %v667
    %v1047 = vunpack.c.h.b16 %v667
    %v1048 = vunpack.c.l.b16 %v668
    %v1049 = vunpack.c.h.b16 %v668
    %v1050 = vunpack.c.l.b16 %v669
    %v1051 = vunpack.c.h.b16 %v669
    %v1052 = vunpack.c.l.b16 %v670
    %v1053 = vunpack.c.h.b16 %v670
    %v1054 = vunpack.c.l.b16 %v671
    %v1055 = vunpack.c.h.b16 %v671
    %v1056 = vunpack.c.l.b16 %v672
    %v1057 = vunpack.c.h.b16 %v672
    %v1058 = vunpack.c.l.b16 %v673
    %v1059 = vunpack.c.h.b16 %v673
    %v1060 = vunpack.c.l.b16 %v674
    %v1061 = vunpack.c.h.b16 %v674
    %v1062 = vunpack.c.l.b16 %v675
    %v1063 = vunpack.c.h.b16 %v675
    %v1064 = vunpack.c.l.b16 %v676
    %v1065 = vunpack.c.h.b16 %v676
    %v1066 = vunpack.c.l.b16 %v677
    %v1067 = vunpack.c.h.b16 %v677
    %v1068 = vunpack.c.l.b16 %v678
    %v1069 = vunpack.c.h.b16 %v678
    %v1070 = vunpack.c.l.b16 %v679
    %v1071 = vunpack.c.h.b16 %v679
    %v1072 = vunpack.c.l.b16 %v680
    %v1073 = vunpack.c.h.b16 %v680
    %v1074 = vunpack.c.l.b16 %v681
    %v1075 = vunpack.c.h.b16 %v681
    %v1076 = vunpack.c.l.b16 %v682
    %v1077 = vunpack.c.h.b16 %v682
    %v1078 = vunpack.c.l.b16 %v683
    %v1079 = vunpack.c.h.b16 %v683
    %v1080 = vunpack.c.l.b16 %v684
    %v1081 = vunpack.c.h.b16 %v684
    %v1082 = vunpack.c.l.b16 %v685
    %v1083 = vunpack.c.h.b16 %v685
    %v1084 = vunpack.c.l.b16 %v686
    %v1085 = vunpack.c.h.b16 %v686
    %v1086 = vunpack.c.l.b16 %v687
    %v1087 = vunpack.c.h.b16 %v687
    %v1088 = vunpack.c.l.b16 %v688
    %v1089 = vunpack.c.h.b16 %v688
    %v1090 = vunpack.c.l.b16 %v689
    %v1091 = vunpack.c.h.b16 %v689
    %v1092 = vunpack.c.l.b16 %v690
    %v1093 = vunpack.c.h.b16 %v690
    %v1094 = vunpack.c.l.b16 %v691
    %v1095 = vunpack.c.h.b16 %v691
    %v1096 = vunpack.c.l.b16 %v692
    %v1097 = vunpack.c.h.b16 %v692
    %v1098 = vunpack.c.l.b16 %v693
    %v1099 = vunpack.c.h.b16 %v693
    %v1100 = vpack.c.b16 %v848, %v844
    %v1101 = vpack.c.b16 %v849, %v845
    %v1102 = vpack.c.b16 %v850, %v846
    %v1103 = vpack.c.b16 %v851, %v847
    %v1104 = vpack.c.b16 %v856, %v852
    %v1105 = vpack.c.b16 %v857, %v853
    %v1106 = vpack.c.b16 %v858, %v854
    %v1107 = vpack.c.b16 %v859, %v855
    %v1108 = vpack.c.b16 %v864, %v860
    %v1109 = vpack.c.b16 %v865, %v861
    %v1110 = vpack.c.b16 %v866, %v862
    %v1111 = vpack.c.b16 %v867, %v863
    %v1112 = vpack.c.b16 %v872, %v868
    %v1113 = vpack.c.b16 %v873, %v869
    %v1114 = vpack.c.b16 %v874, %v870
    %v1115 = vpack.c.b16 %v875, %v871
    %v1116 = vpack.c.b16 %v880, %v876
    %v1117 = vpack.c.b16 %v881, %v877
    %v1118 = vpack.c.b16 %v882, %v878
    %v1119 = vpack.c.b16 %v883, %v879
    %v1120 = vpack.c.b16 %v888, %v884
    %v1121 = vpack.c.b16 %v889, %v885
    %v1122 = vpack.c.b16 %v890, %v886
    %v1123 = vpack.c.b16 %v891, %v887
    %v1124 = vpack.c.b16 %v896, %v892
    %v1125 = vpack.c.b16 %v897, %v893
    %v1126 = vpack.c.b16 %v898, %v894
    %v1127 = vpack.c.b16 %v899, %v895
    %v1128 = vpack.c.b16 %v904, %v900
    %v1129 = vpack.c.b16 %v905, %v901
    %v1130 = vpack.c.b16 %v906, %v902
    %v1131 = vpack.c.b16 %v907, %v903
    %v1132 = vpack.c.b16 %v912, %v908
    %v1133 = vpack.c.b16 %v913, %v909
    %v1134 = vpack.c.b16 %v914, %v910
    %v1135 = vpack.c.b16 %v915, %v911
    %v1136 = vpack.c.b16 %v920, %v916
    %v1137 = vpack.c.b16 %v921, %v917
    %v1138 = vpack.c.b16 %v922, %v918
    %v1139 = vpack.c.b16 %v923, %v919
    %v1140 = vpack.c.b16 %v928, %v924
    %v1141 = vpack.c.b16 %v929, %v925
    %v1142 = vpack.c.b16 %v930, %v926
    %v1143 = vpack.c.b16 %v931, %v927
    %v1144 = vpack.c.b16 %v936, %v932
    %v1145 = vpack.c.b16 %v937, %v933
    %v1146 = vpack.c.b16 %v938, %v934
    %v1147 = vpack.c.b16 %v939, %v935
    %v1148 = vpack.c.b16 %v944, %v940
    %v1149 = vpack.c.b16 %v945, %v941
    %v1150 = vpack.c.b16 %v946, %v942
    %v1151 = vpack.c.b16 %v947, %v943
    %v1152 = vpack.c.b16 %v952, %v948
    %v1153 = vpack.c.b16 %v953, %v949
    %v1154 = vpack.c.b16 %v954, %v950
    %v1155 = vpack.c.b16 %v955, %v951
    %v1156 = vpack.c.b16 %v960, %v956
    %v1157 = vpack.c.b16 %v961, %v957
    %v1158 = vpack.c.b16 %v962, %v958
    %v1159 = vpack.c.b16 %v963, %v959
    %v1160 = vpack.c.b16 %v968, %v964
    %v1161 = vpack.c.b16 %v969, %v965
    %v1162 = vpack.c.b16 %v970, %v966
    %v1163 = vpack.c.b16 %v971, %v967
    %v1164 = vpack.c.b16 %v976, %v972
    %v1165 = vpack.c.b16 %v977, %v973
    %v1166 = vpack.c.b16 %v978, %v974
    %v1167 = vpack.c.b16 %v979, %v975
    %v1168 = vpack.c.b16 %v984, %v980
    %v1169 = vpack.c.b16 %v985, %v981
    %v1170 = vpack.c.b16 %v986, %v982
    %v1171 = vpack.c.b16 %v987, %v983
    %v1172 = vpack.c.b16 %v992, %v988
    %v1173 = vpack.c.b16 %v993, %v989
    %v1174 = vpack.c.b16 %v994, %v990
    %v1175 = vpack.c.b16 %v995, %v991
    %v1176 = vpack.c.b16 %v1000, %v996
    %v1177 = vpack.c.b16 %v1001, %v997
    %v1178 = vpack.c.b16 %v1002, %v998
    %v1179 = vpack.c.b16 %v1003, %v999
    %v1180 = vpack.c.b16 %v1008, %v1004
    %v1181 = vpack.c.b16 %v1009, %v1005
    %v1182 = vpack.c.b16 %v1010, %v1006
    %v1183 = vpack.c.b16 %v1011, %v1007
    %v1184 = vpack.c.b16 %v1016, %v1012
    %v1185 = vpack.c.b16 %v1017, %v1013
    %v1186 = vpack.c.b16 %v1018, %v1014
    %v1187 = vpack.c.b16 %v1019, %v1015
    %v1188 = vpack.c.b16 %v1024, %v1020
    %v1189 = vpack.c.b16 %v1025, %v1021
    %v1190 = vpack.c.b16 %v1026, %v1022
    %v1191 = vpack.c.b16 %v1027, %v1023
    %v1192 = vpack.c.b16 %v1032, %v1028
    %v1193 = vpack.c.b16 %v1033, %v1029
    %v1194 = vpack.c.b16 %v1034, %v1030
    %v1195 = vpack.c.b16 %v1035, %v1031
    %v1196 = vpack.c.b16 %v1040, %v1036
    %v1197 = vpack.c.b16 %v1041, %v1037
    %v1198 = vpack.c.b16 %v1042, %v1038
    %v1199 = vpack.c.b16 %v1043, %v1039
    %v1200 = vpack.c.b16 %v1048, %v1044
    %v1201 = vpack.c.b16 %v1049, %v1045
    %v1202 = vpack.c.b16 %v1050, %v1046
    %v1203 = vpack.c.b16 %v1051, %v1047
    %v1204 = vpack.c.b16 %v1056, %v1052
    %v1205 = vpack.c.b16 %v1057, %v1053
    %v1206 = vpack.c.b16 %v1058, %v1054
    %v1207 = vpack.c.b16 %v1059, %v1055
    %v1208 = vpack.c.b16 %v1064, %v1060
    %v1209 = vpack.c.b16 %v1065, %v1061
    %v1210 = vpack.c.b16 %v1066, %v1062
    %v1211 = vpack.c.b16 %v1067, %v1063
    %v1212 = vpack.c.b16 %v1072, %v1068
    %v1213 = vpack.c.b16 %v1073, %v1069
    %v1214 = vpack.c.b16 %v1074, %v1070
    %v1215 = vpack.c.b16 %v1075, %v1071
    %v1216 = vpack.c.b16 %v1080, %v1076
    %v1217 = vpack.c.b16 %v1081, %v1077
    %v1218 = vpack.c.b16 %v1082, %v1078
    %v1219 = vpack.c.b16 %v1083, %v1079
    %v1220 = vpack.c.b16 %v1088, %v1084
    %v1221 = vpack.c.b16 %v1089, %v1085
    %v1222 = vpack.c.b16 %v1090, %v1086
    %v1223 = vpack.c.b16 %v1091, %v1087
    %v1224 = vpack.c.b16 %v1096, %v1092
    %v1225 = vpack.c.b16 %v1097, %v1093
    %v1226 = vpack.c.b16 %v1098, %v1094
    %v1227 = vpack.c.b16 %v1099, %v1095
    %1356 = vmatprep.subr.bf16.mxu0 %v1129
    %1357 = vmatpush1.bf16.msra.mxu0 %v1128
    %1358 = vmatprep.subr.bf16.mxu0 %v1125
    %1359 = vmatpush1.bf16.msra.mxu0 %v1124
    %1360 = vmatprep.subr.bf16.mxu0 %v1121
    %1361 = vmatpush1.bf16.msra.mxu0 %v1120
    %1362 = vmatprep.subr.bf16.mxu0 %v1117
    %1363 = vmatpush1.bf16.msra.mxu0 %v1116
    %1364 = vmatprep.subr.bf16.mxu0 %v1113
    %1365 = vmatpush1.bf16.msra.mxu0 %v1112
    %1366 = vmatprep.subr.bf16.mxu0 %v1109
    %1367 = vmatpush1.bf16.msra.mxu0 %v1108
    %1368 = vmatprep.subr.bf16.mxu0 %v1105
    %1369 = vmatpush1.bf16.msra.mxu0 %v1104
    %1370 = vmatprep.subr.bf16.mxu0 %v1101
    %1371 = vmatpush1.bf16.msra.mxu0 %v1100
    %1372 = vmatprep.subr.bf16.mxu0 %v1161
    %1373 = vmatpush2.bf16.msra.mxu0 %v1160
    %1374 = vmatprep.subr.bf16.mxu0 %v1157
    %1375 = vmatpush2.bf16.msra.mxu0 %v1156
    %1376 = vmatprep.subr.bf16.mxu0 %v1153
    %1377 = vmatpush2.bf16.msra.mxu0 %v1152
    %1378 = vmatprep.subr.bf16.mxu0 %v1149
    %1379 = vmatpush2.bf16.msra.mxu0 %v1148
    %1380 = vmatprep.subr.bf16.mxu0 %v1145
    %1381 = vmatpush2.bf16.msra.mxu0 %v1144
    %1382 = vmatprep.subr.bf16.mxu0 %v1141
    %1383 = vmatpush2.bf16.msra.mxu0 %v1140
    %1384 = vmatprep.subr.bf16.mxu0 %v1137
    %1385 = vmatpush2.bf16.msra.mxu0 %v1136
    %1386 = vmatprep.subr.bf16.mxu0 %v1133
    %1387 = vmatpush2.bf16.msra.mxu0 %v1132
    %1388 = vmatprep.mubr.bf16.mxu0 %v563
    %1389 = vmatmul.mubr.bf16.gmra.mxu0 %v562
    %v1390 = vpop.f32.mrf.mxu0
    %v1391 = vadd.f32 %v699, %v1390
    %v1392 = vpop.f32.mrf.mxu0
    %v1393 = vadd.f32 %v703, %v1392
    %v1394 = vpop.f32.mrf.mxu0
    %v1395 = vadd.f32 %v699, %v1394
    %v1396 = vpop.f32.mrf.mxu0
    %v1397 = vadd.f32 %v703, %v1396
    %1398 = vdwg.mxu0
    %1399 = vmatprep.subr.bf16.mxu0 %v1193
    %1400 = vmatpush1.bf16.msra.mxu0 %v1192
    %1401 = vmatprep.subr.bf16.mxu0 %v1189
    %1402 = vmatpush1.bf16.msra.mxu0 %v1188
    %1403 = vmatprep.subr.bf16.mxu0 %v1185
    %1404 = vmatpush1.bf16.msra.mxu0 %v1184
    %1405 = vmatprep.subr.bf16.mxu0 %v1181
    %1406 = vmatpush1.bf16.msra.mxu0 %v1180
    %1407 = vmatprep.subr.bf16.mxu0 %v1177
    %1408 = vmatpush1.bf16.msra.mxu0 %v1176
    %1409 = vmatprep.subr.bf16.mxu0 %v1173
    %1410 = vmatpush1.bf16.msra.mxu0 %v1172
    %1411 = vmatprep.subr.bf16.mxu0 %v1169
    %1412 = vmatpush1.bf16.msra.mxu0 %v1168
    %1413 = vmatprep.subr.bf16.mxu0 %v1165
    %1414 = vmatpush1.bf16.msra.mxu0 %v1164
    %1415 = vmatprep.subr.bf16.mxu0 %v1225
    %1416 = vmatpush2.bf16.msra.mxu0 %v1224
    %1417 = vmatprep.subr.bf16.mxu0 %v1221
    %1418 = vmatpush2.bf16.msra.mxu0 %v1220
    %1419 = vmatprep.subr.bf16.mxu0 %v1217
    %1420 = vmatpush2.bf16.msra.mxu0 %v1216
    %1421 = vmatprep.subr.bf16.mxu0 %v1213
    %1422 = vmatpush2.bf16.msra.mxu0 %v1212
    %1423 = vmatprep.subr.bf16.mxu0 %v1209
    %1424 = vmatpush2.bf16.msra.mxu0 %v1208
    %1425 = vmatprep.subr.bf16.mxu0 %v1205
    %1426 = vmatpush2.bf16.msra.mxu0 %v1204
    %1427 = vmatprep.subr.bf16.mxu0 %v1201
    %1428 = vmatpush2.bf16.msra.mxu0 %v1200
    %1429 = vmatprep.subr.bf16.mxu0 %v1197
    %1430 = vmatpush2.bf16.msra.mxu0 %v1196
    %1431 = vmatprep.mubr.bf16.mxu0 %v565
    %1432 = vmatmul.mubr.bf16.gmra.mxu0 %v564
    %v1433 = vpop.f32.mrf.mxu0
    %v1434 = vadd.f32 %v1391, %v1433
    %v1435 = vpop.f32.mrf.mxu0
    %v1436 = vadd.f32 %v1393, %v1435
    %v1437 = vpop.f32.mrf.mxu0
    %v1438 = vadd.f32 %v1395, %v1437
    %v1439 = vpop.f32.mrf.mxu0
    %v1440 = vadd.f32 %v1397, %v1439
    %1441 = vdwg.mxu0
    %1442 = vmatprep.subr.bf16.mxu0 %v1131
    %1443 = vmatpush1.bf16.msra.mxu0 %v1130
    %1444 = vmatprep.subr.bf16.mxu0 %v1127
    %1445 = vmatpush1.bf16.msra.mxu0 %v1126
    %1446 = vmatprep.subr.bf16.mxu0 %v1123
    %1447 = vmatpush1.bf16.msra.mxu0 %v1122
    %1448 = vmatprep.subr.bf16.mxu0 %v1119
    %1449 = vmatpush1.bf16.msra.mxu0 %v1118
    %1450 = vmatprep.subr.bf16.mxu0 %v1115
    %1451 = vmatpush1.bf16.msra.mxu0 %v1114
    %1452 = vmatprep.subr.bf16.mxu0 %v1111
    %1453 = vmatpush1.bf16.msra.mxu0 %v1110
    %1454 = vmatprep.subr.bf16.mxu0 %v1107
    %1455 = vmatpush1.bf16.msra.mxu0 %v1106
    %1456 = vmatprep.subr.bf16.mxu0 %v1103
    %1457 = vmatpush1.bf16.msra.mxu0 %v1102
    %1458 = vmatprep.subr.bf16.mxu0 %v1163
    %1459 = vmatpush2.bf16.msra.mxu0 %v1162
    %1460 = vmatprep.subr.bf16.mxu0 %v1159
    %1461 = vmatpush2.bf16.msra.mxu0 %v1158
    %1462 = vmatprep.subr.bf16.mxu0 %v1155
    %1463 = vmatpush2.bf16.msra.mxu0 %v1154
    %1464 = vmatprep.subr.bf16.mxu0 %v1151
    %1465 = vmatpush2.bf16.msra.mxu0 %v1150
    %1466 = vmatprep.subr.bf16.mxu0 %v1147
    %1467 = vmatpush2.bf16.msra.mxu0 %v1146
    %1468 = vmatprep.subr.bf16.mxu0 %v1143
    %1469 = vmatpush2.bf16.msra.mxu0 %v1142
    %1470 = vmatprep.subr.bf16.mxu0 %v1139
    %1471 = vmatpush2.bf16.msra.mxu0 %v1138
    %1472 = vmatprep.subr.bf16.mxu0 %v1135
    %1473 = vmatpush2.bf16.msra.mxu0 %v1134
    %1474 = vmatprep.mubr.bf16.mxu0 %v563
    %1475 = vmatmul.mubr.bf16.gmra.mxu0 %v562
    %v1476 = vpop.f32.mrf.mxu0
    %v1477 = vadd.f32 %v707, %v1476
    %v1478 = vpop.f32.mrf.mxu0
    %v1479 = vadd.f32 %v711, %v1478
    %v1480 = vpop.f32.mrf.mxu0
    %v1481 = vadd.f32 %v707, %v1480
    %v1482 = vpop.f32.mrf.mxu0
    %v1483 = vadd.f32 %v711, %v1482
    %1484 = vdwg.mxu0
    %1485 = vmatprep.subr.bf16.mxu0 %v1195
    %1486 = vmatpush1.bf16.msra.mxu0 %v1194
    %1487 = vmatprep.subr.bf16.mxu0 %v1191
    %1488 = vmatpush1.bf16.msra.mxu0 %v1190
    %1489 = vmatprep.subr.bf16.mxu0 %v1187
    %1490 = vmatpush1.bf16.msra.mxu0 %v1186
    %1491 = vmatprep.subr.bf16.mxu0 %v1183
    %1492 = vmatpush1.bf16.msra.mxu0 %v1182
    %1493 = vmatprep.subr.bf16.mxu0 %v1179
    %1494 = vmatpush1.bf16.msra.mxu0 %v1178
    %1495 = vmatprep.subr.bf16.mxu0 %v1175
    %1496 = vmatpush1.bf16.msra.mxu0 %v1174
    %1497 = vmatprep.subr.bf16.mxu0 %v1171
    %1498 = vmatpush1.bf16.msra.mxu0 %v1170
    %1499 = vmatprep.subr.bf16.mxu0 %v1167
    %1500 = vmatpush1.bf16.msra.mxu0 %v1166
    %1501 = vmatprep.subr.bf16.mxu0 %v1227
    %1502 = vmatpush2.bf16.msra.mxu0 %v1226
    %1503 = vmatprep.subr.bf16.mxu0 %v1223
    %1504 = vmatpush2.bf16.msra.mxu0 %v1222
    %1505 = vmatprep.subr.bf16.mxu0 %v1219
    %1506 = vmatpush2.bf16.msra.mxu0 %v1218
    %1507 = vmatprep.subr.bf16.mxu0 %v1215
    %1508 = vmatpush2.bf16.msra.mxu0 %v1214
    %1509 = vmatprep.subr.bf16.mxu0 %v1211
    %1510 = vmatpush2.bf16.msra.mxu0 %v1210
    %1511 = vmatprep.subr.bf16.mxu0 %v1207
    %1512 = vmatpush2.bf16.msra.mxu0 %v1206
    %1513 = vmatprep.subr.bf16.mxu0 %v1203
    %1514 = vmatpush2.bf16.msra.mxu0 %v1202
    %1515 = vmatprep.subr.bf16.mxu0 %v1199
    %1516 = vmatpush2.bf16.msra.mxu0 %v1198
    %1517 = vmatprep.mubr.bf16.mxu0 %v565
    %1518 = vmatmul.mubr.bf16.gmra.mxu0 %v564
    %v1519 = vpop.f32.mrf.mxu0
    %v1520 = vadd.f32 %v1477, %v1519
    %v1521 = vpop.f32.mrf.mxu0
    %v1522 = vadd.f32 %v1479, %v1521
    %v1523 = vpop.f32.mrf.mxu0
    %v1524 = vadd.f32 %v1481, %v1523
    %v1525 = vpop.f32.mrf.mxu0
    %v1526 = vadd.f32 %v1483, %v1525
    %1527 = vdwg.mxu0
    %v1528 = vmax.f32 %v1434, 0.0
    %v1529 = vmax.f32 %v1436, 0.0
    %v1530 = vmax.f32 %v1520, 0.0
    %v1531 = vmax.f32 %v1522, 0.0
    %v1532 = vmax.f32 %v1438, 0.0
    %v1533 = vmax.f32 %v1440, 0.0
    %v1534 = vmax.f32 %v1524, 0.0
    %v1535 = vmax.f32 %v1526, 0.0
    %v1536 = vpack.c.bf16 %v1532, %v1528
    %v1537 = vpack.c.bf16 %v1533, %v1529
    %v1538 = vpack.c.bf16 %v1534, %v1530
    %v1539 = vpack.c.bf16 %v1535, %v1531
    %v1540 = vld [vmem:[#allocation8] sm:$0xf]
    %v1541 = vld [vmem:[#allocation8 + $0x4] sm:$0xf]
    %v1542 = vld [vmem:[#allocation8 + $0x8] sm:$0xf]
    %v1543 = vld [vmem:[#allocation8 + $0xc] sm:$0xf]
    %v1544 = vld [vmem:[#allocation8 + $0x10] sm:$0xf]
    %v1545 = vld [vmem:[#allocation8 + $0x14] sm:$0xf]
    %v1546 = vld [vmem:[#allocation8 + $0x18] sm:$0xf]
    %v1547 = vld [vmem:[#allocation8 + $0x1c] sm:$0xf]
    %v1548 = vld [vmem:[#allocation8 + $0x20] sm:$0xf]
    %v1549 = vld [vmem:[#allocation8 + $0x24] sm:$0xf]
    %v1550 = vld [vmem:[#allocation8 + $0x28] sm:$0xf]
    %v1551 = vld [vmem:[#allocation8 + $0x2c] sm:$0xf]
    %v1552 = vld [vmem:[#allocation8 + $0x30] sm:$0xf]
    %v1553 = vld [vmem:[#allocation8 + $0x34] sm:$0xf]
    %v1554 = vld [vmem:[#allocation8 + $0x38] sm:$0xf]
    %v1555 = vld [vmem:[#allocation8 + $0x3c] sm:$0xf]
    %v1556 = vld [vmem:[#allocation8 + $0x40] sm:$0xf]
    %v1557 = vld [vmem:[#allocation8 + $0x44] sm:$0xf]
    %v1558 = vld [vmem:[#allocation8 + $0x48] sm:$0xf]
    %v1559 = vld [vmem:[#allocation8 + $0x4c] sm:$0xf]
    %v1560 = vld [vmem:[#allocation8 + $0x50] sm:$0xf]
    %v1561 = vld [vmem:[#allocation8 + $0x54] sm:$0xf]
    %v1562 = vld [vmem:[#allocation8 + $0x58] sm:$0xf]
    %v1563 = vld [vmem:[#allocation8 + $0x5c] sm:$0xf]
    %v1564 = vld [vmem:[#allocation8 + $0x60] sm:$0xf]
    %v1565 = vld [vmem:[#allocation8 + $0x64] sm:$0xf]
    %v1566 = vld [vmem:[#allocation8 + $0x68] sm:$0xf]
    %v1567 = vld [vmem:[#allocation8 + $0x6c] sm:$0xf]
    %v1568 = vld [vmem:[#allocation8 + $0x70] sm:$0xf]
    %v1569 = vld [vmem:[#allocation8 + $0x74] sm:$0xf]
    %v1570 = vld [vmem:[#allocation8 + $0x78] sm:$0xf]
    %v1571 = vld [vmem:[#allocation8 + $0x7c] sm:$0xf]
    %v1572 = vld [vmem:[#allocation8 + $0x80] sm:$0xf]
    %v1573 = vld [vmem:[#allocation8 + $0x84] sm:$0xf]
    %v1574 = vld [vmem:[#allocation8 + $0x88] sm:$0xf]
    %v1575 = vld [vmem:[#allocation8 + $0x8c] sm:$0xf]
    %v1576 = vld [vmem:[#allocation8 + $0x90] sm:$0xf]
    %v1577 = vld [vmem:[#allocation8 + $0x94] sm:$0xf]
    %v1578 = vld [vmem:[#allocation8 + $0x98] sm:$0xf]
    %v1579 = vld [vmem:[#allocation8 + $0x9c] sm:$0xf]
    %v1580 = vld [vmem:[#allocation8 + $0xa0] sm:$0xf]
    %v1581 = vld [vmem:[#allocation8 + $0xa4] sm:$0xf]
    %v1582 = vld [vmem:[#allocation8 + $0xa8] sm:$0xf]
    %v1583 = vld [vmem:[#allocation8 + $0xac] sm:$0xf]
    %v1584 = vld [vmem:[#allocation8 + $0xb0] sm:$0xf]
    %v1585 = vld [vmem:[#allocation8 + $0xb4] sm:$0xf]
    %v1586 = vld [vmem:[#allocation8 + $0xb8] sm:$0xf]
    %v1587 = vld [vmem:[#allocation8 + $0xbc] sm:$0xf]
    %v1588 = vld [vmem:[#allocation8 + $0xc0] sm:$0xf]
    %v1589 = vld [vmem:[#allocation8 + $0xc4] sm:$0xf]
    %v1590 = vld [vmem:[#allocation8 + $0xc8] sm:$0xf]
    %v1591 = vld [vmem:[#allocation8 + $0xcc] sm:$0xf]
    %v1592 = vld [vmem:[#allocation8 + $0xd0] sm:$0xf]
    %v1593 = vld [vmem:[#allocation8 + $0xd4] sm:$0xf]
    %v1594 = vld [vmem:[#allocation8 + $0xd8] sm:$0xf]
    %v1595 = vld [vmem:[#allocation8 + $0xdc] sm:$0xf]
    %v1596 = vld [vmem:[#allocation8 + $0xe0] sm:$0xf]
    %v1597 = vld [vmem:[#allocation8 + $0xe4] sm:$0xf]
    %v1598 = vld [vmem:[#allocation8 + $0xe8] sm:$0xf]
    %v1599 = vld [vmem:[#allocation8 + $0xec] sm:$0xf]
    %v1600 = vld [vmem:[#allocation8 + $0xf0] sm:$0xf]
    %v1601 = vld [vmem:[#allocation8 + $0xf4] sm:$0xf]
    %v1602 = vld [vmem:[#allocation8 + $0xf8] sm:$0xf]
    %v1603 = vld [vmem:[#allocation8 + $0xfc] sm:$0xf]
    %v1604 = vld [vmem:[%s5] sm:$0x1]
    %v1606 = vlaneseq
    %v1607 = vshrl.u32 %v1606, 7
    %v1608 = vsub.s32 0, %v1607
    %v1609 = vrot.slane %v1604, %v1608
    %v1675 = vunpack.c.l.b16 %v1540
    %v1676 = vunpack.c.l.b16 %v1541
    %v1677 = vunpack.c.l.b16 %v1542
    %v1678 = vunpack.c.l.b16 %v1543
    %v1679 = vunpack.c.l.b16 %v1544
    %v1680 = vunpack.c.l.b16 %v1545
    %v1681 = vunpack.c.l.b16 %v1546
    %v1682 = vunpack.c.l.b16 %v1547
    %v1683 = vunpack.c.l.b16 %v1548
    %v1684 = vunpack.c.l.b16 %v1549
    %v1685 = vunpack.c.l.b16 %v1550
    %v1686 = vunpack.c.l.b16 %v1551
    %v1687 = vunpack.c.l.b16 %v1552
    %v1688 = vunpack.c.l.b16 %v1553
    %v1689 = vunpack.c.l.b16 %v1554
    %v1690 = vunpack.c.l.b16 %v1555
    %v1691 = vunpack.c.l.b16 %v1556
    %v1692 = vunpack.c.l.b16 %v1557
    %v1693 = vunpack.c.l.b16 %v1558
    %v1694 = vunpack.c.l.b16 %v1559
    %v1695 = vunpack.c.l.b16 %v1560
    %v1696 = vunpack.c.l.b16 %v1561
    %v1697 = vunpack.c.l.b16 %v1562
    %v1698 = vunpack.c.l.b16 %v1563
    %v1699 = vunpack.c.l.b16 %v1564
    %v1700 = vunpack.c.l.b16 %v1565
    %v1701 = vunpack.c.l.b16 %v1566
    %v1702 = vunpack.c.l.b16 %v1567
    %v1703 = vunpack.c.l.b16 %v1568
    %v1704 = vunpack.c.l.b16 %v1569
    %v1705 = vunpack.c.l.b16 %v1570
    %v1706 = vunpack.c.l.b16 %v1571
    %v1707 = vunpack.c.l.b16 %v1572
    %v1708 = vunpack.c.l.b16 %v1573
    %v1709 = vunpack.c.l.b16 %v1574
    %v1710 = vunpack.c.l.b16 %v1575
    %v1711 = vunpack.c.l.b16 %v1576
    %v1712 = vunpack.c.l.b16 %v1577
    %v1713 = vunpack.c.l.b16 %v1578
    %v1714 = vunpack.c.l.b16 %v1579
    %v1715 = vunpack.c.l.b16 %v1580
    %v1716 = vunpack.c.l.b16 %v1581
    %v1717 = vunpack.c.l.b16 %v1582
    %v1718 = vunpack.c.l.b16 %v1583
    %v1719 = vunpack.c.l.b16 %v1584
    %v1720 = vunpack.c.l.b16 %v1585
    %v1721 = vunpack.c.l.b16 %v1586
    %v1722 = vunpack.c.l.b16 %v1587
    %v1723 = vunpack.c.l.b16 %v1588
    %v1724 = vunpack.c.l.b16 %v1589
    %v1725 = vunpack.c.l.b16 %v1590
    %v1726 = vunpack.c.l.b16 %v1591
    %v1727 = vunpack.c.l.b16 %v1592
    %v1728 = vunpack.c.l.b16 %v1593
    %v1729 = vunpack.c.l.b16 %v1594
    %v1730 = vunpack.c.l.b16 %v1595
    %v1731 = vunpack.c.l.b16 %v1596
    %v1732 = vunpack.c.l.b16 %v1597
    %v1733 = vunpack.c.l.b16 %v1598
    %v1734 = vunpack.c.l.b16 %v1599
    %v1735 = vunpack.c.l.b16 %v1600
    %v1736 = vunpack.c.l.b16 %v1601
    %v1737 = vunpack.c.l.b16 %v1602
    %v1738 = vunpack.c.l.b16 %v1603
    %v1739 = vpack.c.b16 %v1676, %v1675
    %v1740 = vpack.c.b16 %v1678, %v1677
    %v1741 = vpack.c.b16 %v1680, %v1679
    %v1742 = vpack.c.b16 %v1682, %v1681
    %v1743 = vpack.c.b16 %v1684, %v1683
    %v1744 = vpack.c.b16 %v1686, %v1685
    %v1745 = vpack.c.b16 %v1688, %v1687
    %v1746 = vpack.c.b16 %v1690, %v1689
    %v1747 = vpack.c.b16 %v1692, %v1691
    %v1748 = vpack.c.b16 %v1694, %v1693
    %v1749 = vpack.c.b16 %v1696, %v1695
    %v1750 = vpack.c.b16 %v1698, %v1697
    %v1751 = vpack.c.b16 %v1700, %v1699
    %v1752 = vpack.c.b16 %v1702, %v1701
    %v1753 = vpack.c.b16 %v1704, %v1703
    %v1754 = vpack.c.b16 %v1706, %v1705
    %v1755 = vpack.c.b16 %v1708, %v1707
    %v1756 = vpack.c.b16 %v1710, %v1709
    %v1757 = vpack.c.b16 %v1712, %v1711
    %v1758 = vpack.c.b16 %v1714, %v1713
    %v1759 = vpack.c.b16 %v1716, %v1715
    %v1760 = vpack.c.b16 %v1718, %v1717
    %v1761 = vpack.c.b16 %v1720, %v1719
    %v1762 = vpack.c.b16 %v1722, %v1721
    %v1763 = vpack.c.b16 %v1724, %v1723
    %v1764 = vpack.c.b16 %v1726, %v1725
    %v1765 = vpack.c.b16 %v1728, %v1727
    %v1766 = vpack.c.b16 %v1730, %v1729
    %v1767 = vpack.c.b16 %v1732, %v1731
    %v1768 = vpack.c.b16 %v1734, %v1733
    %v1769 = vpack.c.b16 %v1736, %v1735
    %v1770 = vpack.c.b16 %v1738, %v1737
    %1803 = vmatprep.subr.bf16.mxu0 0
    %1804 = vmatpush1.bf16.msra.mxu0 %v1746
    %1805 = vmatprep.subr.bf16.mxu0 0
    %1806 = vmatpush1.bf16.msra.mxu0 %v1745
    %1807 = vmatprep.subr.bf16.mxu0 0
    %1808 = vmatpush1.bf16.msra.mxu0 %v1744
    %1809 = vmatprep.subr.bf16.mxu0 0
    %1810 = vmatpush1.bf16.msra.mxu0 %v1743
    %1811 = vmatprep.subr.bf16.mxu0 0
    %1812 = vmatpush1.bf16.msra.mxu0 %v1742
    %1813 = vmatprep.subr.bf16.mxu0 0
    %1814 = vmatpush1.bf16.msra.mxu0 %v1741
    %1815 = vmatprep.subr.bf16.mxu0 0
    %1816 = vmatpush1.bf16.msra.mxu0 %v1740
    %1817 = vmatprep.subr.bf16.mxu0 0
    %1818 = vmatpush1.bf16.msra.mxu0 %v1739
    %1819 = vmatprep.subr.bf16.mxu0 0
    %1820 = vmatpush2.bf16.msra.mxu0 %v1754
    %1821 = vmatprep.subr.bf16.mxu0 0
    %1822 = vmatpush2.bf16.msra.mxu0 %v1753
    %1823 = vmatprep.subr.bf16.mxu0 0
    %1824 = vmatpush2.bf16.msra.mxu0 %v1752
    %1825 = vmatprep.subr.bf16.mxu0 0
    %1826 = vmatpush2.bf16.msra.mxu0 %v1751
    %1827 = vmatprep.subr.bf16.mxu0 0
    %1828 = vmatpush2.bf16.msra.mxu0 %v1750
    %1829 = vmatprep.subr.bf16.mxu0 0
    %1830 = vmatpush2.bf16.msra.mxu0 %v1749
    %1831 = vmatprep.subr.bf16.mxu0 0
    %1832 = vmatpush2.bf16.msra.mxu0 %v1748
    %1833 = vmatprep.subr.bf16.mxu0 0
    %1834 = vmatpush2.bf16.msra.mxu0 %v1747
    %1835 = vmatprep.mubr.bf16.mxu0 %v1537
    %1836 = vmatmul.mubr.bf16.gmra.mxu0 %v1536
    %v1837 = vpop.f32.mrf.mxu0
    %v1838 = vadd.f32 %v1609, %v1837
    %v1839 = vpop.f32.mrf.mxu0
    %v1840 = vpop.f32.mrf.mxu0
    %v1841 = vadd.f32 %v1609, %v1840
    %v1842 = vpop.f32.mrf.mxu0
    %1843 = vdwg.mxu0
    %1844 = vmatprep.subr.bf16.mxu0 0
    %1845 = vmatpush1.bf16.msra.mxu0 %v1762
    %1846 = vmatprep.subr.bf16.mxu0 0
    %1847 = vmatpush1.bf16.msra.mxu0 %v1761
    %1848 = vmatprep.subr.bf16.mxu0 0
    %1849 = vmatpush1.bf16.msra.mxu0 %v1760
    %1850 = vmatprep.subr.bf16.mxu0 0
    %1851 = vmatpush1.bf16.msra.mxu0 %v1759
    %1852 = vmatprep.subr.bf16.mxu0 0
    %1853 = vmatpush1.bf16.msra.mxu0 %v1758
    %1854 = vmatprep.subr.bf16.mxu0 0
    %1855 = vmatpush1.bf16.msra.mxu0 %v1757
    %1856 = vmatprep.subr.bf16.mxu0 0
    %1857 = vmatpush1.bf16.msra.mxu0 %v1756
    %1858 = vmatprep.subr.bf16.mxu0 0
    %1859 = vmatpush1.bf16.msra.mxu0 %v1755
    %1860 = vmatprep.subr.bf16.mxu0 0
    %1861 = vmatpush2.bf16.msra.mxu0 %v1770
    %1862 = vmatprep.subr.bf16.mxu0 0
    %1863 = vmatpush2.bf16.msra.mxu0 %v1769
    %1864 = vmatprep.subr.bf16.mxu0 0
    %1865 = vmatpush2.bf16.msra.mxu0 %v1768
    %1866 = vmatprep.subr.bf16.mxu0 0
    %1867 = vmatpush2.bf16.msra.mxu0 %v1767
    %1868 = vmatprep.subr.bf16.mxu0 0
    %1869 = vmatpush2.bf16.msra.mxu0 %v1766
    %1870 = vmatprep.subr.bf16.mxu0 0
    %1871 = vmatpush2.bf16.msra.mxu0 %v1765
    %1872 = vmatprep.subr.bf16.mxu0 0
    %1873 = vmatpush2.bf16.msra.mxu0 %v1764
    %1874 = vmatprep.subr.bf16.mxu0 0
    %1875 = vmatpush2.bf16.msra.mxu0 %v1763
    %1876 = vmatprep.mubr.bf16.mxu0 %v1539
    %1877 = vmatmul.mubr.bf16.gmra.mxu0 %v1538
    %v1878 = vpop.f32.mrf.mxu0
    %v1879 = vadd.f32 %v1838, %v1878
    %v1880 = vpop.f32.mrf.mxu0
    %v1881 = vpop.f32.mrf.mxu0
    %v1882 = vadd.f32 %v1841, %v1881
    %v1883 = vpop.f32.mrf.mxu0
    %1884 = vdwg.mxu0
    %1885 = vst [vmem:[#allocation10] sm:$0xff] %v1879
    %1886 = vst [vmem:[#allocation10 + $0x8] sm:$0xff] %v1882
    // Predicated region
    $region42: #{tpu_custom_call.1} parent=1 // pred_check
      _
    $region43: #{tpu_custom_call.1} parent=1 // pred_check_branch
      %1888 = sbr.rel (0) target = $region45
    $region44: #{tpu_custom_call.1} parent=1 // pred_region
      %s1890 = ssub.s32 256, 256
      %1891 = vsyncadd [#allocation4], %s1890
      %s1892 = sshll.u32 [#allocation10], 4
      %s1893 = int_to_ptr.vmem [resolvable:$true] %s1892
      %1898 = dma.vmem_to_hbm [thread:$0]  %s1893, 256, %s6, [#allocation4], 128, 128, 8
    $region45: #{tpu_custom_call.1} parent=1 // pred_fallthru
      _
    // Predicated region
    $region46: #{tpu_custom_call.1} parent=1 // pred_check
      _
    $region47: #{tpu_custom_call.1} parent=1 // pred_check_branch
      %1900 = sbr.rel (0) target = $region49
    $region48: #{tpu_custom_call.1} parent=1 // pred_region
      %1901 = dma.done [#allocation4], 256
    $region49: #{tpu_custom_call.1} parent=1 // pred_fallthru
      _
    %1902 = vsyncpa [#allocation3], 1
    %1903 = vsyncpa [#allocation6], 1
    %1904 = vsyncpa [#allocation9], 1
    %1905 = vsyncpa [#allocation4], 1

</llo_original>
